<compile_context>
chip_gen: v5e
topology: v5e:2x2
jax: 0.10.0
libtpu: 0.0.40
codegen_flags: <defaults>
</compile_context>

<pallas_src>
import functools

import jax
import jax.numpy as jnp
from jax import lax
from jax.experimental import pallas as pl
from jax.experimental.pallas import tpu as pltpu


_EXP_CLAMP = 60.0                        # never hit at sane logit scales; prevents inf -> NaN
_VMEM_LIMIT_BYTES = 48 * 1024 * 1024     # explicit scoped-VMEM budget; < v7x 64 MiB physical


# ----------------------------------------------------------------------------
# In-kernel helpers
# ----------------------------------------------------------------------------
def _elu(v):
    # Single EUP push per element: exp(min(v,0)) - 1 (exact expm1 cancellation ~1e-8 abs).
    return jnp.where(v > 0, v, jnp.exp(jnp.minimum(v, 0.0)) - 1.0)


def _recip(x):
    # EUP approx reciprocal + one Newton step: ~1e-6 rel error at one extra VPU FMA.
    r = pl.reciprocal(x, approx=True)
    return r * (2.0 - x * r)


def _attend(mask_f32, h_rows, h_full, a1, a2, alpha):
    """pyGAT attention aggregation for one row tile.

    mask_f32: [TM, N] 0/1 float  h_rows: [TM, d] (tile rows)  h_full: [N, d] (all nodes)
    a1, a2:   [1, d] attention vectors.    Returns [TM, d] (f32).
    """
    # s1_i = a1 . h_i  (VPU mul + row reduce, avoids a narrow-lane MXU output)
    s1 = jnp.sum(h_rows * a1, axis=-1, keepdims=True)                     # [TM, 1]
    # s2_j = a2 . h_j, produced directly in [1, N] row layout (transposed-RHS dot).
    s2t = lax.dot_general(a2, h_full, (((1,), (1,)), ((), ())),
                          preferred_element_type=jnp.float32)             # [1, N]
    e_pre = s1 + s2t                                                      # [TM, N]
    leaky = jnp.where(e_pre > 0, e_pre, alpha * e_pre)
    # clamped exp + 0/1-mask multiply (mask is exact 0/1, exp is finite => no 0*inf NaNs)
    e = mask_f32 * jnp.exp(jnp.minimum(-leaky, _EXP_CLAMP))               # [TM, N]
    rowsum = jnp.maximum(jnp.sum(e, axis=1, keepdims=True), 1e-30)        # guard isolated nodes
    num = jnp.dot(e.astype(jnp.bfloat16), h_full.astype(jnp.bfloat16),
                  preferred_element_type=jnp.float32)                     # bf16 MXU, f32 acc
    return num * _recip(rowsum)


# ----------------------------------------------------------------------------
# Kernel 1: all attention heads (concat=True -> ELU), head-major output
# ----------------------------------------------------------------------------
def gat_heads_kernel(adj_ref, x_rows_ref, x_full_ref, w_ref, a1_ref, a2_ref,
                     hcat_ref, *, alpha, nheads):
    mask = adj_ref[...].astype(jnp.float32)            # [TM, N] 0/1
    x_rows = x_rows_ref[...]                           # bf16 [TM, F]
    x_full = x_full_ref[...]                           # bf16 [N, F]  (resident; h recomputed per tile
                                                       #  -> cheap MXU work vs the EUP-bound exp pass)
    for hd in range(nheads):                           # static unroll; each head ends in a ref store
        w_h = w_ref[hd]                                # bf16 [F, nhid] (leading-axis view, no relayout)
        h_full = jnp.dot(x_full, w_h, preferred_element_type=jnp.float32)   # [N, nhid]
        h_rows = jnp.dot(x_rows, w_h, preferred_element_type=jnp.float32)   # [TM, nhid]
        out_h = _attend(mask, h_rows, h_full, a1_ref[hd], a2_ref[hd], alpha)
        hcat_ref[hd] = _elu(out_h)                     # concat=True head -> ELU; head-major write


# ----------------------------------------------------------------------------
# Kernel 2: out_att (concat=False) + external F.elu + MLP head
# ----------------------------------------------------------------------------
def out_att_mlp_kernel(adj_ref, hc_rows_ref, hc_full_ref, w_o_ref, a1o_ref, a2o_ref,
                       w1_ref, b1_ref, w2_ref, b2_ref, w3t_ref, b3_ref,
                       o_ref, *, alpha, nheads):
    mask = adj_ref[...].astype(jnp.float32)            # [TM, N]

    def project(hc_ref):
        # h_cat @ W_o accumulated head-by-head (W_o pre-reshaped [H, nhid, nfeat]); every
        # slice is a leading-axis view, bf16 MXU with f32 accumulation.
        acc = jnp.dot(hc_ref[0].astype(jnp.bfloat16), w_o_ref[0],
                      preferred_element_type=jnp.float32)
        for hd in range(1, nheads):
            acc = acc + jnp.dot(hc_ref[hd].astype(jnp.bfloat16), w_o_ref[hd],
                                preferred_element_type=jnp.float32)
        return acc

    h_o_rows = project(hc_rows_ref)                    # [TM, nfeat]
    h_o_full = project(hc_full_ref)                    # [N, nfeat]
    z = _elu(_attend(mask, h_o_rows, h_o_full, a1o_ref[...], a2o_ref[...], alpha))

    # MLP head: relu(Linear) -> relu(Linear) -> Linear -> sigmoid
    h1 = jnp.maximum(jnp.dot(z.astype(jnp.bfloat16), w1_ref[...],
                             preferred_element_type=jnp.float32) + b1_ref[...], 0.0)
    h2 = jnp.maximum(jnp.dot(h1, w2_ref[...],
                             preferred_element_type=jnp.float32) + b2_ref[...], 0.0)
    # Lane-dense output: logits laid out [1, TM] via transposed-RHS dot (no [TM,1] masked stores).
    h3t = lax.dot_general(w3t_ref[...], h2, (((1,), (1,)), ((), ())),
                          preferred_element_type=jnp.float32) + b3_ref[...]
    o_ref[...] = 1.0 / (1.0 + jnp.exp(-h3t))


# ----------------------------------------------------------------------------
# Wrapper
# ----------------------------------------------------------------------------
def _resident(shape):
    """Full-array block that stays resident across the row grid (same block every step)."""
    zeros = (0,) * len(shape)
    return pl.BlockSpec(tuple(shape), lambda i, _z=zeros: _z)


def make_adj_mask(adj):
    """adj only enters the math through (adj != 0); precompute the int8 mask once per graph."""
    return (adj != 0).astype(jnp.int8)


def gat_mlp_forward(packed, x, adj_mask):
    """Full GAT_MLP forward (eval mode: dropout is identity).

    x:        [N, nfeat] float32
    adj_mask: [N, N] int8 0/1 (see make_adj_mask)
    returns   [N, 1] float32 probabilities
    """
    N, nfeat = x.shape
    nheads, nhid = packed["nheads"], packed["nhid"]

    # Row tile: the lane-dense (1, TM) output block needs TM % 128 == 0 (or TM == N).
    TM = N if N <= 128 else 128
    grid = (pl.cdiv(N, TM),)
    cparams = pltpu.CompilerParams(dimension_semantics=("parallel",),
                                   vmem_limit_bytes=_VMEM_LIMIT_BYTES)

    x_bf = x.astype(jnp.bfloat16)
    row_adj = pl.BlockSpec((TM, N), lambda i: (i, 0))

    # ---- stage 1: all heads -> head-major [nheads, N, nhid] intermediate --------------
    hcat = pl.pallas_call(
        functools.partial(gat_heads_kernel, alpha=packed["alpha"], nheads=nheads),
        out_shape=jax.ShapeDtypeStruct((nheads, N, nhid), jnp.float32),
        grid=grid,
        in_specs=[row_adj,                                      # adj rows of this tile
                  pl.BlockSpec((TM, nfeat), lambda i: (i, 0)),  # x rows of this tile
                  _resident((N, nfeat)),                        # x for all nodes (s2 / aggregation)
                  _resident(packed["W_heads"].shape),
                  _resident(packed["A1_heads"].shape),
                  _resident(packed["A2_heads"].shape)],
        out_specs=pl.BlockSpec((nheads, TM, nhid), lambda i: (0, i, 0)),
        compiler_params=cparams,
    )(adj_mask, x_bf, x_bf, packed["W_heads"], packed["A1_heads"], packed["A2_heads"])

    # ---- stage 2: out_att + F.elu + MLP, lane-dense [1, N] output ----------------------
    out_t = pl.pallas_call(
        functools.partial(out_att_mlp_kernel, alpha=packed["alpha"], nheads=nheads),
        out_shape=jax.ShapeDtypeStruct((1, N), jnp.float32),
        grid=grid,
        in_specs=[row_adj,
                  pl.BlockSpec((nheads, TM, nhid), lambda i: (0, i, 0)),  # h_cat rows of tile
                  _resident((nheads, N, nhid)),                           # h_cat for all nodes
                  _resident(packed["W_o3"].shape),
                  _resident(packed["a1_o"].shape),
                  _resident(packed["a2_o"].shape),
                  _resident(packed["w1"].shape),
                  _resident(packed["b1"].shape),
                  _resident(packed["w2"].shape),
                  _resident(packed["b2"].shape),
                  _resident(packed["w3t"].shape),
                  _resident(packed["b3"].shape)],
        out_specs=pl.BlockSpec((1, TM), lambda i: (0, i)),
        compiler_params=cparams,
    )(adj_mask, hcat, hcat, packed["W_o3"], packed["a1_o"], packed["a2_o"],
      packed["w1"], packed["b1"], packed["w2"], packed["b2"], packed["w3t"], packed["b3"])

    return out_t.T                                      # layout plumbing only: [1, N] -> [N, 1]


# ----------------------------------------------------------------------------
# Parameter init (PyTorch-like shapes) + one-time packing for the kernels
# ----------------------------------------------------------------------------
def init_params(key, nfeat, nhid, nheads, alpha):
    keys = jax.random.split(key, 2 * nheads + 8)
    k = iter(keys)

    def dense(kk, shape, scale=0.1):
        return (scale * jax.random.normal(kk, shape)).astype(jnp.float32)

    attentions = [(dense(next(k), (nfeat, nhid)), dense(next(k), (1, 2 * nhid)))
                  for _ in range(nheads)]
    W_o = dense(next(k), (nhid * nheads, nfeat))
    a_o = dense(next(k), (1, 2 * nfeat))

    # nn.Linear weights are [out, in]; store pre-transposed [in, out], biases [1, out].
    mlp = (dense(next(k), (nfeat, nfeat * 10)), dense(next(k), (1, nfeat * 10), 0.05),
           dense(next(k), (nfeat * 10, 10)), dense(next(k), (1, 10), 0.05),
           dense(next(k), (10, 1)), dense(next(k), (1, 1), 0.05))

    return {"alpha": alpha, "nfeat": nfeat, "nhid": nhid, "nheads": nheads,
            "attentions": attentions, "out_att": (W_o, a_o), "mlp": mlp}


def pack_params(raw):
    """One-time packing: head-major weight stacks, pre-split a vectors, bf16 big weights."""
    nfeat, nhid, nheads = raw["nfeat"], raw["nhid"], raw["nheads"]
    W_heads = jnp.stack([W for (W, _) in raw["attentions"]]).astype(jnp.bfloat16)   # [H, F, nhid]
    A1_heads = jnp.stack([a[:, :nhid] for (_, a) in raw["attentions"]])             # [H, 1, nhid]
    A2_heads = jnp.stack([a[:, nhid:] for (_, a) in raw["attentions"]])             # [H, 1, nhid]
    W_o, a_o = raw["out_att"]
    W_o3 = W_o.reshape(nheads, nhid, nfeat).astype(jnp.bfloat16)                    # [H, nhid, F]
    w1, b1, w2, b2, w3, b3 = raw["mlp"]
    return {"alpha": raw["alpha"], "nhid": nhid, "nheads": nheads, "nfeat": nfeat,
            "W_heads": W_heads, "A1_heads": A1_heads, "A2_heads": A2_heads,
            "W_o3": W_o3, "a1_o": a_o[:, :nfeat], "a2_o": a_o[:, nfeat:],
            "w1": w1.astype(jnp.bfloat16), "b1": b1, "w2": w2, "b2": b2,
            "w3t": w3.T, "b3": b3}


# ----------------------------------------------------------------------------
# Pure-JAX reference (mirrors the PyTorch module in eval mode, all f32)
# ----------------------------------------------------------------------------
def reference_forward(raw, x, adj):
    alpha = raw["alpha"]

    def layer(xx, W, a, apply_elu):
        h = xx @ W
        f = W.shape[1]
        s1 = h @ a[:, :f].T
        s2 = h @ a[:, f:].T
        e_pre = s1 + s2.T
        leaky = jnp.where(e_pre > 0, e_pre, alpha * e_pre)
        e = jnp.where(adj != 0, jnp.exp(-leaky), 0.0)
        out = (e @ h) / jnp.sum(e, axis=1, keepdims=True)
        if apply_elu:
            out = jnp.where(out > 0, out, jnp.expm1(out))
        return out

    heads = [layer(x, W, a, True) for (W, a) in raw["attentions"]]
    z = jnp.concatenate(heads, axis=1)
    W_o, a_o = raw["out_att"]
    z = layer(z, W_o, a_o, False)
    z = jnp.where(z > 0, z, jnp.expm1(z))          # external F.elu
    w1, b1, w2, b2, w3, b3 = raw["mlp"]
    h1 = jnp.maximum(z @ w1 + b1, 0.0)
    h2 = jnp.maximum(h1 @ w2 + b2, 0.0)
    return jax.nn.sigmoid(h2 @ w3 + b3)


# ----------------------------------------------------------------------------
# Example run
# ----------------------------------------------------------------------------
if __name__ == "__main__":
    N, nfeat, nhid, nheads = 256, 16, 16, 4
    alpha = 0.2  # dropout prob irrelevant in eval mode

    key = jax.random.PRNGKey(0)
    kx, kadj, kp = jax.random.split(key, 3)

    x = jax.random.normal(kx, (N, nfeat), dtype=jnp.float32)
    # random sparse symmetric adjacency with self-loops (guarantees nonzero row sums)
    adj = (jax.random.uniform(kadj, (N, N)) < 0.05).astype(jnp.float32)
    adj = jnp.clip(adj + adj.T + jnp.eye(N, dtype=jnp.float32), 0.0, 1.0)
    adj_mask = make_adj_mask(adj)      # int8 0/1, computed once per graph

    raw = init_params(kp, nfeat, nhid, nheads, alpha)
    packed = pack_params(raw)

    out = jax.block_until_ready(gat_mlp_forward(packed, x, adj_mask))
    ref = reference_forward(raw, x, adj)

    assert out.shape == (N, 1)
    assert bool(jnp.all(jnp.isfinite(out)))
    assert bool(jnp.all((out >= 0.0) & (out <= 1.0)))
    # bf16 weights / bf16 e@h matmuls + approx-reciprocal(Newton) vs the pure-f32 reference
    err = float(jnp.max(jnp.abs(out - ref)))
    assert err < 3e-2, f"max abs error {err}"
    print("KERNEL_OK")
</pallas_src>

<mosaic_0001>
module attributes {stable_mosaic.version = 11 : i64} {
  func.func @gat_heads_kernel(%arg0: i32, %arg1: memref<128x256xi8, #tpu.memory_space<vmem>>, %arg2: memref<128x16xbf16, #tpu.memory_space<vmem>>, %arg3: memref<256x16xbf16, #tpu.memory_space<vmem>>, %arg4: memref<4x16x16xbf16, #tpu.memory_space<vmem>>, %arg5: memref<4x1x16xf32, #tpu.memory_space<vmem>>, %arg6: memref<4x1x16xf32, #tpu.memory_space<vmem>>, %arg7: memref<4x128x16xf32, #tpu.memory_space<vmem>>) attributes {dimension_semantics = [#tpu.dimension_semantics<parallel>], iteration_bounds = array<i64: 2>, scalar_prefetch = 0 : i64, scratch_operands = 0 : i64, tpu.core_type = #tpu.core_type<tc>, window_params = [{transform_indices = @transform_0, window_bounds = array<i64: 128, 256>}, {transform_indices = @transform_1, window_bounds = array<i64: 128, 16>}, {pipeline_mode = #tpu.pipeline_mode<synchronous>, transform_indices = @transform_2, window_bounds = array<i64: 256, 16>}, {pipeline_mode = #tpu.pipeline_mode<synchronous>, transform_indices = @transform_3, window_bounds = array<i64: 4, 16, 16>}, {pipeline_mode = #tpu.pipeline_mode<synchronous>, transform_indices = @transform_4, window_bounds = array<i64: 4, 1, 16>}, {pipeline_mode = #tpu.pipeline_mode<synchronous>, transform_indices = @transform_5, window_bounds = array<i64: 4, 1, 16>}, {transform_indices = @transform_6, window_bounds = array<i64: 4, 128, 16>}]} {
    %c0 = arith.constant 0 : index
    %c0_0 = arith.constant 0 : index
    %0 = vector.load %arg1[%c0, %c0_0] : memref<128x256xi8, #tpu.memory_space<vmem>>, vector<128x256xi8>
    %1 = arith.sitofp %0 : vector<128x256xi8> to vector<128x256xf32>
    %c0_1 = arith.constant 0 : index
    %c0_2 = arith.constant 0 : index
    %2 = vector.load %arg2[%c0_1, %c0_2] : memref<128x16xbf16, #tpu.memory_space<vmem>>, vector<128x16xbf16>
    %c0_3 = arith.constant 0 : index
    %c0_4 = arith.constant 0 : index
    %3 = vector.load %arg3[%c0_3, %c0_4] : memref<256x16xbf16, #tpu.memory_space<vmem>>, vector<256x16xbf16>
    %c0_5 = arith.constant 0 : index
    %c0_6 = arith.constant 0 : index
    %c0_7 = arith.constant 0 : index
    %4 = vector.load %arg4[%c0_5, %c0_6, %c0_7] : memref<4x16x16xbf16, #tpu.memory_space<vmem>>, vector<1x16x16xbf16>
    %5 = vector.shape_cast %4 : vector<1x16x16xbf16> to vector<16x16xbf16>
    %cst = arith.constant dense<0.000000e+00> : vector<256x16xf32>
    %6 = tpu.matmul %3, %5, %cst {dimension_numbers = #tpu.dot_dimension_numbers<[1], [0], [0], [1], [0, 0, 1, 1], [], []>} : vector<256x16xbf16>, vector<16x16xbf16>, vector<256x16xf32> -> vector<256x16xf32>
    %cst_8 = arith.constant dense<0.000000e+00> : vector<128x16xf32>
    %7 = tpu.matmul %2, %5, %cst_8 {dimension_numbers = #tpu.dot_dimension_numbers<[1], [0], [0], [1], [0, 0, 1, 1], [], []>} : vector<128x16xbf16>, vector<16x16xbf16>, vector<128x16xf32> -> vector<128x16xf32>
    %c0_9 = arith.constant 0 : index
    %c0_10 = arith.constant 0 : index
    %c0_11 = arith.constant 0 : index
    %8 = vector.load %arg5[%c0_9, %c0_10, %c0_11] : memref<4x1x16xf32, #tpu.memory_space<vmem>>, vector<1x1x16xf32>
    %9 = vector.shape_cast %8 : vector<1x1x16xf32> to vector<1x16xf32>
    %c0_12 = arith.constant 0 : index
    %c0_13 = arith.constant 0 : index
    %c0_14 = arith.constant 0 : index
    %10 = vector.load %arg6[%c0_12, %c0_13, %c0_14] : memref<4x1x16xf32, #tpu.memory_space<vmem>>, vector<1x1x16xf32>
    %11 = vector.shape_cast %10 : vector<1x1x16xf32> to vector<1x16xf32>
    %12 = vector.broadcast %9 : vector<1x16xf32> to vector<128x16xf32>
    %13 = arith.mulf %7, %12 : vector<128x16xf32>
    %cst_15 = arith.constant dense<0.000000e+00> : vector<128xf32>
    %14 = vector.multi_reduction <add>, %13, %cst_15 [1] : vector<128x16xf32> to vector<128xf32>
    %15 = vector.shape_cast %14 : vector<128xf32> to vector<128x1xf32>
    %cst_16 = arith.constant dense<0.000000e+00> : vector<1x256xf32>
    %16 = tpu.matmul %11, %6, %cst_16 {dimension_numbers = #tpu.dot_dimension_numbers<[1], [1], [0], [0], [0, 0, 1, 0], [], []>} : vector<1x16xf32>, vector<256x16xf32>, vector<1x256xf32> -> vector<1x256xf32>
    %17 = vector.broadcast %15 : vector<128x1xf32> to vector<128x256xf32>
    %18 = vector.broadcast %16 : vector<1x256xf32> to vector<128x256xf32>
    %19 = arith.addf %17, %18 : vector<128x256xf32>
    %cst_17 = arith.constant 0.000000e+00 : f32
    %20 = vector.broadcast %cst_17 : f32 to vector<128x256xf32>
    %21 = arith.cmpf ogt, %19, %20 : vector<128x256xf32>
    %cst_18 = arith.constant 2.000000e-01 : f32
    %22 = vector.broadcast %cst_18 : f32 to vector<128x256xf32>
    %23 = arith.mulf %22, %19 : vector<128x256xf32>
    %24 = arith.select %21, %19, %23 : vector<128x256xi1>, vector<128x256xf32>
    %cst_19 = arith.constant 0.000000e+00 : f32
    %25 = vector.broadcast %cst_19 : f32 to vector<128x256xf32>
    %26 = arith.subf %25, %24 : vector<128x256xf32>
    %cst_20 = arith.constant 6.000000e+01 : f32
    %27 = vector.broadcast %cst_20 : f32 to vector<128x256xf32>
    %28 = arith.minimumf %26, %27 : vector<128x256xf32>
    %29 = math.exp %28 : vector<128x256xf32>
    %30 = arith.mulf %1, %29 : vector<128x256xf32>
    %cst_21 = arith.constant dense<0.000000e+00> : vector<128xf32>
    %31 = vector.multi_reduction <add>, %30, %cst_21 [1] : vector<128x256xf32> to vector<128xf32>
    %32 = vector.shape_cast %31 : vector<128xf32> to vector<128x1xf32>
    %cst_22 = arith.constant 1.000000e-30 : f32
    %33 = vector.broadcast %cst_22 : f32 to vector<128x1xf32>
    %34 = arith.maximumf %32, %33 : vector<128x1xf32>
    %35 = arith.truncf %30 : vector<128x256xf32> to vector<128x256xbf16>
    %36 = arith.truncf %6 : vector<256x16xf32> to vector<256x16xbf16>
    %cst_23 = arith.constant dense<0.000000e+00> : vector<128x16xf32>
    %37 = tpu.matmul %35, %36, %cst_23 {dimension_numbers = #tpu.dot_dimension_numbers<[1], [0], [0], [1], [0, 0, 1, 1], [], []>} : vector<128x256xbf16>, vector<256x16xbf16>, vector<128x16xf32> -> vector<128x16xf32>
    %38 = tpu.reciprocal %34 {approx = true} : vector<128x1xf32> -> vector<128x1xf32>
    %39 = arith.mulf %34, %38 : vector<128x1xf32>
    %cst_24 = arith.constant 2.000000e+00 : f32
    %40 = vector.broadcast %cst_24 : f32 to vector<128x1xf32>
    %41 = arith.subf %40, %39 : vector<128x1xf32>
    %42 = arith.mulf %38, %41 : vector<128x1xf32>
    %43 = vector.broadcast %42 : vector<128x1xf32> to vector<128x16xf32>
    %44 = arith.mulf %37, %43 : vector<128x16xf32>
    %cst_25 = arith.constant 0.000000e+00 : f32
    %45 = vector.broadcast %cst_25 : f32 to vector<128x16xf32>
    %46 = arith.cmpf ogt, %44, %45 : vector<128x16xf32>
    %cst_26 = arith.constant 0.000000e+00 : f32
    %47 = vector.broadcast %cst_26 : f32 to vector<128x16xf32>
    %48 = arith.minimumf %44, %47 : vector<128x16xf32>
    %49 = math.exp %48 : vector<128x16xf32>
    %cst_27 = arith.constant 1.000000e+00 : f32
    %50 = vector.broadcast %cst_27 : f32 to vector<128x16xf32>
    %51 = arith.subf %49, %50 : vector<128x16xf32>
    %52 = arith.select %46, %44, %51 : vector<128x16xi1>, vector<128x16xf32>
    %c0_28 = arith.constant 0 : index
    %c0_29 = arith.constant 0 : index
    %c0_30 = arith.constant 0 : index
    %53 = vector.load %arg7[%c0_28, %c0_29, %c0_30] : memref<4x128x16xf32, #tpu.memory_space<vmem>>, vector<1x128x16xf32>
    %54 = vector.shape_cast %53 : vector<1x128x16xf32> to vector<128x16xf32>
    %55 = vector.shape_cast %52 : vector<128x16xf32> to vector<1x128x16xf32>
    tpu.vector_store %arg7[%c0_28, %c0_29, %c0_30], %55 {strides = array<i32>} : memref<4x128x16xf32, #tpu.memory_space<vmem>>, vector<1x128x16xf32>,
    %c1 = arith.constant 1 : index
    %c0_31 = arith.constant 0 : index
    %c0_32 = arith.constant 0 : index
    %56 = vector.load %arg4[%c1, %c0_31, %c0_32] : memref<4x16x16xbf16, #tpu.memory_space<vmem>>, vector<1x16x16xbf16>
    %57 = vector.shape_cast %56 : vector<1x16x16xbf16> to vector<16x16xbf16>
    %cst_33 = arith.constant dense<0.000000e+00> : vector<256x16xf32>
    %58 = tpu.matmul %3, %57, %cst_33 {dimension_numbers = #tpu.dot_dimension_numbers<[1], [0], [0], [1], [0, 0, 1, 1], [], []>} : vector<256x16xbf16>, vector<16x16xbf16>, vector<256x16xf32> -> vector<256x16xf32>
    %cst_34 = arith.constant dense<0.000000e+00> : vector<128x16xf32>
    %59 = tpu.matmul %2, %57, %cst_34 {dimension_numbers = #tpu.dot_dimension_numbers<[1], [0], [0], [1], [0, 0, 1, 1], [], []>} : vector<128x16xbf16>, vector<16x16xbf16>, vector<128x16xf32> -> vector<128x16xf32>
    %c1_35 = arith.constant 1 : index
    %c0_36 = arith.constant 0 : index
    %c0_37 = arith.constant 0 : index
    %60 = vector.load %arg5[%c1_35, %c0_36, %c0_37] : memref<4x1x16xf32, #tpu.memory_space<vmem>>, vector<1x1x16xf32>
    %61 = vector.shape_cast %60 : vector<1x1x16xf32> to vector<1x16xf32>
    %c1_38 = arith.constant 1 : index
    %c0_39 = arith.constant 0 : index
    %c0_40 = arith.constant 0 : index
    %62 = vector.load %arg6[%c1_38, %c0_39, %c0_40] : memref<4x1x16xf32, #tpu.memory_space<vmem>>, vector<1x1x16xf32>
    %63 = vector.shape_cast %62 : vector<1x1x16xf32> to vector<1x16xf32>
    %64 = vector.broadcast %61 : vector<1x16xf32> to vector<128x16xf32>
    %65 = arith.mulf %59, %64 : vector<128x16xf32>
    %cst_41 = arith.constant dense<0.000000e+00> : vector<128xf32>
    %66 = vector.multi_reduction <add>, %65, %cst_41 [1] : vector<128x16xf32> to vector<128xf32>
    %67 = vector.shape_cast %66 : vector<128xf32> to vector<128x1xf32>
    %cst_42 = arith.constant dense<0.000000e+00> : vector<1x256xf32>
    %68 = tpu.matmul %63, %58, %cst_42 {dimension_numbers = #tpu.dot_dimension_numbers<[1], [1], [0], [0], [0, 0, 1, 0], [], []>} : vector<1x16xf32>, vector<256x16xf32>, vector<1x256xf32> -> vector<1x256xf32>
    %69 = vector.broadcast %67 : vector<128x1xf32> to vector<128x256xf32>
    %70 = vector.broadcast %68 : vector<1x256xf32> to vector<128x256xf32>
    %71 = arith.addf %69, %70 : vector<128x256xf32>
    %cst_43 = arith.constant 0.000000e+00 : f32
    %72 = vector.broadcast %cst_43 : f32 to vector<128x256xf32>
    %73 = arith.cmpf ogt, %71, %72 : vector<128x256xf32>
    %cst_44 = arith.constant 2.000000e-01 : f32
    %74 = vector.broadcast %cst_44 : f32 to vector<128x256xf32>
    %75 = arith.mulf %74, %71 : vector<128x256xf32>
    %76 = arith.select %73, %71, %75 : vector<128x256xi1>, vector<128x256xf32>
    %cst_45 = arith.constant 0.000000e+00 : f32
    %77 = vector.broadcast %cst_45 : f32 to vector<128x256xf32>
    %78 = arith.subf %77, %76 : vector<128x256xf32>
    %cst_46 = arith.constant 6.000000e+01 : f32
    %79 = vector.broadcast %cst_46 : f32 to vector<128x256xf32>
    %80 = arith.minimumf %78, %79 : vector<128x256xf32>
    %81 = math.exp %80 : vector<128x256xf32>
    %82 = arith.mulf %1, %81 : vector<128x256xf32>
    %cst_47 = arith.constant dense<0.000000e+00> : vector<128xf32>
    %83 = vector.multi_reduction <add>, %82, %cst_47 [1] : vector<128x256xf32> to vector<128xf32>
    %84 = vector.shape_cast %83 : vector<128xf32> to vector<128x1xf32>
    %cst_48 = arith.constant 1.000000e-30 : f32
    %85 = vector.broadcast %cst_48 : f32 to vector<128x1xf32>
    %86 = arith.maximumf %84, %85 : vector<128x1xf32>
    %87 = arith.truncf %82 : vector<128x256xf32> to vector<128x256xbf16>
    %88 = arith.truncf %58 : vector<256x16xf32> to vector<256x16xbf16>
    %cst_49 = arith.constant dense<0.000000e+00> : vector<128x16xf32>
    %89 = tpu.matmul %87, %88, %cst_49 {dimension_numbers = #tpu.dot_dimension_numbers<[1], [0], [0], [1], [0, 0, 1, 1], [], []>} : vector<128x256xbf16>, vector<256x16xbf16>, vector<128x16xf32> -> vector<128x16xf32>
    %90 = tpu.reciprocal %86 {approx = true} : vector<128x1xf32> -> vector<128x1xf32>
    %91 = arith.mulf %86, %90 : vector<128x1xf32>
    %cst_50 = arith.constant 2.000000e+00 : f32
    %92 = vector.broadcast %cst_50 : f32 to vector<128x1xf32>
    %93 = arith.subf %92, %91 : vector<128x1xf32>
    %94 = arith.mulf %90, %93 : vector<128x1xf32>
    %95 = vector.broadcast %94 : vector<128x1xf32> to vector<128x16xf32>
    %96 = arith.mulf %89, %95 : vector<128x16xf32>
    %cst_51 = arith.constant 0.000000e+00 : f32
    %97 = vector.broadcast %cst_51 : f32 to vector<128x16xf32>
    %98 = arith.cmpf ogt, %96, %97 : vector<128x16xf32>
    %cst_52 = arith.constant 0.000000e+00 : f32
    %99 = vector.broadcast %cst_52 : f32 to vector<128x16xf32>
    %100 = arith.minimumf %96, %99 : vector<128x16xf32>
    %101 = math.exp %100 : vector<128x16xf32>
    %cst_53 = arith.constant 1.000000e+00 : f32
    %102 = vector.broadcast %cst_53 : f32 to vector<128x16xf32>
    %103 = arith.subf %101, %102 : vector<128x16xf32>
    %104 = arith.select %98, %96, %103 : vector<128x16xi1>, vector<128x16xf32>
    %c1_54 = arith.constant 1 : index
    %c0_55 = arith.constant 0 : index
    %c0_56 = arith.constant 0 : index
    %105 = vector.load %arg7[%c1_54, %c0_55, %c0_56] : memref<4x128x16xf32, #tpu.memory_space<vmem>>, vector<1x128x16xf32>
    %106 = vector.shape_cast %105 : vector<1x128x16xf32> to vector<128x16xf32>
    %107 = vector.shape_cast %104 : vector<128x16xf32> to vector<1x128x16xf32>
    tpu.vector_store %arg7[%c1_54, %c0_55, %c0_56], %107 {strides = array<i32>} : memref<4x128x16xf32, #tpu.memory_space<vmem>>, vector<1x128x16xf32>,
    %c2 = arith.constant 2 : index
    %c0_57 = arith.constant 0 : index
    %c0_58 = arith.constant 0 : index
    %108 = vector.load %arg4[%c2, %c0_57, %c0_58] : memref<4x16x16xbf16, #tpu.memory_space<vmem>>, vector<1x16x16xbf16>
    %109 = vector.shape_cast %108 : vector<1x16x16xbf16> to vector<16x16xbf16>
    %cst_59 = arith.constant dense<0.000000e+00> : vector<256x16xf32>
    %110 = tpu.matmul %3, %109, %cst_59 {dimension_numbers = #tpu.dot_dimension_numbers<[1], [0], [0], [1], [0, 0, 1, 1], [], []>} : vector<256x16xbf16>, vector<16x16xbf16>, vector<256x16xf32> -> vector<256x16xf32>
    %cst_60 = arith.constant dense<0.000000e+00> : vector<128x16xf32>
    %111 = tpu.matmul %2, %109, %cst_60 {dimension_numbers = #tpu.dot_dimension_numbers<[1], [0], [0], [1], [0, 0, 1, 1], [], []>} : vector<128x16xbf16>, vector<16x16xbf16>, vector<128x16xf32> -> vector<128x16xf32>
    %c2_61 = arith.constant 2 : index
    %c0_62 = arith.constant 0 : index
    %c0_63 = arith.constant 0 : index
    %112 = vector.load %arg5[%c2_61, %c0_62, %c0_63] : memref<4x1x16xf32, #tpu.memory_space<vmem>>, vector<1x1x16xf32>
    %113 = vector.shape_cast %112 : vector<1x1x16xf32> to vector<1x16xf32>
    %c2_64 = arith.constant 2 : index
    %c0_65 = arith.constant 0 : index
    %c0_66 = arith.constant 0 : index
    %114 = vector.load %arg6[%c2_64, %c0_65, %c0_66] : memref<4x1x16xf32, #tpu.memory_space<vmem>>, vector<1x1x16xf32>
    %115 = vector.shape_cast %114 : vector<1x1x16xf32> to vector<1x16xf32>
    %116 = vector.broadcast %113 : vector<1x16xf32> to vector<128x16xf32>
    %117 = arith.mulf %111, %116 : vector<128x16xf32>
    %cst_67 = arith.constant dense<0.000000e+00> : vector<128xf32>
    %118 = vector.multi_reduction <add>, %117, %cst_67 [1] : vector<128x16xf32> to vector<128xf32>
    %119 = vector.shape_cast %118 : vector<128xf32> to vector<128x1xf32>
    %cst_68 = arith.constant dense<0.000000e+00> : vector<1x256xf32>
    %120 = tpu.matmul %115, %110, %cst_68 {dimension_numbers = #tpu.dot_dimension_numbers<[1], [1], [0], [0], [0, 0, 1, 0], [], []>} : vector<1x16xf32>, vector<256x16xf32>, vector<1x256xf32> -> vector<1x256xf32>
    %121 = vector.broadcast %119 : vector<128x1xf32> to vector<128x256xf32>
    %122 = vector.broadcast %120 : vector<1x256xf32> to vector<128x256xf32>
    %123 = arith.addf %121, %122 : vector<128x256xf32>
    %cst_69 = arith.constant 0.000000e+00 : f32
    %124 = vector.broadcast %cst_69 : f32 to vector<128x256xf32>
    %125 = arith.cmpf ogt, %123, %124 : vector<128x256xf32>
    %cst_70 = arith.constant 2.000000e-01 : f32
    %126 = vector.broadcast %cst_70 : f32 to vector<128x256xf32>
    %127 = arith.mulf %126, %123 : vector<128x256xf32>
    %128 = arith.select %125, %123, %127 : vector<128x256xi1>, vector<128x256xf32>
    %cst_71 = arith.constant 0.000000e+00 : f32
    %129 = vector.broadcast %cst_71 : f32 to vector<128x256xf32>
    %130 = arith.subf %129, %128 : vector<128x256xf32>
    %cst_72 = arith.constant 6.000000e+01 : f32
    %131 = vector.broadcast %cst_72 : f32 to vector<128x256xf32>
    %132 = arith.minimumf %130, %131 : vector<128x256xf32>
    %133 = math.exp %132 : vector<128x256xf32>
    %134 = arith.mulf %1, %133 : vector<128x256xf32>
    %cst_73 = arith.constant dense<0.000000e+00> : vector<128xf32>
    %135 = vector.multi_reduction <add>, %134, %cst_73 [1] : vector<128x256xf32> to vector<128xf32>
    %136 = vector.shape_cast %135 : vector<128xf32> to vector<128x1xf32>
    %cst_74 = arith.constant 1.000000e-30 : f32
    %137 = vector.broadcast %cst_74 : f32 to vector<128x1xf32>
    %138 = arith.maximumf %136, %137 : vector<128x1xf32>
    %139 = arith.truncf %134 : vector<128x256xf32> to vector<128x256xbf16>
    %140 = arith.truncf %110 : vector<256x16xf32> to vector<256x16xbf16>
    %cst_75 = arith.constant dense<0.000000e+00> : vector<128x16xf32>
    %141 = tpu.matmul %139, %140, %cst_75 {dimension_numbers = #tpu.dot_dimension_numbers<[1], [0], [0], [1], [0, 0, 1, 1], [], []>} : vector<128x256xbf16>, vector<256x16xbf16>, vector<128x16xf32> -> vector<128x16xf32>
    %142 = tpu.reciprocal %138 {approx = true} : vector<128x1xf32> -> vector<128x1xf32>
    %143 = arith.mulf %138, %142 : vector<128x1xf32>
    %cst_76 = arith.constant 2.000000e+00 : f32
    %144 = vector.broadcast %cst_76 : f32 to vector<128x1xf32>
    %145 = arith.subf %144, %143 : vector<128x1xf32>
    %146 = arith.mulf %142, %145 : vector<128x1xf32>
    %147 = vector.broadcast %146 : vector<128x1xf32> to vector<128x16xf32>
    %148 = arith.mulf %141, %147 : vector<128x16xf32>
    %cst_77 = arith.constant 0.000000e+00 : f32
    %149 = vector.broadcast %cst_77 : f32 to vector<128x16xf32>
    %150 = arith.cmpf ogt, %148, %149 : vector<128x16xf32>
    %cst_78 = arith.constant 0.000000e+00 : f32
    %151 = vector.broadcast %cst_78 : f32 to vector<128x16xf32>
    %152 = arith.minimumf %148, %151 : vector<128x16xf32>
    %153 = math.exp %152 : vector<128x16xf32>
    %cst_79 = arith.constant 1.000000e+00 : f32
    %154 = vector.broadcast %cst_79 : f32 to vector<128x16xf32>
    %155 = arith.subf %153, %154 : vector<128x16xf32>
    %156 = arith.select %150, %148, %155 : vector<128x16xi1>, vector<128x16xf32>
    %c2_80 = arith.constant 2 : index
    %c0_81 = arith.constant 0 : index
    %c0_82 = arith.constant 0 : index
    %157 = vector.load %arg7[%c2_80, %c0_81, %c0_82] : memref<4x128x16xf32, #tpu.memory_space<vmem>>, vector<1x128x16xf32>
    %158 = vector.shape_cast %157 : vector<1x128x16xf32> to vector<128x16xf32>
    %159 = vector.shape_cast %156 : vector<128x16xf32> to vector<1x128x16xf32>
    tpu.vector_store %arg7[%c2_80, %c0_81, %c0_82], %159 {strides = array<i32>} : memref<4x128x16xf32, #tpu.memory_space<vmem>>, vector<1x128x16xf32>,
    %c3 = arith.constant 3 : index
    %c0_83 = arith.constant 0 : index
    %c0_84 = arith.constant 0 : index
    %160 = vector.load %arg4[%c3, %c0_83, %c0_84] : memref<4x16x16xbf16, #tpu.memory_space<vmem>>, vector<1x16x16xbf16>
    %161 = vector.shape_cast %160 : vector<1x16x16xbf16> to vector<16x16xbf16>
    %cst_85 = arith.constant dense<0.000000e+00> : vector<256x16xf32>
    %162 = tpu.matmul %3, %161, %cst_85 {dimension_numbers = #tpu.dot_dimension_numbers<[1], [0], [0], [1], [0, 0, 1, 1], [], []>} : vector<256x16xbf16>, vector<16x16xbf16>, vector<256x16xf32> -> vector<256x16xf32>
    %cst_86 = arith.constant dense<0.000000e+00> : vector<128x16xf32>
    %163 = tpu.matmul %2, %161, %cst_86 {dimension_numbers = #tpu.dot_dimension_numbers<[1], [0], [0], [1], [0, 0, 1, 1], [], []>} : vector<128x16xbf16>, vector<16x16xbf16>, vector<128x16xf32> -> vector<128x16xf32>
    %c3_87 = arith.constant 3 : index
    %c0_88 = arith.constant 0 : index
    %c0_89 = arith.constant 0 : index
    %164 = vector.load %arg5[%c3_87, %c0_88, %c0_89] : memref<4x1x16xf32, #tpu.memory_space<vmem>>, vector<1x1x16xf32>
    %165 = vector.shape_cast %164 : vector<1x1x16xf32> to vector<1x16xf32>
    %c3_90 = arith.constant 3 : index
    %c0_91 = arith.constant 0 : index
    %c0_92 = arith.constant 0 : index
    %166 = vector.load %arg6[%c3_90, %c0_91, %c0_92] : memref<4x1x16xf32, #tpu.memory_space<vmem>>, vector<1x1x16xf32>
    %167 = vector.shape_cast %166 : vector<1x1x16xf32> to vector<1x16xf32>
    %168 = vector.broadcast %165 : vector<1x16xf32> to vector<128x16xf32>
    %169 = arith.mulf %163, %168 : vector<128x16xf32>
    %cst_93 = arith.constant dense<0.000000e+00> : vector<128xf32>
    %170 = vector.multi_reduction <add>, %169, %cst_93 [1] : vector<128x16xf32> to vector<128xf32>
    %171 = vector.shape_cast %170 : vector<128xf32> to vector<128x1xf32>
    %cst_94 = arith.constant dense<0.000000e+00> : vector<1x256xf32>
    %172 = tpu.matmul %167, %162, %cst_94 {dimension_numbers = #tpu.dot_dimension_numbers<[1], [1], [0], [0], [0, 0, 1, 0], [], []>} : vector<1x16xf32>, vector<256x16xf32>, vector<1x256xf32> -> vector<1x256xf32>
    %173 = vector.broadcast %171 : vector<128x1xf32> to vector<128x256xf32>
    %174 = vector.broadcast %172 : vector<1x256xf32> to vector<128x256xf32>
    %175 = arith.addf %173, %174 : vector<128x256xf32>
    %cst_95 = arith.constant 0.000000e+00 : f32
    %176 = vector.broadcast %cst_95 : f32 to vector<128x256xf32>
    %177 = arith.cmpf ogt, %175, %176 : vector<128x256xf32>
    %cst_96 = arith.constant 2.000000e-01 : f32
    %178 = vector.broadcast %cst_96 : f32 to vector<128x256xf32>
    %179 = arith.mulf %178, %175 : vector<128x256xf32>
    %180 = arith.select %177, %175, %179 : vector<128x256xi1>, vector<128x256xf32>
    %cst_97 = arith.constant 0.000000e+00 : f32
    %181 = vector.broadcast %cst_97 : f32 to vector<128x256xf32>
    %182 = arith.subf %181, %180 : vector<128x256xf32>
    %cst_98 = arith.constant 6.000000e+01 : f32
    %183 = vector.broadcast %cst_98 : f32 to vector<128x256xf32>
    %184 = arith.minimumf %182, %183 : vector<128x256xf32>
    %185 = math.exp %184 : vector<128x256xf32>
    %186 = arith.mulf %1, %185 : vector<128x256xf32>
    %cst_99 = arith.constant dense<0.000000e+00> : vector<128xf32>
    %187 = vector.multi_reduction <add>, %186, %cst_99 [1] : vector<128x256xf32> to vector<128xf32>
    %188 = vector.shape_cast %187 : vector<128xf32> to vector<128x1xf32>
    %cst_100 = arith.constant 1.000000e-30 : f32
    %189 = vector.broadcast %cst_100 : f32 to vector<128x1xf32>
    %190 = arith.maximumf %188, %189 : vector<128x1xf32>
    %191 = arith.truncf %186 : vector<128x256xf32> to vector<128x256xbf16>
    %192 = arith.truncf %162 : vector<256x16xf32> to vector<256x16xbf16>
    %cst_101 = arith.constant dense<0.000000e+00> : vector<128x16xf32>
    %193 = tpu.matmul %191, %192, %cst_101 {dimension_numbers = #tpu.dot_dimension_numbers<[1], [0], [0], [1], [0, 0, 1, 1], [], []>} : vector<128x256xbf16>, vector<256x16xbf16>, vector<128x16xf32> -> vector<128x16xf32>
    %194 = tpu.reciprocal %190 {approx = true} : vector<128x1xf32> -> vector<128x1xf32>
    %195 = arith.mulf %190, %194 : vector<128x1xf32>
    %cst_102 = arith.constant 2.000000e+00 : f32
    %196 = vector.broadcast %cst_102 : f32 to vector<128x1xf32>
    %197 = arith.subf %196, %195 : vector<128x1xf32>
    %198 = arith.mulf %194, %197 : vector<128x1xf32>
    %199 = vector.broadcast %198 : vector<128x1xf32> to vector<128x16xf32>
    %200 = arith.mulf %193, %199 : vector<128x16xf32>
    %cst_103 = arith.constant 0.000000e+00 : f32
    %201 = vector.broadcast %cst_103 : f32 to vector<128x16xf32>
    %202 = arith.cmpf ogt, %200, %201 : vector<128x16xf32>
    %cst_104 = arith.constant 0.000000e+00 : f32
    %203 = vector.broadcast %cst_104 : f32 to vector<128x16xf32>
    %204 = arith.minimumf %200, %203 : vector<128x16xf32>
    %205 = math.exp %204 : vector<128x16xf32>
    %cst_105 = arith.constant 1.000000e+00 : f32
    %206 = vector.broadcast %cst_105 : f32 to vector<128x16xf32>
    %207 = arith.subf %205, %206 : vector<128x16xf32>
    %208 = arith.select %202, %200, %207 : vector<128x16xi1>, vector<128x16xf32>
    %c3_106 = arith.constant 3 : index
    %c0_107 = arith.constant 0 : index
    %c0_108 = arith.constant 0 : index
    %209 = vector.load %arg7[%c3_106, %c0_107, %c0_108] : memref<4x128x16xf32, #tpu.memory_space<vmem>>, vector<1x128x16xf32>
    %210 = vector.shape_cast %209 : vector<1x128x16xf32> to vector<128x16xf32>
    %211 = vector.shape_cast %208 : vector<128x16xf32> to vector<1x128x16xf32>
    tpu.vector_store %arg7[%c3_106, %c0_107, %c0_108], %211 {strides = array<i32>} : memref<4x128x16xf32, #tpu.memory_space<vmem>>, vector<1x128x16xf32>,
    return
  }
  func.func @transform_0(%arg0: i32) -> (i32, i32) {
    %c0_i32 = arith.constant 0 : i32
    %c0_i32_0 = arith.constant 0 : i32
    return %arg0, %c0_i32 : i32, i32
  }
  func.func @transform_1(%arg0: i32) -> (i32, i32) {
    %c0_i32 = arith.constant 0 : i32
    %c0_i32_0 = arith.constant 0 : i32
    return %arg0, %c0_i32 : i32, i32
  }
  func.func @transform_2(%arg0: i32) -> (i32, i32) {
    %c0_i32 = arith.constant 0 : i32
    %c0_i32_0 = arith.constant 0 : i32
    %c0_i32_1 = arith.constant 0 : i32
    return %c0_i32, %c0_i32_0 : i32, i32
  }
  func.func @transform_3(%arg0: i32) -> (i32, i32, i32) {
    %c0_i32 = arith.constant 0 : i32
    %c0_i32_0 = arith.constant 0 : i32
    %c0_i32_1 = arith.constant 0 : i32
    %c0_i32_2 = arith.constant 0 : i32
    return %c0_i32, %c0_i32_0, %c0_i32_1 : i32, i32, i32
  }
  func.func @transform_4(%arg0: i32) -> (i32, i32, i32) {
    %c0_i32 = arith.constant 0 : i32
    %c0_i32_0 = arith.constant 0 : i32
    %c0_i32_1 = arith.constant 0 : i32
    %c0_i32_2 = arith.constant 0 : i32
    return %c0_i32, %c0_i32_0, %c0_i32_1 : i32, i32, i32
  }
  func.func @transform_5(%arg0: i32) -> (i32, i32, i32) {
    %c0_i32 = arith.constant 0 : i32
    %c0_i32_0 = arith.constant 0 : i32
    %c0_i32_1 = arith.constant 0 : i32
    %c0_i32_2 = arith.constant 0 : i32
    return %c0_i32, %c0_i32_0, %c0_i32_1 : i32, i32, i32
  }
  func.func @transform_6(%arg0: i32) -> (i32, i32, i32) {
    %c0_i32 = arith.constant 0 : i32
    %c0_i32_0 = arith.constant 0 : i32
    %c0_i32_1 = arith.constant 0 : i32
    return %c0_i32, %arg0, %c0_i32_0 : i32, i32, i32
  }
}

</mosaic_0001>

<llo_original>
// kernel: tpu_custom_call.1
$region0: #{tpu_custom_call.1}
  #allocation0 [shape = 'u32[]', space=smem, size = 0x4, offset = 0x4, fixed_abs, tag = 'smem constant byte address 0x4 - core index']
  #allocation1 [shape = 'u32[72,128]{1,0:T(1,128)}', space=vmem, size = 0x9000, scoped, tag = 'internal scratch']
  %s0 = inlined_call_operand.vmem [shape: s8[256,256], index: 0, kind: input, shape index: {}]
  %s1 = inlined_call_operand.vmem [shape: bf16[256,16], index: 1, kind: input, shape index: {}]
  %s2 = inlined_call_operand.vmem [shape: bf16[256,16], index: 2, kind: input, shape index: {}]
  %s3 = inlined_call_operand.vmem [shape: bf16[4,16,16], index: 3, kind: input, shape index: {}]
  %s4 = inlined_call_operand.vmem [shape: f32[4,1,16], index: 4, kind: input, shape index: {}]
  %s5 = inlined_call_operand.vmem [shape: f32[4,1,16], index: 5, kind: input, shape index: {}]
  %s6 = inlined_call_operand.vmem [shape: f32[4,256,16], index: 6, kind: output, shape index: {}]
  %s7 = sld [smem:[#allocation0]]
  $region91: #{tpu_custom_call.1} parent=0
    _
  %s9 = ssub.s32 1, %s7
  %s10 = scalar_select 0, %s9, %s7
  $region1: #{tpu_custom_call.1} parent=0
    #allocation2 [shape = 'u8[524288]{0}', space=vmem, size = 0x80000, scoped, tag = 'output window, operand 0']
    loop: start=0, step=1, limit=4
    $region2: #{tpu_custom_call.1} parent=1 // loop_pre_header
      _
    $region3: #{tpu_custom_call.1} parent=1 // loop_header
      %s12 = sphi 0, %s16
      %p13 = scmp.ge.s32.totalorder %s12, 4
      %s22 = sphi 0, %s24
      %s25 = sphi 0, %s22
      %s26 = sphi 0, %s25
      %s42 = sphi 0, %s26
      %s48 = sphi 0, %s50
      %s51 = sphi 0, %s48
      %s52 = sphi 0, %s51
      %s68 = sphi 0, %s52
      %s72 = sphi 0, %s72
      %s74 = sphi 0, %s72
      %s75 = sphi 0, %s74
      %s89 = sphi 0, %s75
      %s93 = sphi 0, %s93
      %s95 = sphi 0, %s93
      %s96 = sphi 0, %s95
      %s110 = sphi 0, %s96
      %s114 = sphi 0, %s114
      %s116 = sphi 0, %s114
      %s117 = sphi 0, %s116
      %s131 = sphi 0, %s117
      %s135 = sphi 0, %s135
      %s137 = sphi 0, %s135
      %s138 = sphi 0, %s137
      %s152 = sphi 0, %s138
      %s158 = sphi 0, %s160
      %s161 = sphi 0, %s158
      %s162 = sphi 0, %s161
      %s178 = sphi 0, %s162
    $region4: #{tpu_custom_call.1} parent=1 // loop_header_branch
      %15 = sbr.rel (%p13) target = $region8
    $region5: #{tpu_custom_call.1} parent=1 // loop_body
      %s17 = ssub.s32 %s12, 1
      %s18 = ssub.s32 %s12, 2
      %s19 = sadd.s32 %s12, 1
      %s20 = ssub.s32 %s12, %s19
      %p21 = scmp.eq.s32.totalorder %s20, 0
      %s23 = sadd.s32 %s22, 1
      %s24 = scalar_select %p21, %s22, %s23
      %p27 = pneg %p21
      %p28 = scmp.eq.s32.totalorder %s12, 1
      %p29 = por %p27, %p28
      %p30 = scmp.ne.s32.totalorder %s22, %s25
      %p31 = scmp.eq.s32.totalorder %s12, 0
      %p32 = por %p30, %p31
      %p33 = scmp.ne.s32.totalorder %s22, %s25
      %p34 = scmp.eq.s32.totalorder %s17, 1
      %p35 = por %p33, %p34
      %p36 = scmp.ne.s32.totalorder %s25, %s26
      %p37 = scmp.eq.s32.totalorder %s17, 0
      %p38 = por %p36, %p37
      %p39 = scmp.ne.s32.totalorder %s25, %s26
      %p40 = scmp.eq.s32.totalorder %s18, 1
      %p41 = por %p39, %p40
      %p43 = scmp.ne.s32.totalorder %s26, %s42
      %p44 = scmp.eq.s32.totalorder %s18, 0
      %p45 = por %p43, %p44
      %s46 = ssub.s32 %s12, %s19
      %p47 = scmp.eq.s32.totalorder %s46, 0
      %s49 = sadd.s32 %s48, 1
      %s50 = scalar_select %p47, %s48, %s49
      %p53 = pneg %p47
      %p54 = scmp.eq.s32.totalorder %s12, 1
      %p55 = por %p53, %p54
      %p56 = scmp.ne.s32.totalorder %s48, %s51
      %p57 = scmp.eq.s32.totalorder %s12, 0
      %p58 = por %p56, %p57
      %p59 = scmp.ne.s32.totalorder %s48, %s51
      %p60 = scmp.eq.s32.totalorder %s17, 1
      %p61 = por %p59, %p60
      %p62 = scmp.ne.s32.totalorder %s51, %s52
      %p63 = scmp.eq.s32.totalorder %s17, 0
      %p64 = por %p62, %p63
      %p65 = scmp.ne.s32.totalorder %s51, %s52
      %p66 = scmp.eq.s32.totalorder %s18, 1
      %p67 = por %p65, %p66
      %p69 = scmp.ne.s32.totalorder %s52, %s68
      %p70 = scmp.eq.s32.totalorder %s18, 0
      %p71 = por %p69, %p70
      %s73 = sadd.s32 %s72, 1
      %p76 = scmp.eq.s32.totalorder %s12, 1
      %p77 = scmp.ne.s32.totalorder %s72, %s74
      %p78 = scmp.eq.s32.totalorder %s12, 0
      %p79 = por %p77, %p78
      %p80 = scmp.ne.s32.totalorder %s72, %s74
      %p81 = scmp.eq.s32.totalorder %s17, 1
      %p82 = por %p80, %p81
      %p83 = scmp.ne.s32.totalorder %s74, %s75
      %p84 = scmp.eq.s32.totalorder %s17, 0
      %p85 = por %p83, %p84
      %p86 = scmp.ne.s32.totalorder %s74, %s75
      %p87 = scmp.eq.s32.totalorder %s18, 1
      %p88 = por %p86, %p87
      %p90 = scmp.ne.s32.totalorder %s75, %s89
      %p91 = scmp.eq.s32.totalorder %s18, 0
      %p92 = por %p90, %p91
      %s94 = sadd.s32 %s93, 1
      %p97 = scmp.eq.s32.totalorder %s12, 1
      %p98 = scmp.ne.s32.totalorder %s93, %s95
      %p99 = scmp.eq.s32.totalorder %s12, 0
      %p100 = por %p98, %p99
      %p101 = scmp.ne.s32.totalorder %s93, %s95
      %p102 = scmp.eq.s32.totalorder %s17, 1
      %p103 = por %p101, %p102
      %p104 = scmp.ne.s32.totalorder %s95, %s96
      %p105 = scmp.eq.s32.totalorder %s17, 0
      %p106 = por %p104, %p105
      %p107 = scmp.ne.s32.totalorder %s95, %s96
      %p108 = scmp.eq.s32.totalorder %s18, 1
      %p109 = por %p107, %p108
      %p111 = scmp.ne.s32.totalorder %s96, %s110
      %p112 = scmp.eq.s32.totalorder %s18, 0
      %p113 = por %p111, %p112
      %s115 = sadd.s32 %s114, 1
      %p118 = scmp.eq.s32.totalorder %s12, 1
      %p119 = scmp.ne.s32.totalorder %s114, %s116
      %p120 = scmp.eq.s32.totalorder %s12, 0
      %p121 = por %p119, %p120
      %p122 = scmp.ne.s32.totalorder %s114, %s116
      %p123 = scmp.eq.s32.totalorder %s17, 1
      %p124 = por %p122, %p123
      %p125 = scmp.ne.s32.totalorder %s116, %s117
      %p126 = scmp.eq.s32.totalorder %s17, 0
      %p127 = por %p125, %p126
      %p128 = scmp.ne.s32.totalorder %s116, %s117
      %p129 = scmp.eq.s32.totalorder %s18, 1
      %p130 = por %p128, %p129
      %p132 = scmp.ne.s32.totalorder %s117, %s131
      %p133 = scmp.eq.s32.totalorder %s18, 0
      %p134 = por %p132, %p133
      %s136 = sadd.s32 %s135, 1
      %p139 = scmp.eq.s32.totalorder %s12, 1
      %p140 = scmp.ne.s32.totalorder %s135, %s137
      %p141 = scmp.eq.s32.totalorder %s12, 0
      %p142 = por %p140, %p141
      %p143 = scmp.ne.s32.totalorder %s135, %s137
      %p144 = scmp.eq.s32.totalorder %s17, 1
      %p145 = por %p143, %p144
      %p146 = scmp.ne.s32.totalorder %s137, %s138
      %p147 = scmp.eq.s32.totalorder %s17, 0
      %p148 = por %p146, %p147
      %p149 = scmp.ne.s32.totalorder %s137, %s138
      %p150 = scmp.eq.s32.totalorder %s18, 1
      %p151 = por %p149, %p150
      %p153 = scmp.ne.s32.totalorder %s138, %s152
      %p154 = scmp.eq.s32.totalorder %s18, 0
      %p155 = por %p153, %p154
      %s156 = ssub.s32 %s12, %s19
      %p157 = scmp.eq.s32.totalorder %s156, 0
      %s159 = sadd.s32 %s158, 1
      %s160 = scalar_select %p157, %s158, %s159
      %p163 = pneg %p157
      %p164 = scmp.eq.s32.totalorder %s12, 1
      %p165 = por %p163, %p164
      %p166 = scmp.ne.s32.totalorder %s158, %s161
      %p167 = scmp.eq.s32.totalorder %s12, 0
      %p168 = por %p166, %p167
      %p169 = scmp.ne.s32.totalorder %s158, %s161
      %p170 = scmp.eq.s32.totalorder %s17, 1
      %p171 = por %p169, %p170
      %p172 = scmp.ne.s32.totalorder %s161, %s162
      %p173 = scmp.eq.s32.totalorder %s17, 0
      %p174 = por %p172, %p173
      %p175 = scmp.ne.s32.totalorder %s161, %s162
      %p176 = scmp.eq.s32.totalorder %s18, 1
      %p177 = por %p175, %p176
      %p179 = scmp.ne.s32.totalorder %s162, %s178
      %p180 = scmp.eq.s32.totalorder %s18, 0
      %p181 = por %p179, %p180
      %p182 = scmp.le.s32.totalorder 1, %s12
      %p183 = scmp.lt.s32.totalorder %s12, 3
      %p184 = pnand %p182, %p183
      %p185 = pneg %p184
      // Predicated region
      $region9: #{tpu_custom_call.1} parent=5 // pred_check
        _
      $region10: #{tpu_custom_call.1} parent=5 // pred_check_branch
        %187 = sbr.rel (%p184) target = $region12
      $region11: #{tpu_custom_call.1} parent=5 // pred_region
        %s188 = ssub.s32 %s12, 1
        // Predicated region
        $region13: #{tpu_custom_call.1} parent=11 // pred_check
          %p189 = pneg %p85
        $region14: #{tpu_custom_call.1} parent=11 // pred_check_branch
          %191 = sbr.rel (%p189) target = $region16
        $region15: #{tpu_custom_call.1} parent=11 // pred_region
          _
        $region16: #{tpu_custom_call.1} parent=11 // pred_fallthru
          _
        // Predicated region
        $region17: #{tpu_custom_call.1} parent=11 // pred_check
          %p192 = pneg %p106
        $region18: #{tpu_custom_call.1} parent=11 // pred_check_branch
          %194 = sbr.rel (%p192) target = $region20
        $region19: #{tpu_custom_call.1} parent=11 // pred_region
          _
        $region20: #{tpu_custom_call.1} parent=11 // pred_fallthru
          _
        // Predicated region
        $region21: #{tpu_custom_call.1} parent=11 // pred_check
          %p195 = pneg %p127
        $region22: #{tpu_custom_call.1} parent=11 // pred_check_branch
          %197 = sbr.rel (%p195) target = $region24
        $region23: #{tpu_custom_call.1} parent=11 // pred_region
          _
        $region24: #{tpu_custom_call.1} parent=11 // pred_fallthru
          _
        // Predicated region
        $region25: #{tpu_custom_call.1} parent=11 // pred_check
          %p198 = pneg %p148
        $region26: #{tpu_custom_call.1} parent=11 // pred_check_branch
          %200 = sbr.rel (%p198) target = $region28
        $region27: #{tpu_custom_call.1} parent=11 // pred_region
          _
        $region28: #{tpu_custom_call.1} parent=11 // pred_fallthru
          _
      $region12: #{tpu_custom_call.1} parent=5 // pred_fallthru
        _
      %p201 = scmp.lt.s32.totalorder %s12, 2
      // Predicated region
      $region29: #{tpu_custom_call.1} parent=5 // pred_check
        %p202 = pneg %p201
      $region30: #{tpu_custom_call.1} parent=5 // pred_check_branch
        %204 = sbr.rel (%p202) target = $region32
      $region31: #{tpu_custom_call.1} parent=5 // pred_region
        // Predicated region
        $region33: #{tpu_custom_call.1} parent=31 // pred_check
          %p205 = pneg %p32
        $region34: #{tpu_custom_call.1} parent=31 // pred_check_branch
          %207 = sbr.rel (%p205) target = $region36
        $region35: #{tpu_custom_call.1} parent=31 // pred_region
          %s208 = smul.u32 4, %s12
          %p209 = scmp.lt.s32.totalorder %s208, 7
          %s210 = scalar_select %p209, %s208, 7
          %s211 = smul.addr %s210, 2
          %s212 = smul.addr %s211, 8
          %s213 = scalar_lea.vmem %s0, %s212
          %s214 = smul.u32 4, %s12
        $region36: #{tpu_custom_call.1} parent=31 // pred_fallthru
          _
        // Predicated region
        $region37: #{tpu_custom_call.1} parent=31 // pred_check
          %p215 = pneg %p58
        $region38: #{tpu_custom_call.1} parent=31 // pred_check_branch
          %217 = sbr.rel (%p215) target = $region40
        $region39: #{tpu_custom_call.1} parent=31 // pred_region
          %s218 = smul.u32 16, %s12
          %p219 = scmp.lt.s32.totalorder %s218, 31
          %s220 = scalar_select %p219, %s218, 31
          %s221 = smul.addr %s220, 4
          %s222 = scalar_lea.vmem %s1, %s221
          %s223 = smul.u32 16, %s12
        $region40: #{tpu_custom_call.1} parent=31 // pred_fallthru
          _
      $region32: #{tpu_custom_call.1} parent=5 // pred_fallthru
        _
      %p224 = scmp.le.s32.totalorder 1, %s12
      %p225 = scmp.lt.s32.totalorder %s12, 3
      %p226 = pnand %p224, %p225
      %p227 = pneg %p226
      // Predicated region
      $region41: #{tpu_custom_call.1} parent=5 // pred_check
        _
      $region42: #{tpu_custom_call.1} parent=5 // pred_check_branch
        %229 = sbr.rel (%p226) target = $region44
      $region43: #{tpu_custom_call.1} parent=5 // pred_region
        %s230 = ssub.s32 %s12, 1
        %s231 = smul.u32 4, %s17
        %p232 = scmp.lt.s32.totalorder %s231, 7
        %s233 = scalar_select %p232, %s231, 7
        %s234 = smul.addr %s233, 2
        %s235 = smul.addr %s234, 8
        %s236 = scalar_lea.vmem %s0, %s235
        %p237 = pneg %p38
        %p238 = pneg %p35
        %s239 = smul.u32 16, %s17
        %p240 = scmp.lt.s32.totalorder %s239, 31
        %s241 = scalar_select %p240, %s239, 31
        %s242 = smul.addr %s241, 4
        %s243 = scalar_lea.vmem %s1, %s242
        %p244 = pneg %p64
        %p245 = pneg %p61
        %p246 = pneg %p85
        %p247 = pneg %p82
        %p248 = pneg %p106
        %p249 = pneg %p103
        %p250 = pneg %p127
        %p251 = pneg %p124
        %p252 = pneg %p148
        %p253 = pneg %p145
        %p254 = pneg %p174
        %p255 = pneg %p171
        %s256 = sand.u32 %s161, 1
        %s257 = sand.u32 %s161, 1
        %s258 = smul.addr %s257, 512
        %s259 = scalar_lea.vmem [#allocation2], %s258
        %s260 = smul.u32 4, %s17
        %p261 = scmp.lt.s32.totalorder %s260, 7
        %s262 = scalar_select %p261, %s260, 7
        %s263 = smul.addr %s262, 2
        %s264 = smul.addr %s263, 8
        %s265 = scalar_lea.vmem %s0, %s264
        %s266 = smul.u32 4, %s17
        %s267 = smul.u32 16, %s17
        %p268 = scmp.lt.s32.totalorder %s267, 31
        %s269 = scalar_select %p268, %s267, 31
        %s270 = smul.addr %s269, 4
        %s271 = scalar_lea.vmem %s1, %s270
        %s272 = smul.u32 16, %s17
        %s273 = smul.u32 16, %s17
        %v275 = vld [vmem:[%s265] sm:$0xff]
        %v276 = vld [vmem:[%s265 + $0x8] sm:$0xff]
        %v277 = vld [vmem:[%s265 + $0x10] sm:$0xff]
        %v278 = vld [vmem:[%s265 + $0x18] sm:$0xff]
        %v279 = vld [vmem:[%s265 + $0x20] sm:$0xff]
        %v280 = vld [vmem:[%s265 + $0x28] sm:$0xff]
        %v281 = vld [vmem:[%s265 + $0x30] sm:$0xff]
        %v282 = vld [vmem:[%s265 + $0x38] sm:$0xff]
        %v283 = vunpack.c.0.s8 %v275
        %v284 = vunpack.c.0.s8 %v276
        %v285 = vunpack.c.1.s8 %v275
        %v286 = vunpack.c.1.s8 %v276
        %v287 = vunpack.c.2.s8 %v275
        %v288 = vunpack.c.2.s8 %v276
        %v289 = vunpack.c.3.s8 %v275
        %v290 = vunpack.c.3.s8 %v276
        %v291 = vunpack.c.0.s8 %v277
        %v292 = vunpack.c.0.s8 %v278
        %v293 = vunpack.c.1.s8 %v277
        %v294 = vunpack.c.1.s8 %v278
        %v295 = vunpack.c.2.s8 %v277
        %v296 = vunpack.c.2.s8 %v278
        %v297 = vunpack.c.3.s8 %v277
        %v298 = vunpack.c.3.s8 %v278
        %v299 = vunpack.c.0.s8 %v279
        %v300 = vunpack.c.0.s8 %v280
        %v301 = vunpack.c.1.s8 %v279
        %v302 = vunpack.c.1.s8 %v280
        %v303 = vunpack.c.2.s8 %v279
        %v304 = vunpack.c.2.s8 %v280
        %v305 = vunpack.c.3.s8 %v279
        %v306 = vunpack.c.3.s8 %v280
        %v307 = vunpack.c.0.s8 %v281
        %v308 = vunpack.c.0.s8 %v282
        %v309 = vunpack.c.1.s8 %v281
        %v310 = vunpack.c.1.s8 %v282
        %v311 = vunpack.c.2.s8 %v281
        %v312 = vunpack.c.2.s8 %v282
        %v313 = vunpack.c.3.s8 %v281
        %v314 = vunpack.c.3.s8 %v282
        %v315 = vcvt.s32.f32 %v283
        %v316 = vcvt.s32.f32 %v284
        %v317 = vcvt.s32.f32 %v285
        %v318 = vcvt.s32.f32 %v286
        %v319 = vcvt.s32.f32 %v287
        %v320 = vcvt.s32.f32 %v288
        %v321 = vcvt.s32.f32 %v289
        %v322 = vcvt.s32.f32 %v290
        %v323 = vcvt.s32.f32 %v291
        %v324 = vcvt.s32.f32 %v292
        %v325 = vcvt.s32.f32 %v293
        %v326 = vcvt.s32.f32 %v294
        %v327 = vcvt.s32.f32 %v295
        %v328 = vcvt.s32.f32 %v296
        %v329 = vcvt.s32.f32 %v297
        %v330 = vcvt.s32.f32 %v298
        %v331 = vcvt.s32.f32 %v299
        %v332 = vcvt.s32.f32 %v300
        %v333 = vcvt.s32.f32 %v301
        %v334 = vcvt.s32.f32 %v302
        %v335 = vcvt.s32.f32 %v303
        %v336 = vcvt.s32.f32 %v304
        %v337 = vcvt.s32.f32 %v305
        %v338 = vcvt.s32.f32 %v306
        %v339 = vcvt.s32.f32 %v307
        %v340 = vcvt.s32.f32 %v308
        %v341 = vcvt.s32.f32 %v309
        %v342 = vcvt.s32.f32 %v310
        %v343 = vcvt.s32.f32 %v311
        %v344 = vcvt.s32.f32 %v312
        %v345 = vcvt.s32.f32 %v313
        %v346 = vcvt.s32.f32 %v314
        %v347 = vld [vmem:[%s271] sm:$0xf]
        %v348 = vld [vmem:[%s271 + $0x4] sm:$0xf]
        %v349 = vld [vmem:[%s271 + $0x8] sm:$0xf]
        %v350 = vld [vmem:[%s271 + $0xc] sm:$0xf]
        %v351 = vld [vmem:[%s271 + $0x10] sm:$0xf]
        %v352 = vld [vmem:[%s271 + $0x14] sm:$0xf]
        %v353 = vld [vmem:[%s271 + $0x18] sm:$0xf]
        %v354 = vld [vmem:[%s271 + $0x1c] sm:$0xf]
        %v355 = vld [vmem:[%s271 + $0x20] sm:$0xf]
        %v356 = vld [vmem:[%s271 + $0x24] sm:$0xf]
        %v357 = vld [vmem:[%s271 + $0x28] sm:$0xf]
        %v358 = vld [vmem:[%s271 + $0x2c] sm:$0xf]
        %v359 = vld [vmem:[%s271 + $0x30] sm:$0xf]
        %v360 = vld [vmem:[%s271 + $0x34] sm:$0xf]
        %v361 = vld [vmem:[%s271 + $0x38] sm:$0xf]
        %v362 = vld [vmem:[%s271 + $0x3c] sm:$0xf]
        %v363 = vld [vmem:[%s2] sm:$0xf]
        %v364 = vld [vmem:[%s2 + $0x4] sm:$0xf]
        %v365 = vld [vmem:[%s2 + $0x8] sm:$0xf]
        %v366 = vld [vmem:[%s2 + $0xc] sm:$0xf]
        %v367 = vld [vmem:[%s2 + $0x10] sm:$0xf]
        %v368 = vld [vmem:[%s2 + $0x14] sm:$0xf]
        %v369 = vld [vmem:[%s2 + $0x18] sm:$0xf]
        %v370 = vld [vmem:[%s2 + $0x1c] sm:$0xf]
        %v371 = vld [vmem:[%s2 + $0x20] sm:$0xf]
        %v372 = vld [vmem:[%s2 + $0x24] sm:$0xf]
        %v373 = vld [vmem:[%s2 + $0x28] sm:$0xf]
        %v374 = vld [vmem:[%s2 + $0x2c] sm:$0xf]
        %v375 = vld [vmem:[%s2 + $0x30] sm:$0xf]
        %v376 = vld [vmem:[%s2 + $0x34] sm:$0xf]
        %v377 = vld [vmem:[%s2 + $0x38] sm:$0xf]
        %v378 = vld [vmem:[%s2 + $0x3c] sm:$0xf]
        %v379 = vld [vmem:[%s2 + $0x40] sm:$0xf]
        %v380 = vld [vmem:[%s2 + $0x44] sm:$0xf]
        %v381 = vld [vmem:[%s2 + $0x48] sm:$0xf]
        %v382 = vld [vmem:[%s2 + $0x4c] sm:$0xf]
        %v383 = vld [vmem:[%s2 + $0x50] sm:$0xf]
        %v384 = vld [vmem:[%s2 + $0x54] sm:$0xf]
        %v385 = vld [vmem:[%s2 + $0x58] sm:$0xf]
        %v386 = vld [vmem:[%s2 + $0x5c] sm:$0xf]
        %v387 = vld [vmem:[%s2 + $0x60] sm:$0xf]
        %v388 = vld [vmem:[%s2 + $0x64] sm:$0xf]
        %v389 = vld [vmem:[%s2 + $0x68] sm:$0xf]
        %v390 = vld [vmem:[%s2 + $0x6c] sm:$0xf]
        %v391 = vld [vmem:[%s2 + $0x70] sm:$0xf]
        %v392 = vld [vmem:[%s2 + $0x74] sm:$0xf]
        %v393 = vld [vmem:[%s2 + $0x78] sm:$0xf]
        %v394 = vld [vmem:[%s2 + $0x7c] sm:$0xf]
        %v395 = vld [vmem:[%s3] sm:$0xf]
        %v396 = vld [vmem:[%s3 + $0x4] sm:$0xf]
        %v429 = vunpack.c.l.b16 %v363
        %v430 = vunpack.c.l.b16 %v364
        %v431 = vunpack.c.l.b16 %v365
        %v432 = vunpack.c.l.b16 %v366
        %v433 = vunpack.c.l.b16 %v367
        %v434 = vunpack.c.l.b16 %v368
        %v435 = vunpack.c.l.b16 %v369
        %v436 = vunpack.c.l.b16 %v370
        %v437 = vunpack.c.l.b16 %v371
        %v438 = vunpack.c.l.b16 %v372
        %v439 = vunpack.c.l.b16 %v373
        %v440 = vunpack.c.l.b16 %v374
        %v441 = vunpack.c.l.b16 %v375
        %v442 = vunpack.c.l.b16 %v376
        %v443 = vunpack.c.l.b16 %v377
        %v444 = vunpack.c.l.b16 %v378
        %v445 = vunpack.c.l.b16 %v379
        %v446 = vunpack.c.l.b16 %v380
        %v447 = vunpack.c.l.b16 %v381
        %v448 = vunpack.c.l.b16 %v382
        %v449 = vunpack.c.l.b16 %v383
        %v450 = vunpack.c.l.b16 %v384
        %v451 = vunpack.c.l.b16 %v385
        %v452 = vunpack.c.l.b16 %v386
        %v453 = vunpack.c.l.b16 %v387
        %v454 = vunpack.c.l.b16 %v388
        %v455 = vunpack.c.l.b16 %v389
        %v456 = vunpack.c.l.b16 %v390
        %v457 = vunpack.c.l.b16 %v391
        %v458 = vunpack.c.l.b16 %v392
        %v459 = vunpack.c.l.b16 %v393
        %v460 = vunpack.c.l.b16 %v394
        %v461 = vpack.c.b16 %v430, %v429
        %v462 = vpack.c.b16 %v432, %v431
        %v463 = vpack.c.b16 %v434, %v433
        %v464 = vpack.c.b16 %v436, %v435
        %v465 = vpack.c.b16 %v438, %v437
        %v466 = vpack.c.b16 %v440, %v439
        %v467 = vpack.c.b16 %v442, %v441
        %v468 = vpack.c.b16 %v444, %v443
        %v469 = vpack.c.b16 %v446, %v445
        %v470 = vpack.c.b16 %v448, %v447
        %v471 = vpack.c.b16 %v450, %v449
        %v472 = vpack.c.b16 %v452, %v451
        %v473 = vpack.c.b16 %v454, %v453
        %v474 = vpack.c.b16 %v456, %v455
        %v475 = vpack.c.b16 %v458, %v457
        %v476 = vpack.c.b16 %v460, %v459
        %v479 = vunpack.c.l.b16 %v395
        %v480 = vunpack.c.l.b16 %v396
        %v481 = vpack.c.b16 %v480, %v479
        %vm483 = vcmask 130048
        %v485 = vsel %vm483, %v461, 0
        %v488 = vsel %vm483, %v462, 0
        %v491 = vsel %vm483, %v463, 0
        %v494 = vsel %vm483, %v464, 0
        %v497 = vsel %vm483, %v465, 0
        %v500 = vsel %vm483, %v466, 0
        %v503 = vsel %vm483, %v467, 0
        %v506 = vsel %vm483, %v468, 0
        %v509 = vsel %vm483, %v469, 0
        %v512 = vsel %vm483, %v470, 0
        %v515 = vsel %vm483, %v471, 0
        %v518 = vsel %vm483, %v472, 0
        %v521 = vsel %vm483, %v473, 0
        %v524 = vsel %vm483, %v474, 0
        %v527 = vsel %vm483, %v475, 0
        %v530 = vsel %vm483, %v476, 0
        %532 = vmatpush.bf16.msra.mxu0 0
        %533 = vmatpush.bf16.msra.mxu0 0
        %534 = vmatpush.bf16.msra.mxu0 0
        %535 = vmatpush.bf16.msra.mxu0 0
        %536 = vmatpush.bf16.msra.mxu0 0
        %537 = vmatpush.bf16.msra.mxu0 0
        %538 = vmatpush.bf16.msra.mxu0 0
        %539 = vmatpush.bf16.msra.mxu0 %v481
        %540 = vmatmul.bf16.gmra.mxu0 %v485
        %v541 = vpop.f32.mrf.mxu0
        %v542 = vadd.f32 0.0, %v541
        %v543 = vpop.f32.mrf.mxu0
        %v544 = vadd.f32 0.0, %v543
        %545 = vmatmul.bf16.gmra.mxu0 %v488
        %v546 = vpop.f32.mrf.mxu0
        %v547 = vadd.f32 0.0, %v546
        %v548 = vpop.f32.mrf.mxu0
        %v549 = vadd.f32 0.0, %v548
        %550 = vmatmul.bf16.gmra.mxu0 %v491
        %v551 = vpop.f32.mrf.mxu0
        %v552 = vadd.f32 0.0, %v551
        %v553 = vpop.f32.mrf.mxu0
        %v554 = vadd.f32 0.0, %v553
        %555 = vmatmul.bf16.gmra.mxu0 %v494
        %v556 = vpop.f32.mrf.mxu0
        %v557 = vadd.f32 0.0, %v556
        %v558 = vpop.f32.mrf.mxu0
        %v559 = vadd.f32 0.0, %v558
        %560 = vmatmul.bf16.gmra.mxu0 %v497
        %v561 = vpop.f32.mrf.mxu0
        %v562 = vadd.f32 0.0, %v561
        %v563 = vpop.f32.mrf.mxu0
        %v564 = vadd.f32 0.0, %v563
        %565 = vmatmul.bf16.gmra.mxu0 %v500
        %v566 = vpop.f32.mrf.mxu0
        %v567 = vadd.f32 0.0, %v566
        %v568 = vpop.f32.mrf.mxu0
        %v569 = vadd.f32 0.0, %v568
        %570 = vmatmul.bf16.gmra.mxu0 %v503
        %v571 = vpop.f32.mrf.mxu0
        %v572 = vadd.f32 0.0, %v571
        %v573 = vpop.f32.mrf.mxu0
        %v574 = vadd.f32 0.0, %v573
        %575 = vmatmul.bf16.gmra.mxu0 %v506
        %v576 = vpop.f32.mrf.mxu0
        %v577 = vadd.f32 0.0, %v576
        %v578 = vpop.f32.mrf.mxu0
        %v579 = vadd.f32 0.0, %v578
        %580 = vmatmul.bf16.gmra.mxu0 %v509
        %v581 = vpop.f32.mrf.mxu0
        %v582 = vadd.f32 0.0, %v581
        %v583 = vpop.f32.mrf.mxu0
        %v584 = vadd.f32 0.0, %v583
        %585 = vmatmul.bf16.gmra.mxu0 %v512
        %v586 = vpop.f32.mrf.mxu0
        %v587 = vadd.f32 0.0, %v586
        %v588 = vpop.f32.mrf.mxu0
        %v589 = vadd.f32 0.0, %v588
        %590 = vmatmul.bf16.gmra.mxu0 %v515
        %v591 = vpop.f32.mrf.mxu0
        %v592 = vadd.f32 0.0, %v591
        %v593 = vpop.f32.mrf.mxu0
        %v594 = vadd.f32 0.0, %v593
        %595 = vmatmul.bf16.gmra.mxu0 %v518
        %v596 = vpop.f32.mrf.mxu0
        %v597 = vadd.f32 0.0, %v596
        %v598 = vpop.f32.mrf.mxu0
        %v599 = vadd.f32 0.0, %v598
        %600 = vmatmul.bf16.gmra.mxu0 %v521
        %v601 = vpop.f32.mrf.mxu0
        %v602 = vadd.f32 0.0, %v601
        %v603 = vpop.f32.mrf.mxu0
        %v604 = vadd.f32 0.0, %v603
        %605 = vmatmul.bf16.gmra.mxu0 %v524
        %v606 = vpop.f32.mrf.mxu0
        %v607 = vadd.f32 0.0, %v606
        %v608 = vpop.f32.mrf.mxu0
        %v609 = vadd.f32 0.0, %v608
        %610 = vmatmul.bf16.gmra.mxu0 %v527
        %v611 = vpop.f32.mrf.mxu0
        %v612 = vadd.f32 0.0, %v611
        %v613 = vpop.f32.mrf.mxu0
        %v614 = vadd.f32 0.0, %v613
        %615 = vmatmul.bf16.gmra.mxu0 %v530
        %v616 = vpop.f32.mrf.mxu0
        %v617 = vadd.f32 0.0, %v616
        %v618 = vpop.f32.mrf.mxu0
        %v619 = vadd.f32 0.0, %v618
        %620 = vdwg.mxu0
        %v637 = vunpack.c.l.b16 %v347
        %v638 = vunpack.c.l.b16 %v348
        %v639 = vunpack.c.l.b16 %v349
        %v640 = vunpack.c.l.b16 %v350
        %v641 = vunpack.c.l.b16 %v351
        %v642 = vunpack.c.l.b16 %v352
        %v643 = vunpack.c.l.b16 %v353
        %v644 = vunpack.c.l.b16 %v354
        %v645 = vunpack.c.l.b16 %v355
        %v646 = vunpack.c.l.b16 %v356
        %v647 = vunpack.c.l.b16 %v357
        %v648 = vunpack.c.l.b16 %v358
        %v649 = vunpack.c.l.b16 %v359
        %v650 = vunpack.c.l.b16 %v360
        %v651 = vunpack.c.l.b16 %v361
        %v652 = vunpack.c.l.b16 %v362
        %v653 = vpack.c.b16 %v638, %v637
        %v654 = vpack.c.b16 %v640, %v639
        %v655 = vpack.c.b16 %v642, %v641
        %v656 = vpack.c.b16 %v644, %v643
        %v657 = vpack.c.b16 %v646, %v645
        %v658 = vpack.c.b16 %v648, %v647
        %v659 = vpack.c.b16 %v650, %v649
        %v660 = vpack.c.b16 %v652, %v651
        %v662 = vsel %vm483, %v653, 0
        %v665 = vsel %vm483, %v654, 0
        %v668 = vsel %vm483, %v655, 0
        %v671 = vsel %vm483, %v656, 0
        %v674 = vsel %vm483, %v657, 0
        %v677 = vsel %vm483, %v658, 0
        %v680 = vsel %vm483, %v659, 0
        %v683 = vsel %vm483, %v660, 0
        %685 = vmatpush.bf16.msra.mxu0 0
        %686 = vmatpush.bf16.msra.mxu0 0
        %687 = vmatpush.bf16.msra.mxu0 0
        %688 = vmatpush.bf16.msra.mxu0 0
        %689 = vmatpush.bf16.msra.mxu0 0
        %690 = vmatpush.bf16.msra.mxu0 0
        %691 = vmatpush.bf16.msra.mxu0 0
        %692 = vmatpush.bf16.msra.mxu0 %v481
        %693 = vmatmul.bf16.gmra.mxu0 %v662
        %v694 = vpop.f32.mrf.mxu0
        %v695 = vadd.f32 0.0, %v694
        %v696 = vpop.f32.mrf.mxu0
        %v697 = vadd.f32 0.0, %v696
        %698 = vmatmul.bf16.gmra.mxu0 %v665
        %v699 = vpop.f32.mrf.mxu0
        %v700 = vadd.f32 0.0, %v699
        %v701 = vpop.f32.mrf.mxu0
        %v702 = vadd.f32 0.0, %v701
        %703 = vmatmul.bf16.gmra.mxu0 %v668
        %v704 = vpop.f32.mrf.mxu0
        %v705 = vadd.f32 0.0, %v704
        %v706 = vpop.f32.mrf.mxu0
        %v707 = vadd.f32 0.0, %v706
        %708 = vmatmul.bf16.gmra.mxu0 %v671
        %v709 = vpop.f32.mrf.mxu0
        %v710 = vadd.f32 0.0, %v709
        %v711 = vpop.f32.mrf.mxu0
        %v712 = vadd.f32 0.0, %v711
        %713 = vmatmul.bf16.gmra.mxu0 %v674
        %v714 = vpop.f32.mrf.mxu0
        %v715 = vadd.f32 0.0, %v714
        %v716 = vpop.f32.mrf.mxu0
        %v717 = vadd.f32 0.0, %v716
        %718 = vmatmul.bf16.gmra.mxu0 %v677
        %v719 = vpop.f32.mrf.mxu0
        %v720 = vadd.f32 0.0, %v719
        %v721 = vpop.f32.mrf.mxu0
        %v722 = vadd.f32 0.0, %v721
        %723 = vmatmul.bf16.gmra.mxu0 %v680
        %v724 = vpop.f32.mrf.mxu0
        %v725 = vadd.f32 0.0, %v724
        %v726 = vpop.f32.mrf.mxu0
        %v727 = vadd.f32 0.0, %v726
        %728 = vmatmul.bf16.gmra.mxu0 %v683
        %v729 = vpop.f32.mrf.mxu0
        %v730 = vadd.f32 0.0, %v729
        %v731 = vpop.f32.mrf.mxu0
        %v732 = vadd.f32 0.0, %v731
        %733 = vdwg.mxu0
        %v734 = vld [vmem:[%s4] sm:$0x1]
        %v735 = vld [vmem:[%s5] sm:$0x1]
        %v737 = vperm.slane %v734, 0
        %v739 = vmul.f32 %v695, %v737
        %v740 = vmul.f32 %v697, %v737
        %v741 = vmul.f32 %v700, %v737
        %v742 = vmul.f32 %v702, %v737
        %v743 = vmul.f32 %v705, %v737
        %v744 = vmul.f32 %v707, %v737
        %v745 = vmul.f32 %v710, %v737
        %v746 = vmul.f32 %v712, %v737
        %v747 = vmul.f32 %v715, %v737
        %v748 = vmul.f32 %v717, %v737
        %v749 = vmul.f32 %v720, %v737
        %v750 = vmul.f32 %v722, %v737
        %v751 = vmul.f32 %v725, %v737
        %v752 = vmul.f32 %v727, %v737
        %v753 = vmul.f32 %v730, %v737
        %v754 = vmul.f32 %v732, %v737
        %v755 = vsel %vm483, %v739, 0.0
        %756 = vadd.xlane.f32.xlu0 %v755
        %v757 = vpop.xlane.xlu0 %756
        %v758 = vsel %vm483, %v740, 0.0
        %759 = vadd.xlane.f32.xlu0 %v758
        %v760 = vpop.xlane.xlu0 %759
        %v761 = vsel %vm483, %v741, 0.0
        %762 = vadd.xlane.f32.xlu0 %v761
        %v763 = vpop.xlane.xlu0 %762
        %v764 = vsel %vm483, %v742, 0.0
        %765 = vadd.xlane.f32.xlu0 %v764
        %v766 = vpop.xlane.xlu0 %765
        %v767 = vsel %vm483, %v743, 0.0
        %768 = vadd.xlane.f32.xlu0 %v767
        %v769 = vpop.xlane.xlu0 %768
        %v770 = vsel %vm483, %v744, 0.0
        %771 = vadd.xlane.f32.xlu0 %v770
        %v772 = vpop.xlane.xlu0 %771
        %v773 = vsel %vm483, %v745, 0.0
        %774 = vadd.xlane.f32.xlu0 %v773
        %v775 = vpop.xlane.xlu0 %774
        %v776 = vsel %vm483, %v746, 0.0
        %777 = vadd.xlane.f32.xlu0 %v776
        %v778 = vpop.xlane.xlu0 %777
        %v779 = vsel %vm483, %v747, 0.0
        %780 = vadd.xlane.f32.xlu0 %v779
        %v781 = vpop.xlane.xlu0 %780
        %v782 = vsel %vm483, %v748, 0.0
        %783 = vadd.xlane.f32.xlu0 %v782
        %v784 = vpop.xlane.xlu0 %783
        %v785 = vsel %vm483, %v749, 0.0
        %786 = vadd.xlane.f32.xlu0 %v785
        %v787 = vpop.xlane.xlu0 %786
        %v788 = vsel %vm483, %v750, 0.0
        %789 = vadd.xlane.f32.xlu0 %v788
        %v790 = vpop.xlane.xlu0 %789
        %v791 = vsel %vm483, %v751, 0.0
        %792 = vadd.xlane.f32.xlu0 %v791
        %v793 = vpop.xlane.xlu0 %792
        %v794 = vsel %vm483, %v752, 0.0
        %795 = vadd.xlane.f32.xlu0 %v794
        %v796 = vpop.xlane.xlu0 %795
        %v797 = vsel %vm483, %v753, 0.0
        %798 = vadd.xlane.f32.xlu0 %v797
        %v799 = vpop.xlane.xlu0 %798
        %v800 = vsel %vm483, %v754, 0.0
        %801 = vadd.xlane.f32.xlu0 %v800
        %v802 = vpop.xlane.xlu0 %801
        %v804 = vsel %vm483, %v735, 0
        %v807 = vsel %vm483, %v542, 0
        %v810 = vsel %vm483, %v544, 0
        %v813 = vsel %vm483, %v547, 0
        %v816 = vsel %vm483, %v549, 0
        %v819 = vsel %vm483, %v552, 0
        %v822 = vsel %vm483, %v554, 0
        %v825 = vsel %vm483, %v557, 0
        %v828 = vsel %vm483, %v559, 0
        %v831 = vsel %vm483, %v562, 0
        %v834 = vsel %vm483, %v564, 0
        %v837 = vsel %vm483, %v567, 0
        %v840 = vsel %vm483, %v569, 0
        %v843 = vsel %vm483, %v572, 0
        %v846 = vsel %vm483, %v574, 0
        %v849 = vsel %vm483, %v577, 0
        %v852 = vsel %vm483, %v579, 0
        %v855 = vsel %vm483, %v582, 0
        %v858 = vsel %vm483, %v584, 0
        %v861 = vsel %vm483, %v587, 0
        %v864 = vsel %vm483, %v589, 0
        %v867 = vsel %vm483, %v592, 0
        %v870 = vsel %vm483, %v594, 0
        %v873 = vsel %vm483, %v597, 0
        %v876 = vsel %vm483, %v599, 0
        %v879 = vsel %vm483, %v602, 0
        %v882 = vsel %vm483, %v604, 0
        %v885 = vsel %vm483, %v607, 0
        %v888 = vsel %vm483, %v609, 0
        %v891 = vsel %vm483, %v612, 0
        %v894 = vsel %vm483, %v614, 0
        %v897 = vsel %vm483, %v617, 0
        %v900 = vsel %vm483, %v619, 0
        %902 = vmatpush.xpose.msra.mxu0 %v852
        %903 = vmatpush.xpose.msra.mxu0 %v849
        %904 = vmatpush.xpose.msra.mxu0 %v846
        %905 = vmatpush.xpose.msra.mxu0 %v843
        %906 = vmatpush.xpose.msra.mxu0 %v840
        %907 = vmatpush.xpose.msra.mxu0 %v837
        %908 = vmatpush.xpose.msra.mxu0 %v834
        %909 = vmatpush.xpose.msra.mxu0 %v831
        %910 = vmatpush.xpose.msra.mxu0 %v828
        %911 = vmatpush.xpose.msra.mxu0 %v825
        %912 = vmatpush.xpose.msra.mxu0 %v822
        %913 = vmatpush.xpose.msra.mxu0 %v819
        %914 = vmatpush.xpose.msra.mxu0 %v816
        %915 = vmatpush.xpose.msra.mxu0 %v813
        %916 = vmatpush.xpose.msra.mxu0 %v810
        %917 = vmatpush.xpose.msra.mxu0 %v807
        %918 = vmatmul.f32.gmra.mxu0 %v804
        %v919 = vpop.f32.mrf.mxu0
        %v920 = vadd.f32 0.0, %v919
        %921 = vdwg.mxu0
        %922 = vmatpush.xpose.msra.mxu0 %v900
        %923 = vmatpush.xpose.msra.mxu0 %v897
        %924 = vmatpush.xpose.msra.mxu0 %v894
        %925 = vmatpush.xpose.msra.mxu0 %v891
        %926 = vmatpush.xpose.msra.mxu0 %v888
        %927 = vmatpush.xpose.msra.mxu0 %v885
        %928 = vmatpush.xpose.msra.mxu0 %v882
        %929 = vmatpush.xpose.msra.mxu0 %v879
        %930 = vmatpush.xpose.msra.mxu0 %v876
        %931 = vmatpush.xpose.msra.mxu0 %v873
        %932 = vmatpush.xpose.msra.mxu0 %v870
        %933 = vmatpush.xpose.msra.mxu0 %v867
        %934 = vmatpush.xpose.msra.mxu0 %v864
        %935 = vmatpush.xpose.msra.mxu0 %v861
        %936 = vmatpush.xpose.msra.mxu0 %v858
        %937 = vmatpush.xpose.msra.mxu0 %v855
        %938 = vmatmul.f32.gmra.mxu0 %v804
        %v939 = vpop.f32.mrf.mxu0
        %v940 = vadd.f32 0.0, %v939
        %941 = vdwg.mxu0
        %v942 = vperm.slane %v920, 0
        %v943 = vperm.slane %v940, 0
        %v944 = vadd.f32 %v757, %v942
        %v945 = vadd.f32 %v757, %v943
        %v946 = vadd.f32 %v760, %v942
        %v947 = vadd.f32 %v760, %v943
        %v948 = vadd.f32 %v763, %v942
        %v949 = vadd.f32 %v763, %v943
        %v950 = vadd.f32 %v766, %v942
        %v951 = vadd.f32 %v766, %v943
        %v952 = vadd.f32 %v769, %v942
        %v953 = vadd.f32 %v769, %v943
        %v954 = vadd.f32 %v772, %v942
        %v955 = vadd.f32 %v772, %v943
        %v956 = vadd.f32 %v775, %v942
        %v957 = vadd.f32 %v775, %v943
        %v958 = vadd.f32 %v778, %v942
        %v959 = vadd.f32 %v778, %v943
        %v960 = vadd.f32 %v781, %v942
        %v961 = vadd.f32 %v781, %v943
        %v962 = vadd.f32 %v784, %v942
        %v963 = vadd.f32 %v784, %v943
        %v964 = vadd.f32 %v787, %v942
        %v965 = vadd.f32 %v787, %v943
        %v966 = vadd.f32 %v790, %v942
        %v967 = vadd.f32 %v790, %v943
        %v968 = vadd.f32 %v793, %v942
        %v969 = vadd.f32 %v793, %v943
        %v970 = vadd.f32 %v796, %v942
        %v971 = vadd.f32 %v796, %v943
        %v972 = vadd.f32 %v799, %v942
        %v973 = vadd.f32 %v799, %v943
        %v974 = vadd.f32 %v802, %v942
        %v975 = vadd.f32 %v802, %v943
        %vm976 = vcmp.gt.f32.partialorder %v944, 0.0
        %vm977 = vcmp.gt.f32.partialorder %v945, 0.0
        %vm978 = vcmp.gt.f32.partialorder %v946, 0.0
        %vm979 = vcmp.gt.f32.partialorder %v947, 0.0
        %vm980 = vcmp.gt.f32.partialorder %v948, 0.0
        %vm981 = vcmp.gt.f32.partialorder %v949, 0.0
        %vm982 = vcmp.gt.f32.partialorder %v950, 0.0
        %vm983 = vcmp.gt.f32.partialorder %v951, 0.0
        %vm984 = vcmp.gt.f32.partialorder %v952, 0.0
        %vm985 = vcmp.gt.f32.partialorder %v953, 0.0
        %vm986 = vcmp.gt.f32.partialorder %v954, 0.0
        %vm987 = vcmp.gt.f32.partialorder %v955, 0.0
        %vm988 = vcmp.gt.f32.partialorder %v956, 0.0
        %vm989 = vcmp.gt.f32.partialorder %v957, 0.0
        %vm990 = vcmp.gt.f32.partialorder %v958, 0.0
        %vm991 = vcmp.gt.f32.partialorder %v959, 0.0
        %vm992 = vcmp.gt.f32.partialorder %v960, 0.0
        %vm993 = vcmp.gt.f32.partialorder %v961, 0.0
        %vm994 = vcmp.gt.f32.partialorder %v962, 0.0
        %vm995 = vcmp.gt.f32.partialorder %v963, 0.0
        %vm996 = vcmp.gt.f32.partialorder %v964, 0.0
        %vm997 = vcmp.gt.f32.partialorder %v965, 0.0
        %vm998 = vcmp.gt.f32.partialorder %v966, 0.0
        %vm999 = vcmp.gt.f32.partialorder %v967, 0.0
        %vm1000 = vcmp.gt.f32.partialorder %v968, 0.0
        %vm1001 = vcmp.gt.f32.partialorder %v969, 0.0
        %vm1002 = vcmp.gt.f32.partialorder %v970, 0.0
        %vm1003 = vcmp.gt.f32.partialorder %v971, 0.0
        %vm1004 = vcmp.gt.f32.partialorder %v972, 0.0
        %vm1005 = vcmp.gt.f32.partialorder %v973, 0.0
        %vm1006 = vcmp.gt.f32.partialorder %v974, 0.0
        %vm1007 = vcmp.gt.f32.partialorder %v975, 0.0
        %v1008 = vmul.f32 %v944, 0.2
        %v1009 = vmul.f32 %v945, 0.2
        %v1010 = vmul.f32 %v946, 0.2
        %v1011 = vmul.f32 %v947, 0.2
        %v1012 = vmul.f32 %v948, 0.2
        %v1013 = vmul.f32 %v949, 0.2
        %v1014 = vmul.f32 %v950, 0.2
        %v1015 = vmul.f32 %v951, 0.2
        %v1016 = vmul.f32 %v952, 0.2
        %v1017 = vmul.f32 %v953, 0.2
        %v1018 = vmul.f32 %v954, 0.2
        %v1019 = vmul.f32 %v955, 0.2
        %v1020 = vmul.f32 %v956, 0.2
        %v1021 = vmul.f32 %v957, 0.2
        %v1022 = vmul.f32 %v958, 0.2
        %v1023 = vmul.f32 %v959, 0.2
        %v1024 = vmul.f32 %v960, 0.2
        %v1025 = vmul.f32 %v961, 0.2
        %v1026 = vmul.f32 %v962, 0.2
        %v1027 = vmul.f32 %v963, 0.2
        %v1028 = vmul.f32 %v964, 0.2
        %v1029 = vmul.f32 %v965, 0.2
        %v1030 = vmul.f32 %v966, 0.2
        %v1031 = vmul.f32 %v967, 0.2
        %v1032 = vmul.f32 %v968, 0.2
        %v1033 = vmul.f32 %v969, 0.2
        %v1034 = vmul.f32 %v970, 0.2
        %v1035 = vmul.f32 %v971, 0.2
        %v1036 = vmul.f32 %v972, 0.2
        %v1037 = vmul.f32 %v973, 0.2
        %v1038 = vmul.f32 %v974, 0.2
        %v1039 = vmul.f32 %v975, 0.2
        %v1040 = vsel %vm976, %v944, %v1008
        %v1041 = vsel %vm977, %v945, %v1009
        %v1042 = vsel %vm978, %v946, %v1010
        %v1043 = vsel %vm979, %v947, %v1011
        %v1044 = vsel %vm980, %v948, %v1012
        %v1045 = vsel %vm981, %v949, %v1013
        %v1046 = vsel %vm982, %v950, %v1014
        %v1047 = vsel %vm983, %v951, %v1015
        %v1048 = vsel %vm984, %v952, %v1016
        %v1049 = vsel %vm985, %v953, %v1017
        %v1050 = vsel %vm986, %v954, %v1018
        %v1051 = vsel %vm987, %v955, %v1019
        %v1052 = vsel %vm988, %v956, %v1020
        %v1053 = vsel %vm989, %v957, %v1021
        %v1054 = vsel %vm990, %v958, %v1022
        %v1055 = vsel %vm991, %v959, %v1023
        %v1056 = vsel %vm992, %v960, %v1024
        %v1057 = vsel %vm993, %v961, %v1025
        %v1058 = vsel %vm994, %v962, %v1026
        %v1059 = vsel %vm995, %v963, %v1027
        %v1060 = vsel %vm996, %v964, %v1028
        %v1061 = vsel %vm997, %v965, %v1029
        %v1062 = vsel %vm998, %v966, %v1030
        %v1063 = vsel %vm999, %v967, %v1031
        %v1064 = vsel %vm1000, %v968, %v1032
        %v1065 = vsel %vm1001, %v969, %v1033
        %v1066 = vsel %vm1002, %v970, %v1034
        %v1067 = vsel %vm1003, %v971, %v1035
        %v1068 = vsel %vm1004, %v972, %v1036
        %v1069 = vsel %vm1005, %v973, %v1037
        %v1070 = vsel %vm1006, %v974, %v1038
        %v1071 = vsel %vm1007, %v975, %v1039
        %v1072 = vsub.f32 0.0, %v1040
        %v1073 = vsub.f32 0.0, %v1041
        %v1074 = vsub.f32 0.0, %v1042
        %v1075 = vsub.f32 0.0, %v1043
        %v1076 = vsub.f32 0.0, %v1044
        %v1077 = vsub.f32 0.0, %v1045
        %v1078 = vsub.f32 0.0, %v1046
        %v1079 = vsub.f32 0.0, %v1047
        %v1080 = vsub.f32 0.0, %v1048
        %v1081 = vsub.f32 0.0, %v1049
        %v1082 = vsub.f32 0.0, %v1050
        %v1083 = vsub.f32 0.0, %v1051
        %v1084 = vsub.f32 0.0, %v1052
        %v1085 = vsub.f32 0.0, %v1053
        %v1086 = vsub.f32 0.0, %v1054
        %v1087 = vsub.f32 0.0, %v1055
        %v1088 = vsub.f32 0.0, %v1056
        %v1089 = vsub.f32 0.0, %v1057
        %v1090 = vsub.f32 0.0, %v1058
        %v1091 = vsub.f32 0.0, %v1059
        %v1092 = vsub.f32 0.0, %v1060
        %v1093 = vsub.f32 0.0, %v1061
        %v1094 = vsub.f32 0.0, %v1062
        %v1095 = vsub.f32 0.0, %v1063
        %v1096 = vsub.f32 0.0, %v1064
        %v1097 = vsub.f32 0.0, %v1065
        %v1098 = vsub.f32 0.0, %v1066
        %v1099 = vsub.f32 0.0, %v1067
        %v1100 = vsub.f32 0.0, %v1068
        %v1101 = vsub.f32 0.0, %v1069
        %v1102 = vsub.f32 0.0, %v1070
        %v1103 = vsub.f32 0.0, %v1071
        %v1104 = vmin.f32 %v1072, 60.0
        %v1105 = vmin.f32 %v1073, 60.0
        %v1106 = vmin.f32 %v1074, 60.0
        %v1107 = vmin.f32 %v1075, 60.0
        %v1108 = vmin.f32 %v1076, 60.0
        %v1109 = vmin.f32 %v1077, 60.0
        %v1110 = vmin.f32 %v1078, 60.0
        %v1111 = vmin.f32 %v1079, 60.0
        %v1112 = vmin.f32 %v1080, 60.0
        %v1113 = vmin.f32 %v1081, 60.0
        %v1114 = vmin.f32 %v1082, 60.0
        %v1115 = vmin.f32 %v1083, 60.0
        %v1116 = vmin.f32 %v1084, 60.0
        %v1117 = vmin.f32 %v1085, 60.0
        %v1118 = vmin.f32 %v1086, 60.0
        %v1119 = vmin.f32 %v1087, 60.0
        %v1120 = vmin.f32 %v1088, 60.0
        %v1121 = vmin.f32 %v1089, 60.0
        %v1122 = vmin.f32 %v1090, 60.0
        %v1123 = vmin.f32 %v1091, 60.0
        %v1124 = vmin.f32 %v1092, 60.0
        %v1125 = vmin.f32 %v1093, 60.0
        %v1126 = vmin.f32 %v1094, 60.0
        %v1127 = vmin.f32 %v1095, 60.0
        %v1128 = vmin.f32 %v1096, 60.0
        %v1129 = vmin.f32 %v1097, 60.0
        %v1130 = vmin.f32 %v1098, 60.0
        %v1131 = vmin.f32 %v1099, 60.0
        %v1132 = vmin.f32 %v1100, 60.0
        %v1133 = vmin.f32 %v1101, 60.0
        %v1134 = vmin.f32 %v1102, 60.0
        %v1135 = vmin.f32 %v1103, 60.0
        %v1136 = vmul.f32 %v1104, 1.442695
        %v1137 = vpow.pop %v1136
        %v1138 = vmul.f32 %v1105, 1.442695
        %v1139 = vpow.pop %v1138
        %v1140 = vmul.f32 %v1106, 1.442695
        %v1141 = vpow.pop %v1140
        %v1142 = vmul.f32 %v1107, 1.442695
        %v1143 = vpow.pop %v1142
        %v1144 = vmul.f32 %v1108, 1.442695
        %v1145 = vpow.pop %v1144
        %v1146 = vmul.f32 %v1109, 1.442695
        %v1147 = vpow.pop %v1146
        %v1148 = vmul.f32 %v1110, 1.442695
        %v1149 = vpow.pop %v1148
        %v1150 = vmul.f32 %v1111, 1.442695
        %v1151 = vpow.pop %v1150
        %v1152 = vmul.f32 %v1112, 1.442695
        %v1153 = vpow.pop %v1152
        %v1154 = vmul.f32 %v1113, 1.442695
        %v1155 = vpow.pop %v1154
        %v1156 = vmul.f32 %v1114, 1.442695
        %v1157 = vpow.pop %v1156
        %v1158 = vmul.f32 %v1115, 1.442695
        %v1159 = vpow.pop %v1158
        %v1160 = vmul.f32 %v1116, 1.442695
        %v1161 = vpow.pop %v1160
        %v1162 = vmul.f32 %v1117, 1.442695
        %v1163 = vpow.pop %v1162
        %v1164 = vmul.f32 %v1118, 1.442695
        %v1165 = vpow.pop %v1164
        %v1166 = vmul.f32 %v1119, 1.442695
        %v1167 = vpow.pop %v1166
        %v1168 = vmul.f32 %v1120, 1.442695
        %v1169 = vpow.pop %v1168
        %v1170 = vmul.f32 %v1121, 1.442695
        %v1171 = vpow.pop %v1170
        %v1172 = vmul.f32 %v1122, 1.442695
        %v1173 = vpow.pop %v1172
        %v1174 = vmul.f32 %v1123, 1.442695
        %v1175 = vpow.pop %v1174
        %v1176 = vmul.f32 %v1124, 1.442695
        %v1177 = vpow.pop %v1176
        %v1178 = vmul.f32 %v1125, 1.442695
        %v1179 = vpow.pop %v1178
        %v1180 = vmul.f32 %v1126, 1.442695
        %v1181 = vpow.pop %v1180
        %v1182 = vmul.f32 %v1127, 1.442695
        %v1183 = vpow.pop %v1182
        %v1184 = vmul.f32 %v1128, 1.442695
        %v1185 = vpow.pop %v1184
        %v1186 = vmul.f32 %v1129, 1.442695
        %v1187 = vpow.pop %v1186
        %v1188 = vmul.f32 %v1130, 1.442695
        %v1189 = vpow.pop %v1188
        %v1190 = vmul.f32 %v1131, 1.442695
        %v1191 = vpow.pop %v1190
        %v1192 = vmul.f32 %v1132, 1.442695
        %v1193 = vpow.pop %v1192
        %v1194 = vmul.f32 %v1133, 1.442695
        %v1195 = vpow.pop %v1194
        %v1196 = vmul.f32 %v1134, 1.442695
        %v1197 = vpow.pop %v1196
        %v1198 = vmul.f32 %v1135, 1.442695
        %v1199 = vpow.pop %v1198
        %v1200 = vmul.f32 %v315, %v1137
        %v1201 = vmul.f32 %v316, %v1139
        %v1202 = vmul.f32 %v317, %v1141
        %v1203 = vmul.f32 %v318, %v1143
        %v1204 = vmul.f32 %v319, %v1145
        %v1205 = vmul.f32 %v320, %v1147
        %v1206 = vmul.f32 %v321, %v1149
        %v1207 = vmul.f32 %v322, %v1151
        %v1208 = vmul.f32 %v323, %v1153
        %v1209 = vmul.f32 %v324, %v1155
        %v1210 = vmul.f32 %v325, %v1157
        %v1211 = vmul.f32 %v326, %v1159
        %v1212 = vmul.f32 %v327, %v1161
        %v1213 = vmul.f32 %v328, %v1163
        %v1214 = vmul.f32 %v329, %v1165
        %v1215 = vmul.f32 %v330, %v1167
        %v1216 = vmul.f32 %v331, %v1169
        %v1217 = vmul.f32 %v332, %v1171
        %v1218 = vmul.f32 %v333, %v1173
        %v1219 = vmul.f32 %v334, %v1175
        %v1220 = vmul.f32 %v335, %v1177
        %v1221 = vmul.f32 %v336, %v1179
        %v1222 = vmul.f32 %v337, %v1181
        %v1223 = vmul.f32 %v338, %v1183
        %v1224 = vmul.f32 %v339, %v1185
        %v1225 = vmul.f32 %v340, %v1187
        %v1226 = vmul.f32 %v341, %v1189
        %v1227 = vmul.f32 %v342, %v1191
        %v1228 = vmul.f32 %v343, %v1193
        %v1229 = vmul.f32 %v344, %v1195
        %v1230 = vmul.f32 %v345, %v1197
        %v1231 = vmul.f32 %v346, %v1199
        %v1232 = vadd.f32 %v1200, %v1201
        %1233 = vadd.xlane.f32.xlu0 %v1232
        %v1234 = vpop.xlane.xlu0 %1233
        %v1235 = vadd.f32 %v1202, %v1203
        %1236 = vadd.xlane.f32.xlu0 %v1235
        %v1237 = vpop.xlane.xlu0 %1236
        %v1238 = vadd.f32 %v1204, %v1205
        %1239 = vadd.xlane.f32.xlu0 %v1238
        %v1240 = vpop.xlane.xlu0 %1239
        %v1241 = vadd.f32 %v1206, %v1207
        %1242 = vadd.xlane.f32.xlu0 %v1241
        %v1243 = vpop.xlane.xlu0 %1242
        %v1244 = vadd.f32 %v1208, %v1209
        %1245 = vadd.xlane.f32.xlu0 %v1244
        %v1246 = vpop.xlane.xlu0 %1245
        %v1247 = vadd.f32 %v1210, %v1211
        %1248 = vadd.xlane.f32.xlu0 %v1247
        %v1249 = vpop.xlane.xlu0 %1248
        %v1250 = vadd.f32 %v1212, %v1213
        %1251 = vadd.xlane.f32.xlu0 %v1250
        %v1252 = vpop.xlane.xlu0 %1251
        %v1253 = vadd.f32 %v1214, %v1215
        %1254 = vadd.xlane.f32.xlu0 %v1253
        %v1255 = vpop.xlane.xlu0 %1254
        %v1256 = vadd.f32 %v1216, %v1217
        %1257 = vadd.xlane.f32.xlu0 %v1256
        %v1258 = vpop.xlane.xlu0 %1257
        %v1259 = vadd.f32 %v1218, %v1219
        %1260 = vadd.xlane.f32.xlu0 %v1259
        %v1261 = vpop.xlane.xlu0 %1260
        %v1262 = vadd.f32 %v1220, %v1221
        %1263 = vadd.xlane.f32.xlu0 %v1262
        %v1264 = vpop.xlane.xlu0 %1263
        %v1265 = vadd.f32 %v1222, %v1223
        %1266 = vadd.xlane.f32.xlu0 %v1265
        %v1267 = vpop.xlane.xlu0 %1266
        %v1268 = vadd.f32 %v1224, %v1225
        %1269 = vadd.xlane.f32.xlu0 %v1268
        %v1270 = vpop.xlane.xlu0 %1269
        %v1271 = vadd.f32 %v1226, %v1227
        %1272 = vadd.xlane.f32.xlu0 %v1271
        %v1273 = vpop.xlane.xlu0 %1272
        %v1274 = vadd.f32 %v1228, %v1229
        %1275 = vadd.xlane.f32.xlu0 %v1274
        %v1276 = vpop.xlane.xlu0 %1275
        %v1277 = vadd.f32 %v1230, %v1231
        %1278 = vadd.xlane.f32.xlu0 %v1277
        %v1279 = vpop.xlane.xlu0 %1278
        %v1280 = vmax.f32 %v1234, 1e-30
        %v1281 = vmax.f32 %v1237, 1e-30
        %v1282 = vmax.f32 %v1240, 1e-30
        %v1283 = vmax.f32 %v1243, 1e-30
        %v1284 = vmax.f32 %v1246, 1e-30
        %v1285 = vmax.f32 %v1249, 1e-30
        %v1286 = vmax.f32 %v1252, 1e-30
        %v1287 = vmax.f32 %v1255, 1e-30
        %v1288 = vmax.f32 %v1258, 1e-30
        %v1289 = vmax.f32 %v1261, 1e-30
        %v1290 = vmax.f32 %v1264, 1e-30
        %v1291 = vmax.f32 %v1267, 1e-30
        %v1292 = vmax.f32 %v1270, 1e-30
        %v1293 = vmax.f32 %v1273, 1e-30
        %v1294 = vmax.f32 %v1276, 1e-30
        %v1295 = vmax.f32 %v1279, 1e-30
        %v1296 = vpack.c.bf16 %v1202, %v1200
        %v1297 = vpack.c.bf16 %v1203, %v1201
        %v1298 = vpack.c.bf16 %v1206, %v1204
        %v1299 = vpack.c.bf16 %v1207, %v1205
        %v1300 = vpack.c.bf16 %v1210, %v1208
        %v1301 = vpack.c.bf16 %v1211, %v1209
        %v1302 = vpack.c.bf16 %v1214, %v1212
        %v1303 = vpack.c.bf16 %v1215, %v1213
        %v1304 = vpack.c.bf16 %v1218, %v1216
        %v1305 = vpack.c.bf16 %v1219, %v1217
        %v1306 = vpack.c.bf16 %v1222, %v1220
        %v1307 = vpack.c.bf16 %v1223, %v1221
        %v1308 = vpack.c.bf16 %v1226, %v1224
        %v1309 = vpack.c.bf16 %v1227, %v1225
        %v1310 = vpack.c.bf16 %v1230, %v1228
        %v1311 = vpack.c.bf16 %v1231, %v1229
        %v1312 = vpack.c.bf16 %v544, %v542
        %v1313 = vpack.c.bf16 %v549, %v547
        %v1314 = vpack.c.bf16 %v554, %v552
        %v1315 = vpack.c.bf16 %v559, %v557
        %v1316 = vpack.c.bf16 %v564, %v562
        %v1317 = vpack.c.bf16 %v569, %v567
        %v1318 = vpack.c.bf16 %v574, %v572
        %v1319 = vpack.c.bf16 %v579, %v577
        %v1320 = vpack.c.bf16 %v584, %v582
        %v1321 = vpack.c.bf16 %v589, %v587
        %v1322 = vpack.c.bf16 %v594, %v592
        %v1323 = vpack.c.bf16 %v599, %v597
        %v1324 = vpack.c.bf16 %v604, %v602
        %v1325 = vpack.c.bf16 %v609, %v607
        %v1326 = vpack.c.bf16 %v614, %v612
        %v1327 = vpack.c.bf16 %v619, %v617
        %1328 = vmatpush.bf16.msra.mxu0 %v1319
        %1329 = vmatpush.bf16.msra.mxu0 %v1318
        %1330 = vmatpush.bf16.msra.mxu0 %v1317
        %1331 = vmatpush.bf16.msra.mxu0 %v1316
        %1332 = vmatpush.bf16.msra.mxu0 %v1315
        %1333 = vmatpush.bf16.msra.mxu0 %v1314
        %1334 = vmatpush.bf16.msra.mxu0 %v1313
        %1335 = vmatpush.bf16.msra.mxu0 %v1312
        %1336 = vmatmul.bf16.gmra.mxu0 %v1296
        %v1337 = vpop.f32.mrf.mxu0
        %v1338 = vadd.f32 0.0, %v1337
        %v1339 = vpop.f32.mrf.mxu0
        %v1340 = vadd.f32 0.0, %v1339
        %1341 = vmatmul.bf16.gmra.mxu0 %v1298
        %v1342 = vpop.f32.mrf.mxu0
        %v1343 = vadd.f32 0.0, %v1342
        %v1344 = vpop.f32.mrf.mxu0
        %v1345 = vadd.f32 0.0, %v1344
        %1346 = vmatmul.bf16.gmra.mxu0 %v1300
        %v1347 = vpop.f32.mrf.mxu0
        %v1348 = vadd.f32 0.0, %v1347
        %v1349 = vpop.f32.mrf.mxu0
        %v1350 = vadd.f32 0.0, %v1349
        %1351 = vmatmul.bf16.gmra.mxu0 %v1302
        %v1352 = vpop.f32.mrf.mxu0
        %v1353 = vadd.f32 0.0, %v1352
        %v1354 = vpop.f32.mrf.mxu0
        %v1355 = vadd.f32 0.0, %v1354
        %1356 = vmatmul.bf16.gmra.mxu0 %v1304
        %v1357 = vpop.f32.mrf.mxu0
        %v1358 = vadd.f32 0.0, %v1357
        %v1359 = vpop.f32.mrf.mxu0
        %v1360 = vadd.f32 0.0, %v1359
        %1361 = vmatmul.bf16.gmra.mxu0 %v1306
        %v1362 = vpop.f32.mrf.mxu0
        %v1363 = vadd.f32 0.0, %v1362
        %v1364 = vpop.f32.mrf.mxu0
        %v1365 = vadd.f32 0.0, %v1364
        %1366 = vmatmul.bf16.gmra.mxu0 %v1308
        %v1367 = vpop.f32.mrf.mxu0
        %v1368 = vadd.f32 0.0, %v1367
        %v1369 = vpop.f32.mrf.mxu0
        %v1370 = vadd.f32 0.0, %v1369
        %1371 = vmatmul.bf16.gmra.mxu0 %v1310
        %v1372 = vpop.f32.mrf.mxu0
        %v1373 = vadd.f32 0.0, %v1372
        %v1374 = vpop.f32.mrf.mxu0
        %v1375 = vadd.f32 0.0, %v1374
        %1376 = vdwg.mxu0
        %1377 = vmatpush.bf16.msra.mxu0 %v1327
        %1378 = vmatpush.bf16.msra.mxu0 %v1326
        %1379 = vmatpush.bf16.msra.mxu0 %v1325
        %1380 = vmatpush.bf16.msra.mxu0 %v1324
        %1381 = vmatpush.bf16.msra.mxu0 %v1323
        %1382 = vmatpush.bf16.msra.mxu0 %v1322
        %1383 = vmatpush.bf16.msra.mxu0 %v1321
        %1384 = vmatpush.bf16.msra.mxu0 %v1320
        %1385 = vmatmul.bf16.gmra.mxu0 %v1297
        %v1386 = vpop.f32.mrf.mxu0
        %v1387 = vadd.f32 %v1338, %v1386
        %v1388 = vpop.f32.mrf.mxu0
        %v1389 = vadd.f32 %v1340, %v1388
        %1390 = vmatmul.bf16.gmra.mxu0 %v1299
        %v1391 = vpop.f32.mrf.mxu0
        %v1392 = vadd.f32 %v1343, %v1391
        %v1393 = vpop.f32.mrf.mxu0
        %v1394 = vadd.f32 %v1345, %v1393
        %1395 = vmatmul.bf16.gmra.mxu0 %v1301
        %v1396 = vpop.f32.mrf.mxu0
        %v1397 = vadd.f32 %v1348, %v1396
        %v1398 = vpop.f32.mrf.mxu0
        %v1399 = vadd.f32 %v1350, %v1398
        %1400 = vmatmul.bf16.gmra.mxu0 %v1303
        %v1401 = vpop.f32.mrf.mxu0
        %v1402 = vadd.f32 %v1353, %v1401
        %v1403 = vpop.f32.mrf.mxu0
        %v1404 = vadd.f32 %v1355, %v1403
        %1405 = vmatmul.bf16.gmra.mxu0 %v1305
        %v1406 = vpop.f32.mrf.mxu0
        %v1407 = vadd.f32 %v1358, %v1406
        %v1408 = vpop.f32.mrf.mxu0
        %v1409 = vadd.f32 %v1360, %v1408
        %1410 = vmatmul.bf16.gmra.mxu0 %v1307
        %v1411 = vpop.f32.mrf.mxu0
        %v1412 = vadd.f32 %v1363, %v1411
        %v1413 = vpop.f32.mrf.mxu0
        %v1414 = vadd.f32 %v1365, %v1413
        %1415 = vmatmul.bf16.gmra.mxu0 %v1309
        %v1416 = vpop.f32.mrf.mxu0
        %v1417 = vadd.f32 %v1368, %v1416
        %v1418 = vpop.f32.mrf.mxu0
        %v1419 = vadd.f32 %v1370, %v1418
        %1420 = vmatmul.bf16.gmra.mxu0 %v1311
        %v1421 = vpop.f32.mrf.mxu0
        %v1422 = vadd.f32 %v1373, %v1421
        %v1423 = vpop.f32.mrf.mxu0
        %v1424 = vadd.f32 %v1375, %v1423
        %1425 = vdwg.mxu0
        %v1426 = vrcp.pop %v1280
        %v1427 = vrcp.pop %v1281
        %v1428 = vrcp.pop %v1282
        %v1429 = vrcp.pop %v1283
        %v1430 = vrcp.pop %v1284
        %v1431 = vrcp.pop %v1285
        %v1432 = vrcp.pop %v1286
        %v1433 = vrcp.pop %v1287
        %v1434 = vrcp.pop %v1288
        %v1435 = vrcp.pop %v1289
        %v1436 = vrcp.pop %v1290
        %v1437 = vrcp.pop %v1291
        %v1438 = vrcp.pop %v1292
        %v1439 = vrcp.pop %v1293
        %v1440 = vrcp.pop %v1294
        %v1441 = vrcp.pop %v1295
        %v1442 = vmul.f32 %v1280, %v1426
        %v1443 = vmul.f32 %v1281, %v1427
        %v1444 = vmul.f32 %v1282, %v1428
        %v1445 = vmul.f32 %v1283, %v1429
        %v1446 = vmul.f32 %v1284, %v1430
        %v1447 = vmul.f32 %v1285, %v1431
        %v1448 = vmul.f32 %v1286, %v1432
        %v1449 = vmul.f32 %v1287, %v1433
        %v1450 = vmul.f32 %v1288, %v1434
        %v1451 = vmul.f32 %v1289, %v1435
        %v1452 = vmul.f32 %v1290, %v1436
        %v1453 = vmul.f32 %v1291, %v1437
        %v1454 = vmul.f32 %v1292, %v1438
        %v1455 = vmul.f32 %v1293, %v1439
        %v1456 = vmul.f32 %v1294, %v1440
        %v1457 = vmul.f32 %v1295, %v1441
        %v1458 = vsub.f32 2.0, %v1442
        %v1459 = vsub.f32 2.0, %v1443
        %v1460 = vsub.f32 2.0, %v1444
        %v1461 = vsub.f32 2.0, %v1445
        %v1462 = vsub.f32 2.0, %v1446
        %v1463 = vsub.f32 2.0, %v1447
        %v1464 = vsub.f32 2.0, %v1448
        %v1465 = vsub.f32 2.0, %v1449
        %v1466 = vsub.f32 2.0, %v1450
        %v1467 = vsub.f32 2.0, %v1451
        %v1468 = vsub.f32 2.0, %v1452
        %v1469 = vsub.f32 2.0, %v1453
        %v1470 = vsub.f32 2.0, %v1454
        %v1471 = vsub.f32 2.0, %v1455
        %v1472 = vsub.f32 2.0, %v1456
        %v1473 = vsub.f32 2.0, %v1457
        %v1474 = vmul.f32 %v1426, %v1458
        %v1475 = vmul.f32 %v1427, %v1459
        %v1476 = vmul.f32 %v1428, %v1460
        %v1477 = vmul.f32 %v1429, %v1461
        %v1478 = vmul.f32 %v1430, %v1462
        %v1479 = vmul.f32 %v1431, %v1463
        %v1480 = vmul.f32 %v1432, %v1464
        %v1481 = vmul.f32 %v1433, %v1465
        %v1482 = vmul.f32 %v1434, %v1466
        %v1483 = vmul.f32 %v1435, %v1467
        %v1484 = vmul.f32 %v1436, %v1468
        %v1485 = vmul.f32 %v1437, %v1469
        %v1486 = vmul.f32 %v1438, %v1470
        %v1487 = vmul.f32 %v1439, %v1471
        %v1488 = vmul.f32 %v1440, %v1472
        %v1489 = vmul.f32 %v1441, %v1473
        %v1490 = vmul.f32 %v1387, %v1474
        %v1491 = vmul.f32 %v1389, %v1475
        %v1492 = vmul.f32 %v1392, %v1476
        %v1493 = vmul.f32 %v1394, %v1477
        %v1494 = vmul.f32 %v1397, %v1478
        %v1495 = vmul.f32 %v1399, %v1479
        %v1496 = vmul.f32 %v1402, %v1480
        %v1497 = vmul.f32 %v1404, %v1481
        %v1498 = vmul.f32 %v1407, %v1482
        %v1499 = vmul.f32 %v1409, %v1483
        %v1500 = vmul.f32 %v1412, %v1484
        %v1501 = vmul.f32 %v1414, %v1485
        %v1502 = vmul.f32 %v1417, %v1486
        %v1503 = vmul.f32 %v1419, %v1487
        %v1504 = vmul.f32 %v1422, %v1488
        %v1505 = vmul.f32 %v1424, %v1489
        %vm1506 = vcmp.gt.f32.partialorder %v1490, 0.0
        %vm1507 = vcmp.gt.f32.partialorder %v1491, 0.0
        %vm1508 = vcmp.gt.f32.partialorder %v1492, 0.0
        %vm1509 = vcmp.gt.f32.partialorder %v1493, 0.0
        %vm1510 = vcmp.gt.f32.partialorder %v1494, 0.0
        %vm1511 = vcmp.gt.f32.partialorder %v1495, 0.0
        %vm1512 = vcmp.gt.f32.partialorder %v1496, 0.0
        %vm1513 = vcmp.gt.f32.partialorder %v1497, 0.0
        %vm1514 = vcmp.gt.f32.partialorder %v1498, 0.0
        %vm1515 = vcmp.gt.f32.partialorder %v1499, 0.0
        %vm1516 = vcmp.gt.f32.partialorder %v1500, 0.0
        %vm1517 = vcmp.gt.f32.partialorder %v1501, 0.0
        %vm1518 = vcmp.gt.f32.partialorder %v1502, 0.0
        %vm1519 = vcmp.gt.f32.partialorder %v1503, 0.0
        %vm1520 = vcmp.gt.f32.partialorder %v1504, 0.0
        %vm1521 = vcmp.gt.f32.partialorder %v1505, 0.0
        %v1522 = vmin.f32 %v1490, 0.0
        %v1523 = vmin.f32 %v1491, 0.0
        %v1524 = vmin.f32 %v1492, 0.0
        %v1525 = vmin.f32 %v1493, 0.0
        %v1526 = vmin.f32 %v1494, 0.0
        %v1527 = vmin.f32 %v1495, 0.0
        %v1528 = vmin.f32 %v1496, 0.0
        %v1529 = vmin.f32 %v1497, 0.0
        %v1530 = vmin.f32 %v1498, 0.0
        %v1531 = vmin.f32 %v1499, 0.0
        %v1532 = vmin.f32 %v1500, 0.0
        %v1533 = vmin.f32 %v1501, 0.0
        %v1534 = vmin.f32 %v1502, 0.0
        %v1535 = vmin.f32 %v1503, 0.0
        %v1536 = vmin.f32 %v1504, 0.0
        %v1537 = vmin.f32 %v1505, 0.0
        %v1538 = vmul.f32 %v1522, 1.442695
        %v1539 = vpow.pop %v1538
        %v1540 = vmul.f32 %v1523, 1.442695
        %v1541 = vpow.pop %v1540
        %v1542 = vmul.f32 %v1524, 1.442695
        %v1543 = vpow.pop %v1542
        %v1544 = vmul.f32 %v1525, 1.442695
        %v1545 = vpow.pop %v1544
        %v1546 = vmul.f32 %v1526, 1.442695
        %v1547 = vpow.pop %v1546
        %v1548 = vmul.f32 %v1527, 1.442695
        %v1549 = vpow.pop %v1548
        %v1550 = vmul.f32 %v1528, 1.442695
        %v1551 = vpow.pop %v1550
        %v1552 = vmul.f32 %v1529, 1.442695
        %v1553 = vpow.pop %v1552
        %v1554 = vmul.f32 %v1530, 1.442695
        %v1555 = vpow.pop %v1554
        %v1556 = vmul.f32 %v1531, 1.442695
        %v1557 = vpow.pop %v1556
        %v1558 = vmul.f32 %v1532, 1.442695
        %v1559 = vpow.pop %v1558
        %v1560 = vmul.f32 %v1533, 1.442695
        %v1561 = vpow.pop %v1560
        %v1562 = vmul.f32 %v1534, 1.442695
        %v1563 = vpow.pop %v1562
        %v1564 = vmul.f32 %v1535, 1.442695
        %v1565 = vpow.pop %v1564
        %v1566 = vmul.f32 %v1536, 1.442695
        %v1567 = vpow.pop %v1566
        %v1568 = vmul.f32 %v1537, 1.442695
        %v1569 = vpow.pop %v1568
        %v1570 = vsub.f32 %v1539, 1.0
        %v1571 = vsub.f32 %v1541, 1.0
        %v1572 = vsub.f32 %v1543, 1.0
        %v1573 = vsub.f32 %v1545, 1.0
        %v1574 = vsub.f32 %v1547, 1.0
        %v1575 = vsub.f32 %v1549, 1.0
        %v1576 = vsub.f32 %v1551, 1.0
        %v1577 = vsub.f32 %v1553, 1.0
        %v1578 = vsub.f32 %v1555, 1.0
        %v1579 = vsub.f32 %v1557, 1.0
        %v1580 = vsub.f32 %v1559, 1.0
        %v1581 = vsub.f32 %v1561, 1.0
        %v1582 = vsub.f32 %v1563, 1.0
        %v1583 = vsub.f32 %v1565, 1.0
        %v1584 = vsub.f32 %v1567, 1.0
        %v1585 = vsub.f32 %v1569, 1.0
        %v1586 = vsel %vm1506, %v1490, %v1570
        %v1587 = vsel %vm1507, %v1491, %v1571
        %v1588 = vsel %vm1508, %v1492, %v1572
        %v1589 = vsel %vm1509, %v1493, %v1573
        %v1590 = vsel %vm1510, %v1494, %v1574
        %v1591 = vsel %vm1511, %v1495, %v1575
        %v1592 = vsel %vm1512, %v1496, %v1576
        %v1593 = vsel %vm1513, %v1497, %v1577
        %v1594 = vsel %vm1514, %v1498, %v1578
        %v1595 = vsel %vm1515, %v1499, %v1579
        %v1596 = vsel %vm1516, %v1500, %v1580
        %v1597 = vsel %vm1517, %v1501, %v1581
        %v1598 = vsel %vm1518, %v1502, %v1582
        %v1599 = vsel %vm1519, %v1503, %v1583
        %v1600 = vsel %vm1520, %v1504, %v1584
        %v1601 = vsel %vm1521, %v1505, %v1585
        %1602 = vst.msk [vmem:[%s259] sm:$0xff] %vm483, %v1586
        %1603 = vst.msk [vmem:[%s259 + $0x8] sm:$0xff] %vm483, %v1587
        %1604 = vst.msk [vmem:[%s259 + $0x10] sm:$0xff] %vm483, %v1588
        %1605 = vst.msk [vmem:[%s259 + $0x18] sm:$0xff] %vm483, %v1589
        %1606 = vst.msk [vmem:[%s259 + $0x20] sm:$0xff] %vm483, %v1590
        %1607 = vst.msk [vmem:[%s259 + $0x28] sm:$0xff] %vm483, %v1591
        %1608 = vst.msk [vmem:[%s259 + $0x30] sm:$0xff] %vm483, %v1592
        %1609 = vst.msk [vmem:[%s259 + $0x38] sm:$0xff] %vm483, %v1593
        %1610 = vst.msk [vmem:[%s259 + $0x40] sm:$0xff] %vm483, %v1594
        %1611 = vst.msk [vmem:[%s259 + $0x48] sm:$0xff] %vm483, %v1595
        %1612 = vst.msk [vmem:[%s259 + $0x50] sm:$0xff] %vm483, %v1596
        %1613 = vst.msk [vmem:[%s259 + $0x58] sm:$0xff] %vm483, %v1597
        %1614 = vst.msk [vmem:[%s259 + $0x60] sm:$0xff] %vm483, %v1598
        %1615 = vst.msk [vmem:[%s259 + $0x68] sm:$0xff] %vm483, %v1599
        %1616 = vst.msk [vmem:[%s259 + $0x70] sm:$0xff] %vm483, %v1600
        %1617 = vst.msk [vmem:[%s259 + $0x78] sm:$0xff] %vm483, %v1601
        %s1618 = scalar_lea.vmem %s3, 8
        %v1619 = vld [vmem:[%s1618] sm:$0xf]
        %v1620 = vld [vmem:[%s1618 + $0x4] sm:$0xf]
        %v1623 = vunpack.c.l.b16 %v1619
        %v1624 = vunpack.c.l.b16 %v1620
        %v1625 = vpack.c.b16 %v1624, %v1623
        %1627 = vmatpush.bf16.msra.mxu0 0
        %1628 = vmatpush.bf16.msra.mxu0 0
        %1629 = vmatpush.bf16.msra.mxu0 0
        %1630 = vmatpush.bf16.msra.mxu0 0
        %1631 = vmatpush.bf16.msra.mxu0 0
        %1632 = vmatpush.bf16.msra.mxu0 0
        %1633 = vmatpush.bf16.msra.mxu0 0
        %1634 = vmatpush.bf16.msra.mxu0 %v1625
        %1635 = vmatmul.bf16.gmra.mxu0 %v485
        %v1636 = vpop.f32.mrf.mxu0
        %v1637 = vadd.f32 0.0, %v1636
        %v1638 = vpop.f32.mrf.mxu0
        %v1639 = vadd.f32 0.0, %v1638
        %1640 = vmatmul.bf16.gmra.mxu0 %v488
        %v1641 = vpop.f32.mrf.mxu0
        %v1642 = vadd.f32 0.0, %v1641
        %v1643 = vpop.f32.mrf.mxu0
        %v1644 = vadd.f32 0.0, %v1643
        %1645 = vmatmul.bf16.gmra.mxu0 %v491
        %v1646 = vpop.f32.mrf.mxu0
        %v1647 = vadd.f32 0.0, %v1646
        %v1648 = vpop.f32.mrf.mxu0
        %v1649 = vadd.f32 0.0, %v1648
        %1650 = vmatmul.bf16.gmra.mxu0 %v494
        %v1651 = vpop.f32.mrf.mxu0
        %v1652 = vadd.f32 0.0, %v1651
        %v1653 = vpop.f32.mrf.mxu0
        %v1654 = vadd.f32 0.0, %v1653
        %1655 = vmatmul.bf16.gmra.mxu0 %v497
        %v1656 = vpop.f32.mrf.mxu0
        %v1657 = vadd.f32 0.0, %v1656
        %v1658 = vpop.f32.mrf.mxu0
        %v1659 = vadd.f32 0.0, %v1658
        %1660 = vmatmul.bf16.gmra.mxu0 %v500
        %v1661 = vpop.f32.mrf.mxu0
        %v1662 = vadd.f32 0.0, %v1661
        %v1663 = vpop.f32.mrf.mxu0
        %v1664 = vadd.f32 0.0, %v1663
        %1665 = vmatmul.bf16.gmra.mxu0 %v503
        %v1666 = vpop.f32.mrf.mxu0
        %v1667 = vadd.f32 0.0, %v1666
        %v1668 = vpop.f32.mrf.mxu0
        %v1669 = vadd.f32 0.0, %v1668
        %1670 = vmatmul.bf16.gmra.mxu0 %v506
        %v1671 = vpop.f32.mrf.mxu0
        %v1672 = vadd.f32 0.0, %v1671
        %v1673 = vpop.f32.mrf.mxu0
        %v1674 = vadd.f32 0.0, %v1673
        %1675 = vmatmul.bf16.gmra.mxu0 %v509
        %v1676 = vpop.f32.mrf.mxu0
        %v1677 = vadd.f32 0.0, %v1676
        %v1678 = vpop.f32.mrf.mxu0
        %v1679 = vadd.f32 0.0, %v1678
        %1680 = vmatmul.bf16.gmra.mxu0 %v512
        %v1681 = vpop.f32.mrf.mxu0
        %v1682 = vadd.f32 0.0, %v1681
        %v1683 = vpop.f32.mrf.mxu0
        %v1684 = vadd.f32 0.0, %v1683
        %1685 = vmatmul.bf16.gmra.mxu0 %v515
        %v1686 = vpop.f32.mrf.mxu0
        %v1687 = vadd.f32 0.0, %v1686
        %v1688 = vpop.f32.mrf.mxu0
        %v1689 = vadd.f32 0.0, %v1688
        %1690 = vmatmul.bf16.gmra.mxu0 %v518
        %v1691 = vpop.f32.mrf.mxu0
        %v1692 = vadd.f32 0.0, %v1691
        %v1693 = vpop.f32.mrf.mxu0
        %v1694 = vadd.f32 0.0, %v1693
        %1695 = vmatmul.bf16.gmra.mxu0 %v521
        %v1696 = vpop.f32.mrf.mxu0
        %v1697 = vadd.f32 0.0, %v1696
        %v1698 = vpop.f32.mrf.mxu0
        %v1699 = vadd.f32 0.0, %v1698
        %1700 = vmatmul.bf16.gmra.mxu0 %v524
        %v1701 = vpop.f32.mrf.mxu0
        %v1702 = vadd.f32 0.0, %v1701
        %v1703 = vpop.f32.mrf.mxu0
        %v1704 = vadd.f32 0.0, %v1703
        %1705 = vmatmul.bf16.gmra.mxu0 %v527
        %v1706 = vpop.f32.mrf.mxu0
        %v1707 = vadd.f32 0.0, %v1706
        %v1708 = vpop.f32.mrf.mxu0
        %v1709 = vadd.f32 0.0, %v1708
        %1710 = vmatmul.bf16.gmra.mxu0 %v530
        %v1711 = vpop.f32.mrf.mxu0
        %v1712 = vadd.f32 0.0, %v1711
        %v1713 = vpop.f32.mrf.mxu0
        %v1714 = vadd.f32 0.0, %v1713
        %1715 = vdwg.mxu0
        %1716 = vmatpush.bf16.msra.mxu0 0
        %1717 = vmatpush.bf16.msra.mxu0 0
        %1718 = vmatpush.bf16.msra.mxu0 0
        %1719 = vmatpush.bf16.msra.mxu0 0
        %1720 = vmatpush.bf16.msra.mxu0 0
        %1721 = vmatpush.bf16.msra.mxu0 0
        %1722 = vmatpush.bf16.msra.mxu0 0
        %1723 = vmatpush.bf16.msra.mxu0 %v1625
        %1724 = vmatmul.bf16.gmra.mxu0 %v662
        %v1725 = vpop.f32.mrf.mxu0
        %v1726 = vadd.f32 0.0, %v1725
        %v1727 = vpop.f32.mrf.mxu0
        %v1728 = vadd.f32 0.0, %v1727
        %1729 = vmatmul.bf16.gmra.mxu0 %v665
        %v1730 = vpop.f32.mrf.mxu0
        %v1731 = vadd.f32 0.0, %v1730
        %v1732 = vpop.f32.mrf.mxu0
        %v1733 = vadd.f32 0.0, %v1732
        %1734 = vmatmul.bf16.gmra.mxu0 %v668
        %v1735 = vpop.f32.mrf.mxu0
        %v1736 = vadd.f32 0.0, %v1735
        %v1737 = vpop.f32.mrf.mxu0
        %v1738 = vadd.f32 0.0, %v1737
        %1739 = vmatmul.bf16.gmra.mxu0 %v671
        %v1740 = vpop.f32.mrf.mxu0
        %v1741 = vadd.f32 0.0, %v1740
        %v1742 = vpop.f32.mrf.mxu0
        %v1743 = vadd.f32 0.0, %v1742
        %1744 = vmatmul.bf16.gmra.mxu0 %v674
        %v1745 = vpop.f32.mrf.mxu0
        %v1746 = vadd.f32 0.0, %v1745
        %v1747 = vpop.f32.mrf.mxu0
        %v1748 = vadd.f32 0.0, %v1747
        %1749 = vmatmul.bf16.gmra.mxu0 %v677
        %v1750 = vpop.f32.mrf.mxu0
        %v1751 = vadd.f32 0.0, %v1750
        %v1752 = vpop.f32.mrf.mxu0
        %v1753 = vadd.f32 0.0, %v1752
        %1754 = vmatmul.bf16.gmra.mxu0 %v680
        %v1755 = vpop.f32.mrf.mxu0
        %v1756 = vadd.f32 0.0, %v1755
        %v1757 = vpop.f32.mrf.mxu0
        %v1758 = vadd.f32 0.0, %v1757
        %1759 = vmatmul.bf16.gmra.mxu0 %v683
        %v1760 = vpop.f32.mrf.mxu0
        %v1761 = vadd.f32 0.0, %v1760
        %v1762 = vpop.f32.mrf.mxu0
        %v1763 = vadd.f32 0.0, %v1762
        %1764 = vdwg.mxu0
        %s1765 = scalar_lea.vmem %s4, 1
        %v1766 = vld [vmem:[%s1765] sm:$0x1]
        %s1767 = scalar_lea.vmem %s5, 1
        %v1768 = vld [vmem:[%s1767] sm:$0x1]
        %v1770 = vperm.slane %v1766, 0
        %v1772 = vmul.f32 %v1726, %v1770
        %v1773 = vmul.f32 %v1728, %v1770
        %v1774 = vmul.f32 %v1731, %v1770
        %v1775 = vmul.f32 %v1733, %v1770
        %v1776 = vmul.f32 %v1736, %v1770
        %v1777 = vmul.f32 %v1738, %v1770
        %v1778 = vmul.f32 %v1741, %v1770
        %v1779 = vmul.f32 %v1743, %v1770
        %v1780 = vmul.f32 %v1746, %v1770
        %v1781 = vmul.f32 %v1748, %v1770
        %v1782 = vmul.f32 %v1751, %v1770
        %v1783 = vmul.f32 %v1753, %v1770
        %v1784 = vmul.f32 %v1756, %v1770
        %v1785 = vmul.f32 %v1758, %v1770
        %v1786 = vmul.f32 %v1761, %v1770
        %v1787 = vmul.f32 %v1763, %v1770
        %v1788 = vsel %vm483, %v1772, 0.0
        %1789 = vadd.xlane.f32.xlu0 %v1788
        %v1790 = vpop.xlane.xlu0 %1789
        %v1791 = vsel %vm483, %v1773, 0.0
        %1792 = vadd.xlane.f32.xlu0 %v1791
        %v1793 = vpop.xlane.xlu0 %1792
        %v1794 = vsel %vm483, %v1774, 0.0
        %1795 = vadd.xlane.f32.xlu0 %v1794
        %v1796 = vpop.xlane.xlu0 %1795
        %v1797 = vsel %vm483, %v1775, 0.0
        %1798 = vadd.xlane.f32.xlu0 %v1797
        %v1799 = vpop.xlane.xlu0 %1798
        %v1800 = vsel %vm483, %v1776, 0.0
        %1801 = vadd.xlane.f32.xlu0 %v1800
        %v1802 = vpop.xlane.xlu0 %1801
        %v1803 = vsel %vm483, %v1777, 0.0
        %1804 = vadd.xlane.f32.xlu0 %v1803
        %v1805 = vpop.xlane.xlu0 %1804
        %v1806 = vsel %vm483, %v1778, 0.0
        %1807 = vadd.xlane.f32.xlu0 %v1806
        %v1808 = vpop.xlane.xlu0 %1807
        %v1809 = vsel %vm483, %v1779, 0.0
        %1810 = vadd.xlane.f32.xlu0 %v1809
        %v1811 = vpop.xlane.xlu0 %1810
        %v1812 = vsel %vm483, %v1780, 0.0
        %1813 = vadd.xlane.f32.xlu0 %v1812
        %v1814 = vpop.xlane.xlu0 %1813
        %v1815 = vsel %vm483, %v1781, 0.0
        %1816 = vadd.xlane.f32.xlu0 %v1815
        %v1817 = vpop.xlane.xlu0 %1816
        %v1818 = vsel %vm483, %v1782, 0.0
        %1819 = vadd.xlane.f32.xlu0 %v1818
        %v1820 = vpop.xlane.xlu0 %1819
        %v1821 = vsel %vm483, %v1783, 0.0
        %1822 = vadd.xlane.f32.xlu0 %v1821
        %v1823 = vpop.xlane.xlu0 %1822
        %v1824 = vsel %vm483, %v1784, 0.0
        %1825 = vadd.xlane.f32.xlu0 %v1824
        %v1826 = vpop.xlane.xlu0 %1825
        %v1827 = vsel %vm483, %v1785, 0.0
        %1828 = vadd.xlane.f32.xlu0 %v1827
        %v1829 = vpop.xlane.xlu0 %1828
        %v1830 = vsel %vm483, %v1786, 0.0
        %1831 = vadd.xlane.f32.xlu0 %v1830
        %v1832 = vpop.xlane.xlu0 %1831
        %v1833 = vsel %vm483, %v1787, 0.0
        %1834 = vadd.xlane.f32.xlu0 %v1833
        %v1835 = vpop.xlane.xlu0 %1834
        %v1837 = vsel %vm483, %v1768, 0
        %v1840 = vsel %vm483, %v1637, 0
        %v1843 = vsel %vm483, %v1639, 0
        %v1846 = vsel %vm483, %v1642, 0
        %v1849 = vsel %vm483, %v1644, 0
        %v1852 = vsel %vm483, %v1647, 0
        %v1855 = vsel %vm483, %v1649, 0
        %v1858 = vsel %vm483, %v1652, 0
        %v1861 = vsel %vm483, %v1654, 0
        %v1864 = vsel %vm483, %v1657, 0
        %v1867 = vsel %vm483, %v1659, 0
        %v1870 = vsel %vm483, %v1662, 0
        %v1873 = vsel %vm483, %v1664, 0
        %v1876 = vsel %vm483, %v1667, 0
        %v1879 = vsel %vm483, %v1669, 0
        %v1882 = vsel %vm483, %v1672, 0
        %v1885 = vsel %vm483, %v1674, 0
        %v1888 = vsel %vm483, %v1677, 0
        %v1891 = vsel %vm483, %v1679, 0
        %v1894 = vsel %vm483, %v1682, 0
        %v1897 = vsel %vm483, %v1684, 0
        %v1900 = vsel %vm483, %v1687, 0
        %v1903 = vsel %vm483, %v1689, 0
        %v1906 = vsel %vm483, %v1692, 0
        %v1909 = vsel %vm483, %v1694, 0
        %v1912 = vsel %vm483, %v1697, 0
        %v1915 = vsel %vm483, %v1699, 0
        %v1918 = vsel %vm483, %v1702, 0
        %v1921 = vsel %vm483, %v1704, 0
        %v1924 = vsel %vm483, %v1707, 0
        %v1927 = vsel %vm483, %v1709, 0
        %v1930 = vsel %vm483, %v1712, 0
        %v1933 = vsel %vm483, %v1714, 0
        %1935 = vmatpush.xpose.msra.mxu0 %v1885
        %1936 = vmatpush.xpose.msra.mxu0 %v1882
        %1937 = vmatpush.xpose.msra.mxu0 %v1879
        %1938 = vmatpush.xpose.msra.mxu0 %v1876
        %1939 = vmatpush.xpose.msra.mxu0 %v1873
        %1940 = vmatpush.xpose.msra.mxu0 %v1870
        %1941 = vmatpush.xpose.msra.mxu0 %v1867
        %1942 = vmatpush.xpose.msra.mxu0 %v1864
        %1943 = vmatpush.xpose.msra.mxu0 %v1861
        %1944 = vmatpush.xpose.msra.mxu0 %v1858
        %1945 = vmatpush.xpose.msra.mxu0 %v1855
        %1946 = vmatpush.xpose.msra.mxu0 %v1852
        %1947 = vmatpush.xpose.msra.mxu0 %v1849
        %1948 = vmatpush.xpose.msra.mxu0 %v1846
        %1949 = vmatpush.xpose.msra.mxu0 %v1843
        %1950 = vmatpush.xpose.msra.mxu0 %v1840
        %1951 = vmatmul.f32.gmra.mxu0 %v1837
        %v1952 = vpop.f32.mrf.mxu0
        %v1953 = vadd.f32 0.0, %v1952
        %1954 = vdwg.mxu0
        %1955 = vmatpush.xpose.msra.mxu0 %v1933
        %1956 = vmatpush.xpose.msra.mxu0 %v1930
        %1957 = vmatpush.xpose.msra.mxu0 %v1927
        %1958 = vmatpush.xpose.msra.mxu0 %v1924
        %1959 = vmatpush.xpose.msra.mxu0 %v1921
        %1960 = vmatpush.xpose.msra.mxu0 %v1918
        %1961 = vmatpush.xpose.msra.mxu0 %v1915
        %1962 = vmatpush.xpose.msra.mxu0 %v1912
        %1963 = vmatpush.xpose.msra.mxu0 %v1909
        %1964 = vmatpush.xpose.msra.mxu0 %v1906
        %1965 = vmatpush.xpose.msra.mxu0 %v1903
        %1966 = vmatpush.xpose.msra.mxu0 %v1900
        %1967 = vmatpush.xpose.msra.mxu0 %v1897
        %1968 = vmatpush.xpose.msra.mxu0 %v1894
        %1969 = vmatpush.xpose.msra.mxu0 %v1891
        %1970 = vmatpush.xpose.msra.mxu0 %v1888
        %1971 = vmatmul.f32.gmra.mxu0 %v1837
        %v1972 = vpop.f32.mrf.mxu0
        %v1973 = vadd.f32 0.0, %v1972
        %1974 = vdwg.mxu0
        %v1975 = vperm.slane %v1953, 0
        %v1976 = vperm.slane %v1973, 0
        %v1977 = vadd.f32 %v1790, %v1975
        %v1978 = vadd.f32 %v1790, %v1976
        %v1979 = vadd.f32 %v1793, %v1975
        %v1980 = vadd.f32 %v1793, %v1976
        %v1981 = vadd.f32 %v1796, %v1975
        %v1982 = vadd.f32 %v1796, %v1976
        %v1983 = vadd.f32 %v1799, %v1975
        %v1984 = vadd.f32 %v1799, %v1976
        %v1985 = vadd.f32 %v1802, %v1975
        %v1986 = vadd.f32 %v1802, %v1976
        %v1987 = vadd.f32 %v1805, %v1975
        %v1988 = vadd.f32 %v1805, %v1976
        %v1989 = vadd.f32 %v1808, %v1975
        %v1990 = vadd.f32 %v1808, %v1976
        %v1991 = vadd.f32 %v1811, %v1975
        %v1992 = vadd.f32 %v1811, %v1976
        %v1993 = vadd.f32 %v1814, %v1975
        %v1994 = vadd.f32 %v1814, %v1976
        %v1995 = vadd.f32 %v1817, %v1975
        %v1996 = vadd.f32 %v1817, %v1976
        %v1997 = vadd.f32 %v1820, %v1975
        %v1998 = vadd.f32 %v1820, %v1976
        %v1999 = vadd.f32 %v1823, %v1975
        %v2000 = vadd.f32 %v1823, %v1976
        %v2001 = vadd.f32 %v1826, %v1975
        %v2002 = vadd.f32 %v1826, %v1976
        %v2003 = vadd.f32 %v1829, %v1975
        %v2004 = vadd.f32 %v1829, %v1976
        %v2005 = vadd.f32 %v1832, %v1975
        %v2006 = vadd.f32 %v1832, %v1976
        %v2007 = vadd.f32 %v1835, %v1975
        %v2008 = vadd.f32 %v1835, %v1976
        %vm2009 = vcmp.gt.f32.partialorder %v1977, 0.0
        %vm2010 = vcmp.gt.f32.partialorder %v1978, 0.0
        %vm2011 = vcmp.gt.f32.partialorder %v1979, 0.0
        %vm2012 = vcmp.gt.f32.partialorder %v1980, 0.0
        %vm2013 = vcmp.gt.f32.partialorder %v1981, 0.0
        %vm2014 = vcmp.gt.f32.partialorder %v1982, 0.0
        %vm2015 = vcmp.gt.f32.partialorder %v1983, 0.0
        %vm2016 = vcmp.gt.f32.partialorder %v1984, 0.0
        %vm2017 = vcmp.gt.f32.partialorder %v1985, 0.0
        %vm2018 = vcmp.gt.f32.partialorder %v1986, 0.0
        %vm2019 = vcmp.gt.f32.partialorder %v1987, 0.0
        %vm2020 = vcmp.gt.f32.partialorder %v1988, 0.0
        %vm2021 = vcmp.gt.f32.partialorder %v1989, 0.0
        %vm2022 = vcmp.gt.f32.partialorder %v1990, 0.0
        %vm2023 = vcmp.gt.f32.partialorder %v1991, 0.0
        %vm2024 = vcmp.gt.f32.partialorder %v1992, 0.0
        %vm2025 = vcmp.gt.f32.partialorder %v1993, 0.0
        %vm2026 = vcmp.gt.f32.partialorder %v1994, 0.0
        %vm2027 = vcmp.gt.f32.partialorder %v1995, 0.0
        %vm2028 = vcmp.gt.f32.partialorder %v1996, 0.0
        %vm2029 = vcmp.gt.f32.partialorder %v1997, 0.0
        %vm2030 = vcmp.gt.f32.partialorder %v1998, 0.0
        %vm2031 = vcmp.gt.f32.partialorder %v1999, 0.0
        %vm2032 = vcmp.gt.f32.partialorder %v2000, 0.0
        %vm2033 = vcmp.gt.f32.partialorder %v2001, 0.0
        %vm2034 = vcmp.gt.f32.partialorder %v2002, 0.0
        %vm2035 = vcmp.gt.f32.partialorder %v2003, 0.0
        %vm2036 = vcmp.gt.f32.partialorder %v2004, 0.0
        %vm2037 = vcmp.gt.f32.partialorder %v2005, 0.0
        %vm2038 = vcmp.gt.f32.partialorder %v2006, 0.0
        %vm2039 = vcmp.gt.f32.partialorder %v2007, 0.0
        %vm2040 = vcmp.gt.f32.partialorder %v2008, 0.0
        %v2041 = vmul.f32 %v1977, 0.2
        %v2042 = vmul.f32 %v1978, 0.2
        %v2043 = vmul.f32 %v1979, 0.2
        %v2044 = vmul.f32 %v1980, 0.2
        %v2045 = vmul.f32 %v1981, 0.2
        %v2046 = vmul.f32 %v1982, 0.2
        %v2047 = vmul.f32 %v1983, 0.2
        %v2048 = vmul.f32 %v1984, 0.2
        %v2049 = vmul.f32 %v1985, 0.2
        %v2050 = vmul.f32 %v1986, 0.2
        %v2051 = vmul.f32 %v1987, 0.2
        %v2052 = vmul.f32 %v1988, 0.2
        %v2053 = vmul.f32 %v1989, 0.2
        %v2054 = vmul.f32 %v1990, 0.2
        %v2055 = vmul.f32 %v1991, 0.2
        %v2056 = vmul.f32 %v1992, 0.2
        %v2057 = vmul.f32 %v1993, 0.2
        %v2058 = vmul.f32 %v1994, 0.2
        %v2059 = vmul.f32 %v1995, 0.2
        %v2060 = vmul.f32 %v1996, 0.2
        %v2061 = vmul.f32 %v1997, 0.2
        %v2062 = vmul.f32 %v1998, 0.2
        %v2063 = vmul.f32 %v1999, 0.2
        %v2064 = vmul.f32 %v2000, 0.2
        %v2065 = vmul.f32 %v2001, 0.2
        %v2066 = vmul.f32 %v2002, 0.2
        %v2067 = vmul.f32 %v2003, 0.2
        %v2068 = vmul.f32 %v2004, 0.2
        %v2069 = vmul.f32 %v2005, 0.2
        %v2070 = vmul.f32 %v2006, 0.2
        %v2071 = vmul.f32 %v2007, 0.2
        %v2072 = vmul.f32 %v2008, 0.2
        %v2073 = vsel %vm2009, %v1977, %v2041
        %v2074 = vsel %vm2010, %v1978, %v2042
        %v2075 = vsel %vm2011, %v1979, %v2043
        %v2076 = vsel %vm2012, %v1980, %v2044
        %v2077 = vsel %vm2013, %v1981, %v2045
        %v2078 = vsel %vm2014, %v1982, %v2046
        %v2079 = vsel %vm2015, %v1983, %v2047
        %v2080 = vsel %vm2016, %v1984, %v2048
        %v2081 = vsel %vm2017, %v1985, %v2049
        %v2082 = vsel %vm2018, %v1986, %v2050
        %v2083 = vsel %vm2019, %v1987, %v2051
        %v2084 = vsel %vm2020, %v1988, %v2052
        %v2085 = vsel %vm2021, %v1989, %v2053
        %v2086 = vsel %vm2022, %v1990, %v2054
        %v2087 = vsel %vm2023, %v1991, %v2055
        %v2088 = vsel %vm2024, %v1992, %v2056
        %v2089 = vsel %vm2025, %v1993, %v2057
        %v2090 = vsel %vm2026, %v1994, %v2058
        %v2091 = vsel %vm2027, %v1995, %v2059
        %v2092 = vsel %vm2028, %v1996, %v2060
        %v2093 = vsel %vm2029, %v1997, %v2061
        %v2094 = vsel %vm2030, %v1998, %v2062
        %v2095 = vsel %vm2031, %v1999, %v2063
        %v2096 = vsel %vm2032, %v2000, %v2064
        %v2097 = vsel %vm2033, %v2001, %v2065
        %v2098 = vsel %vm2034, %v2002, %v2066
        %v2099 = vsel %vm2035, %v2003, %v2067
        %v2100 = vsel %vm2036, %v2004, %v2068
        %v2101 = vsel %vm2037, %v2005, %v2069
        %v2102 = vsel %vm2038, %v2006, %v2070
        %v2103 = vsel %vm2039, %v2007, %v2071
        %v2104 = vsel %vm2040, %v2008, %v2072
        %v2105 = vsub.f32 0.0, %v2073
        %v2106 = vsub.f32 0.0, %v2074
        %v2107 = vsub.f32 0.0, %v2075
        %v2108 = vsub.f32 0.0, %v2076
        %v2109 = vsub.f32 0.0, %v2077
        %v2110 = vsub.f32 0.0, %v2078
        %v2111 = vsub.f32 0.0, %v2079
        %v2112 = vsub.f32 0.0, %v2080
        %v2113 = vsub.f32 0.0, %v2081
        %v2114 = vsub.f32 0.0, %v2082
        %v2115 = vsub.f32 0.0, %v2083
        %v2116 = vsub.f32 0.0, %v2084
        %v2117 = vsub.f32 0.0, %v2085
        %v2118 = vsub.f32 0.0, %v2086
        %v2119 = vsub.f32 0.0, %v2087
        %v2120 = vsub.f32 0.0, %v2088
        %v2121 = vsub.f32 0.0, %v2089
        %v2122 = vsub.f32 0.0, %v2090
        %v2123 = vsub.f32 0.0, %v2091
        %v2124 = vsub.f32 0.0, %v2092
        %v2125 = vsub.f32 0.0, %v2093
        %v2126 = vsub.f32 0.0, %v2094
        %v2127 = vsub.f32 0.0, %v2095
        %v2128 = vsub.f32 0.0, %v2096
        %v2129 = vsub.f32 0.0, %v2097
        %v2130 = vsub.f32 0.0, %v2098
        %v2131 = vsub.f32 0.0, %v2099
        %v2132 = vsub.f32 0.0, %v2100
        %v2133 = vsub.f32 0.0, %v2101
        %v2134 = vsub.f32 0.0, %v2102
        %v2135 = vsub.f32 0.0, %v2103
        %v2136 = vsub.f32 0.0, %v2104
        %v2137 = vmin.f32 %v2105, 60.0
        %v2138 = vmin.f32 %v2106, 60.0
        %v2139 = vmin.f32 %v2107, 60.0
        %v2140 = vmin.f32 %v2108, 60.0
        %v2141 = vmin.f32 %v2109, 60.0
        %v2142 = vmin.f32 %v2110, 60.0
        %v2143 = vmin.f32 %v2111, 60.0
        %v2144 = vmin.f32 %v2112, 60.0
        %v2145 = vmin.f32 %v2113, 60.0
        %v2146 = vmin.f32 %v2114, 60.0
        %v2147 = vmin.f32 %v2115, 60.0
        %v2148 = vmin.f32 %v2116, 60.0
        %v2149 = vmin.f32 %v2117, 60.0
        %v2150 = vmin.f32 %v2118, 60.0
        %v2151 = vmin.f32 %v2119, 60.0
        %v2152 = vmin.f32 %v2120, 60.0
        %v2153 = vmin.f32 %v2121, 60.0
        %v2154 = vmin.f32 %v2122, 60.0
        %v2155 = vmin.f32 %v2123, 60.0
        %v2156 = vmin.f32 %v2124, 60.0
        %v2157 = vmin.f32 %v2125, 60.0
        %v2158 = vmin.f32 %v2126, 60.0
        %v2159 = vmin.f32 %v2127, 60.0
        %v2160 = vmin.f32 %v2128, 60.0
        %v2161 = vmin.f32 %v2129, 60.0
        %v2162 = vmin.f32 %v2130, 60.0
        %v2163 = vmin.f32 %v2131, 60.0
        %v2164 = vmin.f32 %v2132, 60.0
        %v2165 = vmin.f32 %v2133, 60.0
        %v2166 = vmin.f32 %v2134, 60.0
        %v2167 = vmin.f32 %v2135, 60.0
        %v2168 = vmin.f32 %v2136, 60.0
        %v2169 = vmul.f32 %v2137, 1.442695
        %v2170 = vpow.pop %v2169
        %v2171 = vmul.f32 %v2138, 1.442695
        %v2172 = vpow.pop %v2171
        %v2173 = vmul.f32 %v2139, 1.442695
        %v2174 = vpow.pop %v2173
        %v2175 = vmul.f32 %v2140, 1.442695
        %v2176 = vpow.pop %v2175
        %v2177 = vmul.f32 %v2141, 1.442695
        %v2178 = vpow.pop %v2177
        %v2179 = vmul.f32 %v2142, 1.442695
        %v2180 = vpow.pop %v2179
        %v2181 = vmul.f32 %v2143, 1.442695
        %v2182 = vpow.pop %v2181
        %v2183 = vmul.f32 %v2144, 1.442695
        %v2184 = vpow.pop %v2183
        %v2185 = vmul.f32 %v2145, 1.442695
        %v2186 = vpow.pop %v2185
        %v2187 = vmul.f32 %v2146, 1.442695
        %v2188 = vpow.pop %v2187
        %v2189 = vmul.f32 %v2147, 1.442695
        %v2190 = vpow.pop %v2189
        %v2191 = vmul.f32 %v2148, 1.442695
        %v2192 = vpow.pop %v2191
        %v2193 = vmul.f32 %v2149, 1.442695
        %v2194 = vpow.pop %v2193
        %v2195 = vmul.f32 %v2150, 1.442695
        %v2196 = vpow.pop %v2195
        %v2197 = vmul.f32 %v2151, 1.442695
        %v2198 = vpow.pop %v2197
        %v2199 = vmul.f32 %v2152, 1.442695
        %v2200 = vpow.pop %v2199
        %v2201 = vmul.f32 %v2153, 1.442695
        %v2202 = vpow.pop %v2201
        %v2203 = vmul.f32 %v2154, 1.442695
        %v2204 = vpow.pop %v2203
        %v2205 = vmul.f32 %v2155, 1.442695
        %v2206 = vpow.pop %v2205
        %v2207 = vmul.f32 %v2156, 1.442695
        %v2208 = vpow.pop %v2207
        %v2209 = vmul.f32 %v2157, 1.442695
        %v2210 = vpow.pop %v2209
        %v2211 = vmul.f32 %v2158, 1.442695
        %v2212 = vpow.pop %v2211
        %v2213 = vmul.f32 %v2159, 1.442695
        %v2214 = vpow.pop %v2213
        %v2215 = vmul.f32 %v2160, 1.442695
        %v2216 = vpow.pop %v2215
        %v2217 = vmul.f32 %v2161, 1.442695
        %v2218 = vpow.pop %v2217
        %v2219 = vmul.f32 %v2162, 1.442695
        %v2220 = vpow.pop %v2219
        %v2221 = vmul.f32 %v2163, 1.442695
        %v2222 = vpow.pop %v2221
        %v2223 = vmul.f32 %v2164, 1.442695
        %v2224 = vpow.pop %v2223
        %v2225 = vmul.f32 %v2165, 1.442695
        %v2226 = vpow.pop %v2225
        %v2227 = vmul.f32 %v2166, 1.442695
        %v2228 = vpow.pop %v2227
        %v2229 = vmul.f32 %v2167, 1.442695
        %v2230 = vpow.pop %v2229
        %v2231 = vmul.f32 %v2168, 1.442695
        %v2232 = vpow.pop %v2231
        %v2233 = vmul.f32 %v315, %v2170
        %v2234 = vmul.f32 %v316, %v2172
        %v2235 = vmul.f32 %v317, %v2174
        %v2236 = vmul.f32 %v318, %v2176
        %v2237 = vmul.f32 %v319, %v2178
        %v2238 = vmul.f32 %v320, %v2180
        %v2239 = vmul.f32 %v321, %v2182
        %v2240 = vmul.f32 %v322, %v2184
        %v2241 = vmul.f32 %v323, %v2186
        %v2242 = vmul.f32 %v324, %v2188
        %v2243 = vmul.f32 %v325, %v2190
        %v2244 = vmul.f32 %v326, %v2192
        %v2245 = vmul.f32 %v327, %v2194
        %v2246 = vmul.f32 %v328, %v2196
        %v2247 = vmul.f32 %v329, %v2198
        %v2248 = vmul.f32 %v330, %v2200
        %v2249 = vmul.f32 %v331, %v2202
        %v2250 = vmul.f32 %v332, %v2204
        %v2251 = vmul.f32 %v333, %v2206
        %v2252 = vmul.f32 %v334, %v2208
        %v2253 = vmul.f32 %v335, %v2210
        %v2254 = vmul.f32 %v336, %v2212
        %v2255 = vmul.f32 %v337, %v2214
        %v2256 = vmul.f32 %v338, %v2216
        %v2257 = vmul.f32 %v339, %v2218
        %v2258 = vmul.f32 %v340, %v2220
        %v2259 = vmul.f32 %v341, %v2222
        %v2260 = vmul.f32 %v342, %v2224
        %v2261 = vmul.f32 %v343, %v2226
        %v2262 = vmul.f32 %v344, %v2228
        %v2263 = vmul.f32 %v345, %v2230
        %v2264 = vmul.f32 %v346, %v2232
        %v2265 = vadd.f32 %v2233, %v2234
        %2266 = vadd.xlane.f32.xlu0 %v2265
        %v2267 = vpop.xlane.xlu0 %2266
        %v2268 = vadd.f32 %v2235, %v2236
        %2269 = vadd.xlane.f32.xlu0 %v2268
        %v2270 = vpop.xlane.xlu0 %2269
        %v2271 = vadd.f32 %v2237, %v2238
        %2272 = vadd.xlane.f32.xlu0 %v2271
        %v2273 = vpop.xlane.xlu0 %2272
        %v2274 = vadd.f32 %v2239, %v2240
        %2275 = vadd.xlane.f32.xlu0 %v2274
        %v2276 = vpop.xlane.xlu0 %2275
        %v2277 = vadd.f32 %v2241, %v2242
        %2278 = vadd.xlane.f32.xlu0 %v2277
        %v2279 = vpop.xlane.xlu0 %2278
        %v2280 = vadd.f32 %v2243, %v2244
        %2281 = vadd.xlane.f32.xlu0 %v2280
        %v2282 = vpop.xlane.xlu0 %2281
        %v2283 = vadd.f32 %v2245, %v2246
        %2284 = vadd.xlane.f32.xlu0 %v2283
        %v2285 = vpop.xlane.xlu0 %2284
        %v2286 = vadd.f32 %v2247, %v2248
        %2287 = vadd.xlane.f32.xlu0 %v2286
        %v2288 = vpop.xlane.xlu0 %2287
        %v2289 = vadd.f32 %v2249, %v2250
        %2290 = vadd.xlane.f32.xlu0 %v2289
        %v2291 = vpop.xlane.xlu0 %2290
        %v2292 = vadd.f32 %v2251, %v2252
        %2293 = vadd.xlane.f32.xlu0 %v2292
        %v2294 = vpop.xlane.xlu0 %2293
        %v2295 = vadd.f32 %v2253, %v2254
        %2296 = vadd.xlane.f32.xlu0 %v2295
        %v2297 = vpop.xlane.xlu0 %2296
        %v2298 = vadd.f32 %v2255, %v2256
        %2299 = vadd.xlane.f32.xlu0 %v2298
        %v2300 = vpop.xlane.xlu0 %2299
        %v2301 = vadd.f32 %v2257, %v2258
        %2302 = vadd.xlane.f32.xlu0 %v2301
        %v2303 = vpop.xlane.xlu0 %2302
        %v2304 = vadd.f32 %v2259, %v2260
        %2305 = vadd.xlane.f32.xlu0 %v2304
        %v2306 = vpop.xlane.xlu0 %2305
        %v2307 = vadd.f32 %v2261, %v2262
        %2308 = vadd.xlane.f32.xlu0 %v2307
        %v2309 = vpop.xlane.xlu0 %2308
        %v2310 = vadd.f32 %v2263, %v2264
        %2311 = vadd.xlane.f32.xlu0 %v2310
        %v2312 = vpop.xlane.xlu0 %2311
        %v2313 = vmax.f32 %v2267, 1e-30
        %v2314 = vmax.f32 %v2270, 1e-30
        %v2315 = vmax.f32 %v2273, 1e-30
        %v2316 = vmax.f32 %v2276, 1e-30
        %v2317 = vmax.f32 %v2279, 1e-30
        %v2318 = vmax.f32 %v2282, 1e-30
        %v2319 = vmax.f32 %v2285, 1e-30
        %v2320 = vmax.f32 %v2288, 1e-30
        %v2321 = vmax.f32 %v2291, 1e-30
        %v2322 = vmax.f32 %v2294, 1e-30
        %v2323 = vmax.f32 %v2297, 1e-30
        %v2324 = vmax.f32 %v2300, 1e-30
        %v2325 = vmax.f32 %v2303, 1e-30
        %v2326 = vmax.f32 %v2306, 1e-30
        %v2327 = vmax.f32 %v2309, 1e-30
        %v2328 = vmax.f32 %v2312, 1e-30
        %v2329 = vpack.c.bf16 %v2235, %v2233
        %v2330 = vpack.c.bf16 %v2236, %v2234
        %v2331 = vpack.c.bf16 %v2239, %v2237
        %v2332 = vpack.c.bf16 %v2240, %v2238
        %v2333 = vpack.c.bf16 %v2243, %v2241
        %v2334 = vpack.c.bf16 %v2244, %v2242
        %v2335 = vpack.c.bf16 %v2247, %v2245
        %v2336 = vpack.c.bf16 %v2248, %v2246
        %v2337 = vpack.c.bf16 %v2251, %v2249
        %v2338 = vpack.c.bf16 %v2252, %v2250
        %v2339 = vpack.c.bf16 %v2255, %v2253
        %v2340 = vpack.c.bf16 %v2256, %v2254
        %v2341 = vpack.c.bf16 %v2259, %v2257
        %v2342 = vpack.c.bf16 %v2260, %v2258
        %v2343 = vpack.c.bf16 %v2263, %v2261
        %v2344 = vpack.c.bf16 %v2264, %v2262
        %v2345 = vpack.c.bf16 %v1639, %v1637
        %v2346 = vpack.c.bf16 %v1644, %v1642
        %v2347 = vpack.c.bf16 %v1649, %v1647
        %v2348 = vpack.c.bf16 %v1654, %v1652
        %v2349 = vpack.c.bf16 %v1659, %v1657
        %v2350 = vpack.c.bf16 %v1664, %v1662
        %v2351 = vpack.c.bf16 %v1669, %v1667
        %v2352 = vpack.c.bf16 %v1674, %v1672
        %v2353 = vpack.c.bf16 %v1679, %v1677
        %v2354 = vpack.c.bf16 %v1684, %v1682
        %v2355 = vpack.c.bf16 %v1689, %v1687
        %v2356 = vpack.c.bf16 %v1694, %v1692
        %v2357 = vpack.c.bf16 %v1699, %v1697
        %v2358 = vpack.c.bf16 %v1704, %v1702
        %v2359 = vpack.c.bf16 %v1709, %v1707
        %v2360 = vpack.c.bf16 %v1714, %v1712
        %2361 = vmatpush.bf16.msra.mxu0 %v2352
        %2362 = vmatpush.bf16.msra.mxu0 %v2351
        %2363 = vmatpush.bf16.msra.mxu0 %v2350
        %2364 = vmatpush.bf16.msra.mxu0 %v2349
        %2365 = vmatpush.bf16.msra.mxu0 %v2348
        %2366 = vmatpush.bf16.msra.mxu0 %v2347
        %2367 = vmatpush.bf16.msra.mxu0 %v2346
        %2368 = vmatpush.bf16.msra.mxu0 %v2345
        %2369 = vmatmul.bf16.gmra.mxu0 %v2329
        %v2370 = vpop.f32.mrf.mxu0
        %v2371 = vadd.f32 0.0, %v2370
        %v2372 = vpop.f32.mrf.mxu0
        %v2373 = vadd.f32 0.0, %v2372
        %2374 = vmatmul.bf16.gmra.mxu0 %v2331
        %v2375 = vpop.f32.mrf.mxu0
        %v2376 = vadd.f32 0.0, %v2375
        %v2377 = vpop.f32.mrf.mxu0
        %v2378 = vadd.f32 0.0, %v2377
        %2379 = vmatmul.bf16.gmra.mxu0 %v2333
        %v2380 = vpop.f32.mrf.mxu0
        %v2381 = vadd.f32 0.0, %v2380
        %v2382 = vpop.f32.mrf.mxu0
        %v2383 = vadd.f32 0.0, %v2382
        %2384 = vmatmul.bf16.gmra.mxu0 %v2335
        %v2385 = vpop.f32.mrf.mxu0
        %v2386 = vadd.f32 0.0, %v2385
        %v2387 = vpop.f32.mrf.mxu0
        %v2388 = vadd.f32 0.0, %v2387
        %2389 = vmatmul.bf16.gmra.mxu0 %v2337
        %v2390 = vpop.f32.mrf.mxu0
        %v2391 = vadd.f32 0.0, %v2390
        %v2392 = vpop.f32.mrf.mxu0
        %v2393 = vadd.f32 0.0, %v2392
        %2394 = vmatmul.bf16.gmra.mxu0 %v2339
        %v2395 = vpop.f32.mrf.mxu0
        %v2396 = vadd.f32 0.0, %v2395
        %v2397 = vpop.f32.mrf.mxu0
        %v2398 = vadd.f32 0.0, %v2397
        %2399 = vmatmul.bf16.gmra.mxu0 %v2341
        %v2400 = vpop.f32.mrf.mxu0
        %v2401 = vadd.f32 0.0, %v2400
        %v2402 = vpop.f32.mrf.mxu0
        %v2403 = vadd.f32 0.0, %v2402
        %2404 = vmatmul.bf16.gmra.mxu0 %v2343
        %v2405 = vpop.f32.mrf.mxu0
        %v2406 = vadd.f32 0.0, %v2405
        %v2407 = vpop.f32.mrf.mxu0
        %v2408 = vadd.f32 0.0, %v2407
        %2409 = vdwg.mxu0
        %2410 = vmatpush.bf16.msra.mxu0 %v2360
        %2411 = vmatpush.bf16.msra.mxu0 %v2359
        %2412 = vmatpush.bf16.msra.mxu0 %v2358
        %2413 = vmatpush.bf16.msra.mxu0 %v2357
        %2414 = vmatpush.bf16.msra.mxu0 %v2356
        %2415 = vmatpush.bf16.msra.mxu0 %v2355
        %2416 = vmatpush.bf16.msra.mxu0 %v2354
        %2417 = vmatpush.bf16.msra.mxu0 %v2353
        %2418 = vmatmul.bf16.gmra.mxu0 %v2330
        %v2419 = vpop.f32.mrf.mxu0
        %v2420 = vadd.f32 %v2371, %v2419
        %v2421 = vpop.f32.mrf.mxu0
        %v2422 = vadd.f32 %v2373, %v2421
        %2423 = vmatmul.bf16.gmra.mxu0 %v2332
        %v2424 = vpop.f32.mrf.mxu0
        %v2425 = vadd.f32 %v2376, %v2424
        %v2426 = vpop.f32.mrf.mxu0
        %v2427 = vadd.f32 %v2378, %v2426
        %2428 = vmatmul.bf16.gmra.mxu0 %v2334
        %v2429 = vpop.f32.mrf.mxu0
        %v2430 = vadd.f32 %v2381, %v2429
        %v2431 = vpop.f32.mrf.mxu0
        %v2432 = vadd.f32 %v2383, %v2431
        %2433 = vmatmul.bf16.gmra.mxu0 %v2336
        %v2434 = vpop.f32.mrf.mxu0
        %v2435 = vadd.f32 %v2386, %v2434
        %v2436 = vpop.f32.mrf.mxu0
        %v2437 = vadd.f32 %v2388, %v2436
        %2438 = vmatmul.bf16.gmra.mxu0 %v2338
        %v2439 = vpop.f32.mrf.mxu0
        %v2440 = vadd.f32 %v2391, %v2439
        %v2441 = vpop.f32.mrf.mxu0
        %v2442 = vadd.f32 %v2393, %v2441
        %2443 = vmatmul.bf16.gmra.mxu0 %v2340
        %v2444 = vpop.f32.mrf.mxu0
        %v2445 = vadd.f32 %v2396, %v2444
        %v2446 = vpop.f32.mrf.mxu0
        %v2447 = vadd.f32 %v2398, %v2446
        %2448 = vmatmul.bf16.gmra.mxu0 %v2342
        %v2449 = vpop.f32.mrf.mxu0
        %v2450 = vadd.f32 %v2401, %v2449
        %v2451 = vpop.f32.mrf.mxu0
        %v2452 = vadd.f32 %v2403, %v2451
        %2453 = vmatmul.bf16.gmra.mxu0 %v2344
        %v2454 = vpop.f32.mrf.mxu0
        %v2455 = vadd.f32 %v2406, %v2454
        %v2456 = vpop.f32.mrf.mxu0
        %v2457 = vadd.f32 %v2408, %v2456
        %2458 = vdwg.mxu0
        %v2459 = vrcp.pop %v2313
        %v2460 = vrcp.pop %v2314
        %v2461 = vrcp.pop %v2315
        %v2462 = vrcp.pop %v2316
        %v2463 = vrcp.pop %v2317
        %v2464 = vrcp.pop %v2318
        %v2465 = vrcp.pop %v2319
        %v2466 = vrcp.pop %v2320
        %v2467 = vrcp.pop %v2321
        %v2468 = vrcp.pop %v2322
        %v2469 = vrcp.pop %v2323
        %v2470 = vrcp.pop %v2324
        %v2471 = vrcp.pop %v2325
        %v2472 = vrcp.pop %v2326
        %v2473 = vrcp.pop %v2327
        %v2474 = vrcp.pop %v2328
        %v2475 = vmul.f32 %v2313, %v2459
        %v2476 = vmul.f32 %v2314, %v2460
        %v2477 = vmul.f32 %v2315, %v2461
        %v2478 = vmul.f32 %v2316, %v2462
        %v2479 = vmul.f32 %v2317, %v2463
        %v2480 = vmul.f32 %v2318, %v2464
        %v2481 = vmul.f32 %v2319, %v2465
        %v2482 = vmul.f32 %v2320, %v2466
        %v2483 = vmul.f32 %v2321, %v2467
        %v2484 = vmul.f32 %v2322, %v2468
        %v2485 = vmul.f32 %v2323, %v2469
        %v2486 = vmul.f32 %v2324, %v2470
        %v2487 = vmul.f32 %v2325, %v2471
        %v2488 = vmul.f32 %v2326, %v2472
        %v2489 = vmul.f32 %v2327, %v2473
        %v2490 = vmul.f32 %v2328, %v2474
        %v2491 = vsub.f32 2.0, %v2475
        %v2492 = vsub.f32 2.0, %v2476
        %v2493 = vsub.f32 2.0, %v2477
        %v2494 = vsub.f32 2.0, %v2478
        %v2495 = vsub.f32 2.0, %v2479
        %v2496 = vsub.f32 2.0, %v2480
        %v2497 = vsub.f32 2.0, %v2481
        %v2498 = vsub.f32 2.0, %v2482
        %v2499 = vsub.f32 2.0, %v2483
        %v2500 = vsub.f32 2.0, %v2484
        %v2501 = vsub.f32 2.0, %v2485
        %v2502 = vsub.f32 2.0, %v2486
        %v2503 = vsub.f32 2.0, %v2487
        %v2504 = vsub.f32 2.0, %v2488
        %v2505 = vsub.f32 2.0, %v2489
        %v2506 = vsub.f32 2.0, %v2490
        %v2507 = vmul.f32 %v2459, %v2491
        %v2508 = vmul.f32 %v2460, %v2492
        %v2509 = vmul.f32 %v2461, %v2493
        %v2510 = vmul.f32 %v2462, %v2494
        %v2511 = vmul.f32 %v2463, %v2495
        %v2512 = vmul.f32 %v2464, %v2496
        %v2513 = vmul.f32 %v2465, %v2497
        %v2514 = vmul.f32 %v2466, %v2498
        %v2515 = vmul.f32 %v2467, %v2499
        %v2516 = vmul.f32 %v2468, %v2500
        %v2517 = vmul.f32 %v2469, %v2501
        %v2518 = vmul.f32 %v2470, %v2502
        %v2519 = vmul.f32 %v2471, %v2503
        %v2520 = vmul.f32 %v2472, %v2504
        %v2521 = vmul.f32 %v2473, %v2505
        %v2522 = vmul.f32 %v2474, %v2506
        %v2523 = vmul.f32 %v2420, %v2507
        %v2524 = vmul.f32 %v2422, %v2508
        %v2525 = vmul.f32 %v2425, %v2509
        %v2526 = vmul.f32 %v2427, %v2510
        %v2527 = vmul.f32 %v2430, %v2511
        %v2528 = vmul.f32 %v2432, %v2512
        %v2529 = vmul.f32 %v2435, %v2513
        %v2530 = vmul.f32 %v2437, %v2514
        %v2531 = vmul.f32 %v2440, %v2515
        %v2532 = vmul.f32 %v2442, %v2516
        %v2533 = vmul.f32 %v2445, %v2517
        %v2534 = vmul.f32 %v2447, %v2518
        %v2535 = vmul.f32 %v2450, %v2519
        %v2536 = vmul.f32 %v2452, %v2520
        %v2537 = vmul.f32 %v2455, %v2521
        %v2538 = vmul.f32 %v2457, %v2522
        %vm2539 = vcmp.gt.f32.partialorder %v2523, 0.0
        %vm2540 = vcmp.gt.f32.partialorder %v2524, 0.0
        %vm2541 = vcmp.gt.f32.partialorder %v2525, 0.0
        %vm2542 = vcmp.gt.f32.partialorder %v2526, 0.0
        %vm2543 = vcmp.gt.f32.partialorder %v2527, 0.0
        %vm2544 = vcmp.gt.f32.partialorder %v2528, 0.0
        %vm2545 = vcmp.gt.f32.partialorder %v2529, 0.0
        %vm2546 = vcmp.gt.f32.partialorder %v2530, 0.0
        %vm2547 = vcmp.gt.f32.partialorder %v2531, 0.0
        %vm2548 = vcmp.gt.f32.partialorder %v2532, 0.0
        %vm2549 = vcmp.gt.f32.partialorder %v2533, 0.0
        %vm2550 = vcmp.gt.f32.partialorder %v2534, 0.0
        %vm2551 = vcmp.gt.f32.partialorder %v2535, 0.0
        %vm2552 = vcmp.gt.f32.partialorder %v2536, 0.0
        %vm2553 = vcmp.gt.f32.partialorder %v2537, 0.0
        %vm2554 = vcmp.gt.f32.partialorder %v2538, 0.0
        %v2555 = vmin.f32 %v2523, 0.0
        %v2556 = vmin.f32 %v2524, 0.0
        %v2557 = vmin.f32 %v2525, 0.0
        %v2558 = vmin.f32 %v2526, 0.0
        %v2559 = vmin.f32 %v2527, 0.0
        %v2560 = vmin.f32 %v2528, 0.0
        %v2561 = vmin.f32 %v2529, 0.0
        %v2562 = vmin.f32 %v2530, 0.0
        %v2563 = vmin.f32 %v2531, 0.0
        %v2564 = vmin.f32 %v2532, 0.0
        %v2565 = vmin.f32 %v2533, 0.0
        %v2566 = vmin.f32 %v2534, 0.0
        %v2567 = vmin.f32 %v2535, 0.0
        %v2568 = vmin.f32 %v2536, 0.0
        %v2569 = vmin.f32 %v2537, 0.0
        %v2570 = vmin.f32 %v2538, 0.0
        %v2571 = vmul.f32 %v2555, 1.442695
        %v2572 = vpow.pop %v2571
        %v2573 = vmul.f32 %v2556, 1.442695
        %v2574 = vpow.pop %v2573
        %v2575 = vmul.f32 %v2557, 1.442695
        %v2576 = vpow.pop %v2575
        %v2577 = vmul.f32 %v2558, 1.442695
        %v2578 = vpow.pop %v2577
        %v2579 = vmul.f32 %v2559, 1.442695
        %v2580 = vpow.pop %v2579
        %v2581 = vmul.f32 %v2560, 1.442695
        %v2582 = vpow.pop %v2581
        %v2583 = vmul.f32 %v2561, 1.442695
        %v2584 = vpow.pop %v2583
        %v2585 = vmul.f32 %v2562, 1.442695
        %v2586 = vpow.pop %v2585
        %v2587 = vmul.f32 %v2563, 1.442695
        %v2588 = vpow.pop %v2587
        %v2589 = vmul.f32 %v2564, 1.442695
        %v2590 = vpow.pop %v2589
        %v2591 = vmul.f32 %v2565, 1.442695
        %v2592 = vpow.pop %v2591
        %v2593 = vmul.f32 %v2566, 1.442695
        %v2594 = vpow.pop %v2593
        %v2595 = vmul.f32 %v2567, 1.442695
        %v2596 = vpow.pop %v2595
        %v2597 = vmul.f32 %v2568, 1.442695
        %v2598 = vpow.pop %v2597
        %v2599 = vmul.f32 %v2569, 1.442695
        %v2600 = vpow.pop %v2599
        %v2601 = vmul.f32 %v2570, 1.442695
        %v2602 = vpow.pop %v2601
        %v2603 = vsub.f32 %v2572, 1.0
        %v2604 = vsub.f32 %v2574, 1.0
        %v2605 = vsub.f32 %v2576, 1.0
        %v2606 = vsub.f32 %v2578, 1.0
        %v2607 = vsub.f32 %v2580, 1.0
        %v2608 = vsub.f32 %v2582, 1.0
        %v2609 = vsub.f32 %v2584, 1.0
        %v2610 = vsub.f32 %v2586, 1.0
        %v2611 = vsub.f32 %v2588, 1.0
        %v2612 = vsub.f32 %v2590, 1.0
        %v2613 = vsub.f32 %v2592, 1.0
        %v2614 = vsub.f32 %v2594, 1.0
        %v2615 = vsub.f32 %v2596, 1.0
        %v2616 = vsub.f32 %v2598, 1.0
        %v2617 = vsub.f32 %v2600, 1.0
        %v2618 = vsub.f32 %v2602, 1.0
        %v2619 = vsel %vm2539, %v2523, %v2603
        %v2620 = vsel %vm2540, %v2524, %v2604
        %v2621 = vsel %vm2541, %v2525, %v2605
        %v2622 = vsel %vm2542, %v2526, %v2606
        %v2623 = vsel %vm2543, %v2527, %v2607
        %v2624 = vsel %vm2544, %v2528, %v2608
        %v2625 = vsel %vm2545, %v2529, %v2609
        %v2626 = vsel %vm2546, %v2530, %v2610
        %v2627 = vsel %vm2547, %v2531, %v2611
        %v2628 = vsel %vm2548, %v2532, %v2612
        %v2629 = vsel %vm2549, %v2533, %v2613
        %v2630 = vsel %vm2550, %v2534, %v2614
        %v2631 = vsel %vm2551, %v2535, %v2615
        %v2632 = vsel %vm2552, %v2536, %v2616
        %v2633 = vsel %vm2553, %v2537, %v2617
        %v2634 = vsel %vm2554, %v2538, %v2618
        %s2635 = scalar_lea.vmem %s259, 128 [#allocation2]
        %2636 = vst.msk [vmem:[%s2635] sm:$0xff] %vm483, %v2619
        %2637 = vst.msk [vmem:[%s2635 + $0x8] sm:$0xff] %vm483, %v2620
        %2638 = vst.msk [vmem:[%s2635 + $0x10] sm:$0xff] %vm483, %v2621
        %2639 = vst.msk [vmem:[%s2635 + $0x18] sm:$0xff] %vm483, %v2622
        %2640 = vst.msk [vmem:[%s2635 + $0x20] sm:$0xff] %vm483, %v2623
        %2641 = vst.msk [vmem:[%s2635 + $0x28] sm:$0xff] %vm483, %v2624
        %2642 = vst.msk [vmem:[%s2635 + $0x30] sm:$0xff] %vm483, %v2625
        %2643 = vst.msk [vmem:[%s2635 + $0x38] sm:$0xff] %vm483, %v2626
        %2644 = vst.msk [vmem:[%s2635 + $0x40] sm:$0xff] %vm483, %v2627
        %2645 = vst.msk [vmem:[%s2635 + $0x48] sm:$0xff] %vm483, %v2628
        %2646 = vst.msk [vmem:[%s2635 + $0x50] sm:$0xff] %vm483, %v2629
        %2647 = vst.msk [vmem:[%s2635 + $0x58] sm:$0xff] %vm483, %v2630
        %2648 = vst.msk [vmem:[%s2635 + $0x60] sm:$0xff] %vm483, %v2631
        %2649 = vst.msk [vmem:[%s2635 + $0x68] sm:$0xff] %vm483, %v2632
        %2650 = vst.msk [vmem:[%s2635 + $0x70] sm:$0xff] %vm483, %v2633
        %2651 = vst.msk [vmem:[%s2635 + $0x78] sm:$0xff] %vm483, %v2634
        %s2652 = scalar_lea.vmem %s3, 16
        %v2653 = vld [vmem:[%s2652] sm:$0xf]
        %v2654 = vld [vmem:[%s2652 + $0x4] sm:$0xf]
        %v2657 = vunpack.c.l.b16 %v2653
        %v2658 = vunpack.c.l.b16 %v2654
        %v2659 = vpack.c.b16 %v2658, %v2657
        %2661 = vmatpush.bf16.msra.mxu0 0
        %2662 = vmatpush.bf16.msra.mxu0 0
        %2663 = vmatpush.bf16.msra.mxu0 0
        %2664 = vmatpush.bf16.msra.mxu0 0
        %2665 = vmatpush.bf16.msra.mxu0 0
        %2666 = vmatpush.bf16.msra.mxu0 0
        %2667 = vmatpush.bf16.msra.mxu0 0
        %2668 = vmatpush.bf16.msra.mxu0 %v2659
        %2669 = vmatmul.bf16.gmra.mxu0 %v485
        %v2670 = vpop.f32.mrf.mxu0
        %v2671 = vadd.f32 0.0, %v2670
        %v2672 = vpop.f32.mrf.mxu0
        %v2673 = vadd.f32 0.0, %v2672
        %2674 = vmatmul.bf16.gmra.mxu0 %v488
        %v2675 = vpop.f32.mrf.mxu0
        %v2676 = vadd.f32 0.0, %v2675
        %v2677 = vpop.f32.mrf.mxu0
        %v2678 = vadd.f32 0.0, %v2677
        %2679 = vmatmul.bf16.gmra.mxu0 %v491
        %v2680 = vpop.f32.mrf.mxu0
        %v2681 = vadd.f32 0.0, %v2680
        %v2682 = vpop.f32.mrf.mxu0
        %v2683 = vadd.f32 0.0, %v2682
        %2684 = vmatmul.bf16.gmra.mxu0 %v494
        %v2685 = vpop.f32.mrf.mxu0
        %v2686 = vadd.f32 0.0, %v2685
        %v2687 = vpop.f32.mrf.mxu0
        %v2688 = vadd.f32 0.0, %v2687
        %2689 = vmatmul.bf16.gmra.mxu0 %v497
        %v2690 = vpop.f32.mrf.mxu0
        %v2691 = vadd.f32 0.0, %v2690
        %v2692 = vpop.f32.mrf.mxu0
        %v2693 = vadd.f32 0.0, %v2692
        %2694 = vmatmul.bf16.gmra.mxu0 %v500
        %v2695 = vpop.f32.mrf.mxu0
        %v2696 = vadd.f32 0.0, %v2695
        %v2697 = vpop.f32.mrf.mxu0
        %v2698 = vadd.f32 0.0, %v2697
        %2699 = vmatmul.bf16.gmra.mxu0 %v503
        %v2700 = vpop.f32.mrf.mxu0
        %v2701 = vadd.f32 0.0, %v2700
        %v2702 = vpop.f32.mrf.mxu0
        %v2703 = vadd.f32 0.0, %v2702
        %2704 = vmatmul.bf16.gmra.mxu0 %v506
        %v2705 = vpop.f32.mrf.mxu0
        %v2706 = vadd.f32 0.0, %v2705
        %v2707 = vpop.f32.mrf.mxu0
        %v2708 = vadd.f32 0.0, %v2707
        %2709 = vmatmul.bf16.gmra.mxu0 %v509
        %v2710 = vpop.f32.mrf.mxu0
        %v2711 = vadd.f32 0.0, %v2710
        %v2712 = vpop.f32.mrf.mxu0
        %v2713 = vadd.f32 0.0, %v2712
        %2714 = vmatmul.bf16.gmra.mxu0 %v512
        %v2715 = vpop.f32.mrf.mxu0
        %v2716 = vadd.f32 0.0, %v2715
        %v2717 = vpop.f32.mrf.mxu0
        %v2718 = vadd.f32 0.0, %v2717
        %2719 = vmatmul.bf16.gmra.mxu0 %v515
        %v2720 = vpop.f32.mrf.mxu0
        %v2721 = vadd.f32 0.0, %v2720
        %v2722 = vpop.f32.mrf.mxu0
        %v2723 = vadd.f32 0.0, %v2722
        %2724 = vmatmul.bf16.gmra.mxu0 %v518
        %v2725 = vpop.f32.mrf.mxu0
        %v2726 = vadd.f32 0.0, %v2725
        %v2727 = vpop.f32.mrf.mxu0
        %v2728 = vadd.f32 0.0, %v2727
        %2729 = vmatmul.bf16.gmra.mxu0 %v521
        %v2730 = vpop.f32.mrf.mxu0
        %v2731 = vadd.f32 0.0, %v2730
        %v2732 = vpop.f32.mrf.mxu0
        %v2733 = vadd.f32 0.0, %v2732
        %2734 = vmatmul.bf16.gmra.mxu0 %v524
        %v2735 = vpop.f32.mrf.mxu0
        %v2736 = vadd.f32 0.0, %v2735
        %v2737 = vpop.f32.mrf.mxu0
        %v2738 = vadd.f32 0.0, %v2737
        %2739 = vmatmul.bf16.gmra.mxu0 %v527
        %v2740 = vpop.f32.mrf.mxu0
        %v2741 = vadd.f32 0.0, %v2740
        %v2742 = vpop.f32.mrf.mxu0
        %v2743 = vadd.f32 0.0, %v2742
        %2744 = vmatmul.bf16.gmra.mxu0 %v530
        %v2745 = vpop.f32.mrf.mxu0
        %v2746 = vadd.f32 0.0, %v2745
        %v2747 = vpop.f32.mrf.mxu0
        %v2748 = vadd.f32 0.0, %v2747
        %2749 = vdwg.mxu0
        %2750 = vmatpush.bf16.msra.mxu0 0
        %2751 = vmatpush.bf16.msra.mxu0 0
        %2752 = vmatpush.bf16.msra.mxu0 0
        %2753 = vmatpush.bf16.msra.mxu0 0
        %2754 = vmatpush.bf16.msra.mxu0 0
        %2755 = vmatpush.bf16.msra.mxu0 0
        %2756 = vmatpush.bf16.msra.mxu0 0
        %2757 = vmatpush.bf16.msra.mxu0 %v2659
        %2758 = vmatmul.bf16.gmra.mxu0 %v662
        %v2759 = vpop.f32.mrf.mxu0
        %v2760 = vadd.f32 0.0, %v2759
        %v2761 = vpop.f32.mrf.mxu0
        %v2762 = vadd.f32 0.0, %v2761
        %2763 = vmatmul.bf16.gmra.mxu0 %v665
        %v2764 = vpop.f32.mrf.mxu0
        %v2765 = vadd.f32 0.0, %v2764
        %v2766 = vpop.f32.mrf.mxu0
        %v2767 = vadd.f32 0.0, %v2766
        %2768 = vmatmul.bf16.gmra.mxu0 %v668
        %v2769 = vpop.f32.mrf.mxu0
        %v2770 = vadd.f32 0.0, %v2769
        %v2771 = vpop.f32.mrf.mxu0
        %v2772 = vadd.f32 0.0, %v2771
        %2773 = vmatmul.bf16.gmra.mxu0 %v671
        %v2774 = vpop.f32.mrf.mxu0
        %v2775 = vadd.f32 0.0, %v2774
        %v2776 = vpop.f32.mrf.mxu0
        %v2777 = vadd.f32 0.0, %v2776
        %2778 = vmatmul.bf16.gmra.mxu0 %v674
        %v2779 = vpop.f32.mrf.mxu0
        %v2780 = vadd.f32 0.0, %v2779
        %v2781 = vpop.f32.mrf.mxu0
        %v2782 = vadd.f32 0.0, %v2781
        %2783 = vmatmul.bf16.gmra.mxu0 %v677
        %v2784 = vpop.f32.mrf.mxu0
        %v2785 = vadd.f32 0.0, %v2784
        %v2786 = vpop.f32.mrf.mxu0
        %v2787 = vadd.f32 0.0, %v2786
        %2788 = vmatmul.bf16.gmra.mxu0 %v680
        %v2789 = vpop.f32.mrf.mxu0
        %v2790 = vadd.f32 0.0, %v2789
        %v2791 = vpop.f32.mrf.mxu0
        %v2792 = vadd.f32 0.0, %v2791
        %2793 = vmatmul.bf16.gmra.mxu0 %v683
        %v2794 = vpop.f32.mrf.mxu0
        %v2795 = vadd.f32 0.0, %v2794
        %v2796 = vpop.f32.mrf.mxu0
        %v2797 = vadd.f32 0.0, %v2796
        %2798 = vdwg.mxu0
        %s2799 = scalar_lea.vmem %s4, 2
        %v2800 = vld [vmem:[%s2799] sm:$0x1]
        %s2801 = scalar_lea.vmem %s5, 2
        %v2802 = vld [vmem:[%s2801] sm:$0x1]
        %v2804 = vperm.slane %v2800, 0
        %v2806 = vmul.f32 %v2760, %v2804
        %v2807 = vmul.f32 %v2762, %v2804
        %v2808 = vmul.f32 %v2765, %v2804
        %v2809 = vmul.f32 %v2767, %v2804
        %v2810 = vmul.f32 %v2770, %v2804
        %v2811 = vmul.f32 %v2772, %v2804
        %v2812 = vmul.f32 %v2775, %v2804
        %v2813 = vmul.f32 %v2777, %v2804
        %v2814 = vmul.f32 %v2780, %v2804
        %v2815 = vmul.f32 %v2782, %v2804
        %v2816 = vmul.f32 %v2785, %v2804
        %v2817 = vmul.f32 %v2787, %v2804
        %v2818 = vmul.f32 %v2790, %v2804
        %v2819 = vmul.f32 %v2792, %v2804
        %v2820 = vmul.f32 %v2795, %v2804
        %v2821 = vmul.f32 %v2797, %v2804
        %v2822 = vsel %vm483, %v2806, 0.0
        %2823 = vadd.xlane.f32.xlu0 %v2822
        %v2824 = vpop.xlane.xlu0 %2823
        %v2825 = vsel %vm483, %v2807, 0.0
        %2826 = vadd.xlane.f32.xlu0 %v2825
        %v2827 = vpop.xlane.xlu0 %2826
        %v2828 = vsel %vm483, %v2808, 0.0
        %2829 = vadd.xlane.f32.xlu0 %v2828
        %v2830 = vpop.xlane.xlu0 %2829
        %v2831 = vsel %vm483, %v2809, 0.0
        %2832 = vadd.xlane.f32.xlu0 %v2831
        %v2833 = vpop.xlane.xlu0 %2832
        %v2834 = vsel %vm483, %v2810, 0.0
        %2835 = vadd.xlane.f32.xlu0 %v2834
        %v2836 = vpop.xlane.xlu0 %2835
        %v2837 = vsel %vm483, %v2811, 0.0
        %2838 = vadd.xlane.f32.xlu0 %v2837
        %v2839 = vpop.xlane.xlu0 %2838
        %v2840 = vsel %vm483, %v2812, 0.0
        %2841 = vadd.xlane.f32.xlu0 %v2840
        %v2842 = vpop.xlane.xlu0 %2841
        %v2843 = vsel %vm483, %v2813, 0.0
        %2844 = vadd.xlane.f32.xlu0 %v2843
        %v2845 = vpop.xlane.xlu0 %2844
        %v2846 = vsel %vm483, %v2814, 0.0
        %2847 = vadd.xlane.f32.xlu0 %v2846
        %v2848 = vpop.xlane.xlu0 %2847
        %v2849 = vsel %vm483, %v2815, 0.0
        %2850 = vadd.xlane.f32.xlu0 %v2849
        %v2851 = vpop.xlane.xlu0 %2850
        %v2852 = vsel %vm483, %v2816, 0.0
        %2853 = vadd.xlane.f32.xlu0 %v2852
        %v2854 = vpop.xlane.xlu0 %2853
        %v2855 = vsel %vm483, %v2817, 0.0
        %2856 = vadd.xlane.f32.xlu0 %v2855
        %v2857 = vpop.xlane.xlu0 %2856
        %v2858 = vsel %vm483, %v2818, 0.0
        %2859 = vadd.xlane.f32.xlu0 %v2858
        %v2860 = vpop.xlane.xlu0 %2859
        %v2861 = vsel %vm483, %v2819, 0.0
        %2862 = vadd.xlane.f32.xlu0 %v2861
        %v2863 = vpop.xlane.xlu0 %2862
        %v2864 = vsel %vm483, %v2820, 0.0
        %2865 = vadd.xlane.f32.xlu0 %v2864
        %v2866 = vpop.xlane.xlu0 %2865
        %v2867 = vsel %vm483, %v2821, 0.0
        %2868 = vadd.xlane.f32.xlu0 %v2867
        %v2869 = vpop.xlane.xlu0 %2868
        %v2871 = vsel %vm483, %v2802, 0
        %v2874 = vsel %vm483, %v2671, 0
        %v2877 = vsel %vm483, %v2673, 0
        %v2880 = vsel %vm483, %v2676, 0
        %v2883 = vsel %vm483, %v2678, 0
        %v2886 = vsel %vm483, %v2681, 0
        %v2889 = vsel %vm483, %v2683, 0
        %v2892 = vsel %vm483, %v2686, 0
        %v2895 = vsel %vm483, %v2688, 0
        %v2898 = vsel %vm483, %v2691, 0
        %v2901 = vsel %vm483, %v2693, 0
        %v2904 = vsel %vm483, %v2696, 0
        %v2907 = vsel %vm483, %v2698, 0
        %v2910 = vsel %vm483, %v2701, 0
        %v2913 = vsel %vm483, %v2703, 0
        %v2916 = vsel %vm483, %v2706, 0
        %v2919 = vsel %vm483, %v2708, 0
        %v2922 = vsel %vm483, %v2711, 0
        %v2925 = vsel %vm483, %v2713, 0
        %v2928 = vsel %vm483, %v2716, 0
        %v2931 = vsel %vm483, %v2718, 0
        %v2934 = vsel %vm483, %v2721, 0
        %v2937 = vsel %vm483, %v2723, 0
        %v2940 = vsel %vm483, %v2726, 0
        %v2943 = vsel %vm483, %v2728, 0
        %v2946 = vsel %vm483, %v2731, 0
        %v2949 = vsel %vm483, %v2733, 0
        %v2952 = vsel %vm483, %v2736, 0
        %v2955 = vsel %vm483, %v2738, 0
        %v2958 = vsel %vm483, %v2741, 0
        %v2961 = vsel %vm483, %v2743, 0
        %v2964 = vsel %vm483, %v2746, 0
        %v2967 = vsel %vm483, %v2748, 0
        %2969 = vmatpush.xpose.msra.mxu0 %v2919
        %2970 = vmatpush.xpose.msra.mxu0 %v2916
        %2971 = vmatpush.xpose.msra.mxu0 %v2913
        %2972 = vmatpush.xpose.msra.mxu0 %v2910
        %2973 = vmatpush.xpose.msra.mxu0 %v2907
        %2974 = vmatpush.xpose.msra.mxu0 %v2904
        %2975 = vmatpush.xpose.msra.mxu0 %v2901
        %2976 = vmatpush.xpose.msra.mxu0 %v2898
        %2977 = vmatpush.xpose.msra.mxu0 %v2895
        %2978 = vmatpush.xpose.msra.mxu0 %v2892
        %2979 = vmatpush.xpose.msra.mxu0 %v2889
        %2980 = vmatpush.xpose.msra.mxu0 %v2886
        %2981 = vmatpush.xpose.msra.mxu0 %v2883
        %2982 = vmatpush.xpose.msra.mxu0 %v2880
        %2983 = vmatpush.xpose.msra.mxu0 %v2877
        %2984 = vmatpush.xpose.msra.mxu0 %v2874
        %2985 = vmatmul.f32.gmra.mxu0 %v2871
        %v2986 = vpop.f32.mrf.mxu0
        %v2987 = vadd.f32 0.0, %v2986
        %2988 = vdwg.mxu0
        %2989 = vmatpush.xpose.msra.mxu0 %v2967
        %2990 = vmatpush.xpose.msra.mxu0 %v2964
        %2991 = vmatpush.xpose.msra.mxu0 %v2961
        %2992 = vmatpush.xpose.msra.mxu0 %v2958
        %2993 = vmatpush.xpose.msra.mxu0 %v2955
        %2994 = vmatpush.xpose.msra.mxu0 %v2952
        %2995 = vmatpush.xpose.msra.mxu0 %v2949
        %2996 = vmatpush.xpose.msra.mxu0 %v2946
        %2997 = vmatpush.xpose.msra.mxu0 %v2943
        %2998 = vmatpush.xpose.msra.mxu0 %v2940
        %2999 = vmatpush.xpose.msra.mxu0 %v2937
        %3000 = vmatpush.xpose.msra.mxu0 %v2934
        %3001 = vmatpush.xpose.msra.mxu0 %v2931
        %3002 = vmatpush.xpose.msra.mxu0 %v2928
        %3003 = vmatpush.xpose.msra.mxu0 %v2925
        %3004 = vmatpush.xpose.msra.mxu0 %v2922
        %3005 = vmatmul.f32.gmra.mxu0 %v2871
        %v3006 = vpop.f32.mrf.mxu0
        %v3007 = vadd.f32 0.0, %v3006
        %3008 = vdwg.mxu0
        %v3009 = vperm.slane %v2987, 0
        %v3010 = vperm.slane %v3007, 0
        %v3011 = vadd.f32 %v2824, %v3009
        %v3012 = vadd.f32 %v2824, %v3010
        %v3013 = vadd.f32 %v2827, %v3009
        %v3014 = vadd.f32 %v2827, %v3010
        %v3015 = vadd.f32 %v2830, %v3009
        %v3016 = vadd.f32 %v2830, %v3010
        %v3017 = vadd.f32 %v2833, %v3009
        %v3018 = vadd.f32 %v2833, %v3010
        %v3019 = vadd.f32 %v2836, %v3009
        %v3020 = vadd.f32 %v2836, %v3010
        %v3021 = vadd.f32 %v2839, %v3009
        %v3022 = vadd.f32 %v2839, %v3010
        %v3023 = vadd.f32 %v2842, %v3009
        %v3024 = vadd.f32 %v2842, %v3010
        %v3025 = vadd.f32 %v2845, %v3009
        %v3026 = vadd.f32 %v2845, %v3010
        %v3027 = vadd.f32 %v2848, %v3009
        %v3028 = vadd.f32 %v2848, %v3010
        %v3029 = vadd.f32 %v2851, %v3009
        %v3030 = vadd.f32 %v2851, %v3010
        %v3031 = vadd.f32 %v2854, %v3009
        %v3032 = vadd.f32 %v2854, %v3010
        %v3033 = vadd.f32 %v2857, %v3009
        %v3034 = vadd.f32 %v2857, %v3010
        %v3035 = vadd.f32 %v2860, %v3009
        %v3036 = vadd.f32 %v2860, %v3010
        %v3037 = vadd.f32 %v2863, %v3009
        %v3038 = vadd.f32 %v2863, %v3010
        %v3039 = vadd.f32 %v2866, %v3009
        %v3040 = vadd.f32 %v2866, %v3010
        %v3041 = vadd.f32 %v2869, %v3009
        %v3042 = vadd.f32 %v2869, %v3010
        %vm3043 = vcmp.gt.f32.partialorder %v3011, 0.0
        %vm3044 = vcmp.gt.f32.partialorder %v3012, 0.0
        %vm3045 = vcmp.gt.f32.partialorder %v3013, 0.0
        %vm3046 = vcmp.gt.f32.partialorder %v3014, 0.0
        %vm3047 = vcmp.gt.f32.partialorder %v3015, 0.0
        %vm3048 = vcmp.gt.f32.partialorder %v3016, 0.0
        %vm3049 = vcmp.gt.f32.partialorder %v3017, 0.0
        %vm3050 = vcmp.gt.f32.partialorder %v3018, 0.0
        %vm3051 = vcmp.gt.f32.partialorder %v3019, 0.0
        %vm3052 = vcmp.gt.f32.partialorder %v3020, 0.0
        %vm3053 = vcmp.gt.f32.partialorder %v3021, 0.0
        %vm3054 = vcmp.gt.f32.partialorder %v3022, 0.0
        %vm3055 = vcmp.gt.f32.partialorder %v3023, 0.0
        %vm3056 = vcmp.gt.f32.partialorder %v3024, 0.0
        %vm3057 = vcmp.gt.f32.partialorder %v3025, 0.0
        %vm3058 = vcmp.gt.f32.partialorder %v3026, 0.0
        %vm3059 = vcmp.gt.f32.partialorder %v3027, 0.0
        %vm3060 = vcmp.gt.f32.partialorder %v3028, 0.0
        %vm3061 = vcmp.gt.f32.partialorder %v3029, 0.0
        %vm3062 = vcmp.gt.f32.partialorder %v3030, 0.0
        %vm3063 = vcmp.gt.f32.partialorder %v3031, 0.0
        %vm3064 = vcmp.gt.f32.partialorder %v3032, 0.0
        %vm3065 = vcmp.gt.f32.partialorder %v3033, 0.0
        %vm3066 = vcmp.gt.f32.partialorder %v3034, 0.0
        %vm3067 = vcmp.gt.f32.partialorder %v3035, 0.0
        %vm3068 = vcmp.gt.f32.partialorder %v3036, 0.0
        %vm3069 = vcmp.gt.f32.partialorder %v3037, 0.0
        %vm3070 = vcmp.gt.f32.partialorder %v3038, 0.0
        %vm3071 = vcmp.gt.f32.partialorder %v3039, 0.0
        %vm3072 = vcmp.gt.f32.partialorder %v3040, 0.0
        %vm3073 = vcmp.gt.f32.partialorder %v3041, 0.0
        %vm3074 = vcmp.gt.f32.partialorder %v3042, 0.0
        %v3075 = vmul.f32 %v3011, 0.2
        %v3076 = vmul.f32 %v3012, 0.2
        %v3077 = vmul.f32 %v3013, 0.2
        %v3078 = vmul.f32 %v3014, 0.2
        %v3079 = vmul.f32 %v3015, 0.2
        %v3080 = vmul.f32 %v3016, 0.2
        %v3081 = vmul.f32 %v3017, 0.2
        %v3082 = vmul.f32 %v3018, 0.2
        %v3083 = vmul.f32 %v3019, 0.2
        %v3084 = vmul.f32 %v3020, 0.2
        %v3085 = vmul.f32 %v3021, 0.2
        %v3086 = vmul.f32 %v3022, 0.2
        %v3087 = vmul.f32 %v3023, 0.2
        %v3088 = vmul.f32 %v3024, 0.2
        %v3089 = vmul.f32 %v3025, 0.2
        %v3090 = vmul.f32 %v3026, 0.2
        %v3091 = vmul.f32 %v3027, 0.2
        %v3092 = vmul.f32 %v3028, 0.2
        %v3093 = vmul.f32 %v3029, 0.2
        %v3094 = vmul.f32 %v3030, 0.2
        %v3095 = vmul.f32 %v3031, 0.2
        %v3096 = vmul.f32 %v3032, 0.2
        %v3097 = vmul.f32 %v3033, 0.2
        %v3098 = vmul.f32 %v3034, 0.2
        %v3099 = vmul.f32 %v3035, 0.2
        %v3100 = vmul.f32 %v3036, 0.2
        %v3101 = vmul.f32 %v3037, 0.2
        %v3102 = vmul.f32 %v3038, 0.2
        %v3103 = vmul.f32 %v3039, 0.2
        %v3104 = vmul.f32 %v3040, 0.2
        %v3105 = vmul.f32 %v3041, 0.2
        %v3106 = vmul.f32 %v3042, 0.2
        %v3107 = vsel %vm3043, %v3011, %v3075
        %v3108 = vsel %vm3044, %v3012, %v3076
        %v3109 = vsel %vm3045, %v3013, %v3077
        %v3110 = vsel %vm3046, %v3014, %v3078
        %v3111 = vsel %vm3047, %v3015, %v3079
        %v3112 = vsel %vm3048, %v3016, %v3080
        %v3113 = vsel %vm3049, %v3017, %v3081
        %v3114 = vsel %vm3050, %v3018, %v3082
        %v3115 = vsel %vm3051, %v3019, %v3083
        %v3116 = vsel %vm3052, %v3020, %v3084
        %v3117 = vsel %vm3053, %v3021, %v3085
        %v3118 = vsel %vm3054, %v3022, %v3086
        %v3119 = vsel %vm3055, %v3023, %v3087
        %v3120 = vsel %vm3056, %v3024, %v3088
        %v3121 = vsel %vm3057, %v3025, %v3089
        %v3122 = vsel %vm3058, %v3026, %v3090
        %v3123 = vsel %vm3059, %v3027, %v3091
        %v3124 = vsel %vm3060, %v3028, %v3092
        %v3125 = vsel %vm3061, %v3029, %v3093
        %v3126 = vsel %vm3062, %v3030, %v3094
        %v3127 = vsel %vm3063, %v3031, %v3095
        %v3128 = vsel %vm3064, %v3032, %v3096
        %v3129 = vsel %vm3065, %v3033, %v3097
        %v3130 = vsel %vm3066, %v3034, %v3098
        %v3131 = vsel %vm3067, %v3035, %v3099
        %v3132 = vsel %vm3068, %v3036, %v3100
        %v3133 = vsel %vm3069, %v3037, %v3101
        %v3134 = vsel %vm3070, %v3038, %v3102
        %v3135 = vsel %vm3071, %v3039, %v3103
        %v3136 = vsel %vm3072, %v3040, %v3104
        %v3137 = vsel %vm3073, %v3041, %v3105
        %v3138 = vsel %vm3074, %v3042, %v3106
        %v3139 = vsub.f32 0.0, %v3107
        %v3140 = vsub.f32 0.0, %v3108
        %v3141 = vsub.f32 0.0, %v3109
        %v3142 = vsub.f32 0.0, %v3110
        %v3143 = vsub.f32 0.0, %v3111
        %v3144 = vsub.f32 0.0, %v3112
        %v3145 = vsub.f32 0.0, %v3113
        %v3146 = vsub.f32 0.0, %v3114
        %v3147 = vsub.f32 0.0, %v3115
        %v3148 = vsub.f32 0.0, %v3116
        %v3149 = vsub.f32 0.0, %v3117
        %v3150 = vsub.f32 0.0, %v3118
        %v3151 = vsub.f32 0.0, %v3119
        %v3152 = vsub.f32 0.0, %v3120
        %v3153 = vsub.f32 0.0, %v3121
        %v3154 = vsub.f32 0.0, %v3122
        %v3155 = vsub.f32 0.0, %v3123
        %v3156 = vsub.f32 0.0, %v3124
        %v3157 = vsub.f32 0.0, %v3125
        %v3158 = vsub.f32 0.0, %v3126
        %v3159 = vsub.f32 0.0, %v3127
        %v3160 = vsub.f32 0.0, %v3128
        %v3161 = vsub.f32 0.0, %v3129
        %v3162 = vsub.f32 0.0, %v3130
        %v3163 = vsub.f32 0.0, %v3131
        %v3164 = vsub.f32 0.0, %v3132
        %v3165 = vsub.f32 0.0, %v3133
        %v3166 = vsub.f32 0.0, %v3134
        %v3167 = vsub.f32 0.0, %v3135
        %v3168 = vsub.f32 0.0, %v3136
        %v3169 = vsub.f32 0.0, %v3137
        %v3170 = vsub.f32 0.0, %v3138
        %v3171 = vmin.f32 %v3139, 60.0
        %v3172 = vmin.f32 %v3140, 60.0
        %v3173 = vmin.f32 %v3141, 60.0
        %v3174 = vmin.f32 %v3142, 60.0
        %v3175 = vmin.f32 %v3143, 60.0
        %v3176 = vmin.f32 %v3144, 60.0
        %v3177 = vmin.f32 %v3145, 60.0
        %v3178 = vmin.f32 %v3146, 60.0
        %v3179 = vmin.f32 %v3147, 60.0
        %v3180 = vmin.f32 %v3148, 60.0
        %v3181 = vmin.f32 %v3149, 60.0
        %v3182 = vmin.f32 %v3150, 60.0
        %v3183 = vmin.f32 %v3151, 60.0
        %v3184 = vmin.f32 %v3152, 60.0
        %v3185 = vmin.f32 %v3153, 60.0
        %v3186 = vmin.f32 %v3154, 60.0
        %v3187 = vmin.f32 %v3155, 60.0
        %v3188 = vmin.f32 %v3156, 60.0
        %v3189 = vmin.f32 %v3157, 60.0
        %v3190 = vmin.f32 %v3158, 60.0
        %v3191 = vmin.f32 %v3159, 60.0
        %v3192 = vmin.f32 %v3160, 60.0
        %v3193 = vmin.f32 %v3161, 60.0
        %v3194 = vmin.f32 %v3162, 60.0
        %v3195 = vmin.f32 %v3163, 60.0
        %v3196 = vmin.f32 %v3164, 60.0
        %v3197 = vmin.f32 %v3165, 60.0
        %v3198 = vmin.f32 %v3166, 60.0
        %v3199 = vmin.f32 %v3167, 60.0
        %v3200 = vmin.f32 %v3168, 60.0
        %v3201 = vmin.f32 %v3169, 60.0
        %v3202 = vmin.f32 %v3170, 60.0
        %v3203 = vmul.f32 %v3171, 1.442695
        %v3204 = vpow.pop %v3203
        %v3205 = vmul.f32 %v3172, 1.442695
        %v3206 = vpow.pop %v3205
        %v3207 = vmul.f32 %v3173, 1.442695
        %v3208 = vpow.pop %v3207
        %v3209 = vmul.f32 %v3174, 1.442695
        %v3210 = vpow.pop %v3209
        %v3211 = vmul.f32 %v3175, 1.442695
        %v3212 = vpow.pop %v3211
        %v3213 = vmul.f32 %v3176, 1.442695
        %v3214 = vpow.pop %v3213
        %v3215 = vmul.f32 %v3177, 1.442695
        %v3216 = vpow.pop %v3215
        %v3217 = vmul.f32 %v3178, 1.442695
        %v3218 = vpow.pop %v3217
        %v3219 = vmul.f32 %v3179, 1.442695
        %v3220 = vpow.pop %v3219
        %v3221 = vmul.f32 %v3180, 1.442695
        %v3222 = vpow.pop %v3221
        %v3223 = vmul.f32 %v3181, 1.442695
        %v3224 = vpow.pop %v3223
        %v3225 = vmul.f32 %v3182, 1.442695
        %v3226 = vpow.pop %v3225
        %v3227 = vmul.f32 %v3183, 1.442695
        %v3228 = vpow.pop %v3227
        %v3229 = vmul.f32 %v3184, 1.442695
        %v3230 = vpow.pop %v3229
        %v3231 = vmul.f32 %v3185, 1.442695
        %v3232 = vpow.pop %v3231
        %v3233 = vmul.f32 %v3186, 1.442695
        %v3234 = vpow.pop %v3233
        %v3235 = vmul.f32 %v3187, 1.442695
        %v3236 = vpow.pop %v3235
        %v3237 = vmul.f32 %v3188, 1.442695
        %v3238 = vpow.pop %v3237
        %v3239 = vmul.f32 %v3189, 1.442695
        %v3240 = vpow.pop %v3239
        %v3241 = vmul.f32 %v3190, 1.442695
        %v3242 = vpow.pop %v3241
        %v3243 = vmul.f32 %v3191, 1.442695
        %v3244 = vpow.pop %v3243
        %v3245 = vmul.f32 %v3192, 1.442695
        %v3246 = vpow.pop %v3245
        %v3247 = vmul.f32 %v3193, 1.442695
        %v3248 = vpow.pop %v3247
        %v3249 = vmul.f32 %v3194, 1.442695
        %v3250 = vpow.pop %v3249
        %v3251 = vmul.f32 %v3195, 1.442695
        %v3252 = vpow.pop %v3251
        %v3253 = vmul.f32 %v3196, 1.442695
        %v3254 = vpow.pop %v3253
        %v3255 = vmul.f32 %v3197, 1.442695
        %v3256 = vpow.pop %v3255
        %v3257 = vmul.f32 %v3198, 1.442695
        %v3258 = vpow.pop %v3257
        %v3259 = vmul.f32 %v3199, 1.442695
        %v3260 = vpow.pop %v3259
        %v3261 = vmul.f32 %v3200, 1.442695
        %v3262 = vpow.pop %v3261
        %v3263 = vmul.f32 %v3201, 1.442695
        %v3264 = vpow.pop %v3263
        %v3265 = vmul.f32 %v3202, 1.442695
        %v3266 = vpow.pop %v3265
        %v3267 = vmul.f32 %v315, %v3204
        %v3268 = vmul.f32 %v316, %v3206
        %v3269 = vmul.f32 %v317, %v3208
        %v3270 = vmul.f32 %v318, %v3210
        %v3271 = vmul.f32 %v319, %v3212
        %v3272 = vmul.f32 %v320, %v3214
        %v3273 = vmul.f32 %v321, %v3216
        %v3274 = vmul.f32 %v322, %v3218
        %v3275 = vmul.f32 %v323, %v3220
        %v3276 = vmul.f32 %v324, %v3222
        %v3277 = vmul.f32 %v325, %v3224
        %v3278 = vmul.f32 %v326, %v3226
        %v3279 = vmul.f32 %v327, %v3228
        %v3280 = vmul.f32 %v328, %v3230
        %v3281 = vmul.f32 %v329, %v3232
        %v3282 = vmul.f32 %v330, %v3234
        %v3283 = vmul.f32 %v331, %v3236
        %v3284 = vmul.f32 %v332, %v3238
        %v3285 = vmul.f32 %v333, %v3240
        %v3286 = vmul.f32 %v334, %v3242
        %v3287 = vmul.f32 %v335, %v3244
        %v3288 = vmul.f32 %v336, %v3246
        %v3289 = vmul.f32 %v337, %v3248
        %v3290 = vmul.f32 %v338, %v3250
        %v3291 = vmul.f32 %v339, %v3252
        %v3292 = vmul.f32 %v340, %v3254
        %v3293 = vmul.f32 %v341, %v3256
        %v3294 = vmul.f32 %v342, %v3258
        %v3295 = vmul.f32 %v343, %v3260
        %v3296 = vmul.f32 %v344, %v3262
        %v3297 = vmul.f32 %v345, %v3264
        %v3298 = vmul.f32 %v346, %v3266
        %v3299 = vadd.f32 %v3267, %v3268
        %3300 = vadd.xlane.f32.xlu0 %v3299
        %v3301 = vpop.xlane.xlu0 %3300
        %v3302 = vadd.f32 %v3269, %v3270
        %3303 = vadd.xlane.f32.xlu0 %v3302
        %v3304 = vpop.xlane.xlu0 %3303
        %v3305 = vadd.f32 %v3271, %v3272
        %3306 = vadd.xlane.f32.xlu0 %v3305
        %v3307 = vpop.xlane.xlu0 %3306
        %v3308 = vadd.f32 %v3273, %v3274
        %3309 = vadd.xlane.f32.xlu0 %v3308
        %v3310 = vpop.xlane.xlu0 %3309
        %v3311 = vadd.f32 %v3275, %v3276
        %3312 = vadd.xlane.f32.xlu0 %v3311
        %v3313 = vpop.xlane.xlu0 %3312
        %v3314 = vadd.f32 %v3277, %v3278
        %3315 = vadd.xlane.f32.xlu0 %v3314
        %v3316 = vpop.xlane.xlu0 %3315
        %v3317 = vadd.f32 %v3279, %v3280
        %3318 = vadd.xlane.f32.xlu0 %v3317
        %v3319 = vpop.xlane.xlu0 %3318
        %v3320 = vadd.f32 %v3281, %v3282
        %3321 = vadd.xlane.f32.xlu0 %v3320
        %v3322 = vpop.xlane.xlu0 %3321
        %v3323 = vadd.f32 %v3283, %v3284
        %3324 = vadd.xlane.f32.xlu0 %v3323
        %v3325 = vpop.xlane.xlu0 %3324
        %v3326 = vadd.f32 %v3285, %v3286
        %3327 = vadd.xlane.f32.xlu0 %v3326
        %v3328 = vpop.xlane.xlu0 %3327
        %v3329 = vadd.f32 %v3287, %v3288
        %3330 = vadd.xlane.f32.xlu0 %v3329
        %v3331 = vpop.xlane.xlu0 %3330
        %v3332 = vadd.f32 %v3289, %v3290
        %3333 = vadd.xlane.f32.xlu0 %v3332
        %v3334 = vpop.xlane.xlu0 %3333
        %v3335 = vadd.f32 %v3291, %v3292
        %3336 = vadd.xlane.f32.xlu0 %v3335
        %v3337 = vpop.xlane.xlu0 %3336
        %v3338 = vadd.f32 %v3293, %v3294
        %3339 = vadd.xlane.f32.xlu0 %v3338
        %v3340 = vpop.xlane.xlu0 %3339
        %v3341 = vadd.f32 %v3295, %v3296
        %3342 = vadd.xlane.f32.xlu0 %v3341
        %v3343 = vpop.xlane.xlu0 %3342
        %v3344 = vadd.f32 %v3297, %v3298
        %3345 = vadd.xlane.f32.xlu0 %v3344
        %v3346 = vpop.xlane.xlu0 %3345
        %v3347 = vmax.f32 %v3301, 1e-30
        %v3348 = vmax.f32 %v3304, 1e-30
        %v3349 = vmax.f32 %v3307, 1e-30
        %v3350 = vmax.f32 %v3310, 1e-30
        %v3351 = vmax.f32 %v3313, 1e-30
        %v3352 = vmax.f32 %v3316, 1e-30
        %v3353 = vmax.f32 %v3319, 1e-30
        %v3354 = vmax.f32 %v3322, 1e-30
        %v3355 = vmax.f32 %v3325, 1e-30
        %v3356 = vmax.f32 %v3328, 1e-30
        %v3357 = vmax.f32 %v3331, 1e-30
        %v3358 = vmax.f32 %v3334, 1e-30
        %v3359 = vmax.f32 %v3337, 1e-30
        %v3360 = vmax.f32 %v3340, 1e-30
        %v3361 = vmax.f32 %v3343, 1e-30
        %v3362 = vmax.f32 %v3346, 1e-30
        %v3363 = vpack.c.bf16 %v3269, %v3267
        %v3364 = vpack.c.bf16 %v3270, %v3268
        %v3365 = vpack.c.bf16 %v3273, %v3271
        %v3366 = vpack.c.bf16 %v3274, %v3272
        %v3367 = vpack.c.bf16 %v3277, %v3275
        %v3368 = vpack.c.bf16 %v3278, %v3276
        %v3369 = vpack.c.bf16 %v3281, %v3279
        %v3370 = vpack.c.bf16 %v3282, %v3280
        %v3371 = vpack.c.bf16 %v3285, %v3283
        %v3372 = vpack.c.bf16 %v3286, %v3284
        %v3373 = vpack.c.bf16 %v3289, %v3287
        %v3374 = vpack.c.bf16 %v3290, %v3288
        %v3375 = vpack.c.bf16 %v3293, %v3291
        %v3376 = vpack.c.bf16 %v3294, %v3292
        %v3377 = vpack.c.bf16 %v3297, %v3295
        %v3378 = vpack.c.bf16 %v3298, %v3296
        %v3379 = vpack.c.bf16 %v2673, %v2671
        %v3380 = vpack.c.bf16 %v2678, %v2676
        %v3381 = vpack.c.bf16 %v2683, %v2681
        %v3382 = vpack.c.bf16 %v2688, %v2686
        %v3383 = vpack.c.bf16 %v2693, %v2691
        %v3384 = vpack.c.bf16 %v2698, %v2696
        %v3385 = vpack.c.bf16 %v2703, %v2701
        %v3386 = vpack.c.bf16 %v2708, %v2706
        %v3387 = vpack.c.bf16 %v2713, %v2711
        %v3388 = vpack.c.bf16 %v2718, %v2716
        %v3389 = vpack.c.bf16 %v2723, %v2721
        %v3390 = vpack.c.bf16 %v2728, %v2726
        %v3391 = vpack.c.bf16 %v2733, %v2731
        %v3392 = vpack.c.bf16 %v2738, %v2736
        %v3393 = vpack.c.bf16 %v2743, %v2741
        %v3394 = vpack.c.bf16 %v2748, %v2746
        %3395 = vmatpush.bf16.msra.mxu0 %v3386
        %3396 = vmatpush.bf16.msra.mxu0 %v3385
        %3397 = vmatpush.bf16.msra.mxu0 %v3384
        %3398 = vmatpush.bf16.msra.mxu0 %v3383
        %3399 = vmatpush.bf16.msra.mxu0 %v3382
        %3400 = vmatpush.bf16.msra.mxu0 %v3381
        %3401 = vmatpush.bf16.msra.mxu0 %v3380
        %3402 = vmatpush.bf16.msra.mxu0 %v3379
        %3403 = vmatmul.bf16.gmra.mxu0 %v3363
        %v3404 = vpop.f32.mrf.mxu0
        %v3405 = vadd.f32 0.0, %v3404
        %v3406 = vpop.f32.mrf.mxu0
        %v3407 = vadd.f32 0.0, %v3406
        %3408 = vmatmul.bf16.gmra.mxu0 %v3365
        %v3409 = vpop.f32.mrf.mxu0
        %v3410 = vadd.f32 0.0, %v3409
        %v3411 = vpop.f32.mrf.mxu0
        %v3412 = vadd.f32 0.0, %v3411
        %3413 = vmatmul.bf16.gmra.mxu0 %v3367
        %v3414 = vpop.f32.mrf.mxu0
        %v3415 = vadd.f32 0.0, %v3414
        %v3416 = vpop.f32.mrf.mxu0
        %v3417 = vadd.f32 0.0, %v3416
        %3418 = vmatmul.bf16.gmra.mxu0 %v3369
        %v3419 = vpop.f32.mrf.mxu0
        %v3420 = vadd.f32 0.0, %v3419
        %v3421 = vpop.f32.mrf.mxu0
        %v3422 = vadd.f32 0.0, %v3421
        %3423 = vmatmul.bf16.gmra.mxu0 %v3371
        %v3424 = vpop.f32.mrf.mxu0
        %v3425 = vadd.f32 0.0, %v3424
        %v3426 = vpop.f32.mrf.mxu0
        %v3427 = vadd.f32 0.0, %v3426
        %3428 = vmatmul.bf16.gmra.mxu0 %v3373
        %v3429 = vpop.f32.mrf.mxu0
        %v3430 = vadd.f32 0.0, %v3429
        %v3431 = vpop.f32.mrf.mxu0
        %v3432 = vadd.f32 0.0, %v3431
        %3433 = vmatmul.bf16.gmra.mxu0 %v3375
        %v3434 = vpop.f32.mrf.mxu0
        %v3435 = vadd.f32 0.0, %v3434
        %v3436 = vpop.f32.mrf.mxu0
        %v3437 = vadd.f32 0.0, %v3436
        %3438 = vmatmul.bf16.gmra.mxu0 %v3377
        %v3439 = vpop.f32.mrf.mxu0
        %v3440 = vadd.f32 0.0, %v3439
        %v3441 = vpop.f32.mrf.mxu0
        %v3442 = vadd.f32 0.0, %v3441
        %3443 = vdwg.mxu0
        %3444 = vmatpush.bf16.msra.mxu0 %v3394
        %3445 = vmatpush.bf16.msra.mxu0 %v3393
        %3446 = vmatpush.bf16.msra.mxu0 %v3392
        %3447 = vmatpush.bf16.msra.mxu0 %v3391
        %3448 = vmatpush.bf16.msra.mxu0 %v3390
        %3449 = vmatpush.bf16.msra.mxu0 %v3389
        %3450 = vmatpush.bf16.msra.mxu0 %v3388
        %3451 = vmatpush.bf16.msra.mxu0 %v3387
        %3452 = vmatmul.bf16.gmra.mxu0 %v3364
        %v3453 = vpop.f32.mrf.mxu0
        %v3454 = vadd.f32 %v3405, %v3453
        %v3455 = vpop.f32.mrf.mxu0
        %v3456 = vadd.f32 %v3407, %v3455
        %3457 = vmatmul.bf16.gmra.mxu0 %v3366
        %v3458 = vpop.f32.mrf.mxu0
        %v3459 = vadd.f32 %v3410, %v3458
        %v3460 = vpop.f32.mrf.mxu0
        %v3461 = vadd.f32 %v3412, %v3460
        %3462 = vmatmul.bf16.gmra.mxu0 %v3368
        %v3463 = vpop.f32.mrf.mxu0
        %v3464 = vadd.f32 %v3415, %v3463
        %v3465 = vpop.f32.mrf.mxu0
        %v3466 = vadd.f32 %v3417, %v3465
        %3467 = vmatmul.bf16.gmra.mxu0 %v3370
        %v3468 = vpop.f32.mrf.mxu0
        %v3469 = vadd.f32 %v3420, %v3468
        %v3470 = vpop.f32.mrf.mxu0
        %v3471 = vadd.f32 %v3422, %v3470
        %3472 = vmatmul.bf16.gmra.mxu0 %v3372
        %v3473 = vpop.f32.mrf.mxu0
        %v3474 = vadd.f32 %v3425, %v3473
        %v3475 = vpop.f32.mrf.mxu0
        %v3476 = vadd.f32 %v3427, %v3475
        %3477 = vmatmul.bf16.gmra.mxu0 %v3374
        %v3478 = vpop.f32.mrf.mxu0
        %v3479 = vadd.f32 %v3430, %v3478
        %v3480 = vpop.f32.mrf.mxu0
        %v3481 = vadd.f32 %v3432, %v3480
        %3482 = vmatmul.bf16.gmra.mxu0 %v3376
        %v3483 = vpop.f32.mrf.mxu0
        %v3484 = vadd.f32 %v3435, %v3483
        %v3485 = vpop.f32.mrf.mxu0
        %v3486 = vadd.f32 %v3437, %v3485
        %3487 = vmatmul.bf16.gmra.mxu0 %v3378
        %v3488 = vpop.f32.mrf.mxu0
        %v3489 = vadd.f32 %v3440, %v3488
        %v3490 = vpop.f32.mrf.mxu0
        %v3491 = vadd.f32 %v3442, %v3490
        %3492 = vdwg.mxu0
        %v3493 = vrcp.pop %v3347
        %v3494 = vrcp.pop %v3348
        %v3495 = vrcp.pop %v3349
        %v3496 = vrcp.pop %v3350
        %v3497 = vrcp.pop %v3351
        %v3498 = vrcp.pop %v3352
        %v3499 = vrcp.pop %v3353
        %v3500 = vrcp.pop %v3354
        %v3501 = vrcp.pop %v3355
        %v3502 = vrcp.pop %v3356
        %v3503 = vrcp.pop %v3357
        %v3504 = vrcp.pop %v3358
        %v3505 = vrcp.pop %v3359
        %v3506 = vrcp.pop %v3360
        %v3507 = vrcp.pop %v3361
        %v3508 = vrcp.pop %v3362
        %v3509 = vmul.f32 %v3347, %v3493
        %v3510 = vmul.f32 %v3348, %v3494
        %v3511 = vmul.f32 %v3349, %v3495
        %v3512 = vmul.f32 %v3350, %v3496
        %v3513 = vmul.f32 %v3351, %v3497
        %v3514 = vmul.f32 %v3352, %v3498
        %v3515 = vmul.f32 %v3353, %v3499
        %v3516 = vmul.f32 %v3354, %v3500
        %v3517 = vmul.f32 %v3355, %v3501
        %v3518 = vmul.f32 %v3356, %v3502
        %v3519 = vmul.f32 %v3357, %v3503
        %v3520 = vmul.f32 %v3358, %v3504
        %v3521 = vmul.f32 %v3359, %v3505
        %v3522 = vmul.f32 %v3360, %v3506
        %v3523 = vmul.f32 %v3361, %v3507
        %v3524 = vmul.f32 %v3362, %v3508
        %v3525 = vsub.f32 2.0, %v3509
        %v3526 = vsub.f32 2.0, %v3510
        %v3527 = vsub.f32 2.0, %v3511
        %v3528 = vsub.f32 2.0, %v3512
        %v3529 = vsub.f32 2.0, %v3513
        %v3530 = vsub.f32 2.0, %v3514
        %v3531 = vsub.f32 2.0, %v3515
        %v3532 = vsub.f32 2.0, %v3516
        %v3533 = vsub.f32 2.0, %v3517
        %v3534 = vsub.f32 2.0, %v3518
        %v3535 = vsub.f32 2.0, %v3519
        %v3536 = vsub.f32 2.0, %v3520
        %v3537 = vsub.f32 2.0, %v3521
        %v3538 = vsub.f32 2.0, %v3522
        %v3539 = vsub.f32 2.0, %v3523
        %v3540 = vsub.f32 2.0, %v3524
        %v3541 = vmul.f32 %v3493, %v3525
        %v3542 = vmul.f32 %v3494, %v3526
        %v3543 = vmul.f32 %v3495, %v3527
        %v3544 = vmul.f32 %v3496, %v3528
        %v3545 = vmul.f32 %v3497, %v3529
        %v3546 = vmul.f32 %v3498, %v3530
        %v3547 = vmul.f32 %v3499, %v3531
        %v3548 = vmul.f32 %v3500, %v3532
        %v3549 = vmul.f32 %v3501, %v3533
        %v3550 = vmul.f32 %v3502, %v3534
        %v3551 = vmul.f32 %v3503, %v3535
        %v3552 = vmul.f32 %v3504, %v3536
        %v3553 = vmul.f32 %v3505, %v3537
        %v3554 = vmul.f32 %v3506, %v3538
        %v3555 = vmul.f32 %v3507, %v3539
        %v3556 = vmul.f32 %v3508, %v3540
        %v3557 = vmul.f32 %v3454, %v3541
        %v3558 = vmul.f32 %v3456, %v3542
        %v3559 = vmul.f32 %v3459, %v3543
        %v3560 = vmul.f32 %v3461, %v3544
        %v3561 = vmul.f32 %v3464, %v3545
        %v3562 = vmul.f32 %v3466, %v3546
        %v3563 = vmul.f32 %v3469, %v3547
        %v3564 = vmul.f32 %v3471, %v3548
        %v3565 = vmul.f32 %v3474, %v3549
        %v3566 = vmul.f32 %v3476, %v3550
        %v3567 = vmul.f32 %v3479, %v3551
        %v3568 = vmul.f32 %v3481, %v3552
        %v3569 = vmul.f32 %v3484, %v3553
        %v3570 = vmul.f32 %v3486, %v3554
        %v3571 = vmul.f32 %v3489, %v3555
        %v3572 = vmul.f32 %v3491, %v3556
        %vm3573 = vcmp.gt.f32.partialorder %v3557, 0.0
        %vm3574 = vcmp.gt.f32.partialorder %v3558, 0.0
        %vm3575 = vcmp.gt.f32.partialorder %v3559, 0.0
        %vm3576 = vcmp.gt.f32.partialorder %v3560, 0.0
        %vm3577 = vcmp.gt.f32.partialorder %v3561, 0.0
        %vm3578 = vcmp.gt.f32.partialorder %v3562, 0.0
        %vm3579 = vcmp.gt.f32.partialorder %v3563, 0.0
        %vm3580 = vcmp.gt.f32.partialorder %v3564, 0.0
        %vm3581 = vcmp.gt.f32.partialorder %v3565, 0.0
        %vm3582 = vcmp.gt.f32.partialorder %v3566, 0.0
        %vm3583 = vcmp.gt.f32.partialorder %v3567, 0.0
        %vm3584 = vcmp.gt.f32.partialorder %v3568, 0.0
        %vm3585 = vcmp.gt.f32.partialorder %v3569, 0.0
        %vm3586 = vcmp.gt.f32.partialorder %v3570, 0.0
        %vm3587 = vcmp.gt.f32.partialorder %v3571, 0.0
        %vm3588 = vcmp.gt.f32.partialorder %v3572, 0.0
        %v3589 = vmin.f32 %v3557, 0.0
        %v3590 = vmin.f32 %v3558, 0.0
        %v3591 = vmin.f32 %v3559, 0.0
        %v3592 = vmin.f32 %v3560, 0.0
        %v3593 = vmin.f32 %v3561, 0.0
        %v3594 = vmin.f32 %v3562, 0.0
        %v3595 = vmin.f32 %v3563, 0.0
        %v3596 = vmin.f32 %v3564, 0.0
        %v3597 = vmin.f32 %v3565, 0.0
        %v3598 = vmin.f32 %v3566, 0.0
        %v3599 = vmin.f32 %v3567, 0.0
        %v3600 = vmin.f32 %v3568, 0.0
        %v3601 = vmin.f32 %v3569, 0.0
        %v3602 = vmin.f32 %v3570, 0.0
        %v3603 = vmin.f32 %v3571, 0.0
        %v3604 = vmin.f32 %v3572, 0.0
        %v3605 = vmul.f32 %v3589, 1.442695
        %v3606 = vpow.pop %v3605
        %v3607 = vmul.f32 %v3590, 1.442695
        %v3608 = vpow.pop %v3607
        %v3609 = vmul.f32 %v3591, 1.442695
        %v3610 = vpow.pop %v3609
        %v3611 = vmul.f32 %v3592, 1.442695
        %v3612 = vpow.pop %v3611
        %v3613 = vmul.f32 %v3593, 1.442695
        %v3614 = vpow.pop %v3613
        %v3615 = vmul.f32 %v3594, 1.442695
        %v3616 = vpow.pop %v3615
        %v3617 = vmul.f32 %v3595, 1.442695
        %v3618 = vpow.pop %v3617
        %v3619 = vmul.f32 %v3596, 1.442695
        %v3620 = vpow.pop %v3619
        %v3621 = vmul.f32 %v3597, 1.442695
        %v3622 = vpow.pop %v3621
        %v3623 = vmul.f32 %v3598, 1.442695
        %v3624 = vpow.pop %v3623
        %v3625 = vmul.f32 %v3599, 1.442695
        %v3626 = vpow.pop %v3625
        %v3627 = vmul.f32 %v3600, 1.442695
        %v3628 = vpow.pop %v3627
        %v3629 = vmul.f32 %v3601, 1.442695
        %v3630 = vpow.pop %v3629
        %v3631 = vmul.f32 %v3602, 1.442695
        %v3632 = vpow.pop %v3631
        %v3633 = vmul.f32 %v3603, 1.442695
        %v3634 = vpow.pop %v3633
        %v3635 = vmul.f32 %v3604, 1.442695
        %v3636 = vpow.pop %v3635
        %v3637 = vsub.f32 %v3606, 1.0
        %v3638 = vsub.f32 %v3608, 1.0
        %v3639 = vsub.f32 %v3610, 1.0
        %v3640 = vsub.f32 %v3612, 1.0
        %v3641 = vsub.f32 %v3614, 1.0
        %v3642 = vsub.f32 %v3616, 1.0
        %v3643 = vsub.f32 %v3618, 1.0
        %v3644 = vsub.f32 %v3620, 1.0
        %v3645 = vsub.f32 %v3622, 1.0
        %v3646 = vsub.f32 %v3624, 1.0
        %v3647 = vsub.f32 %v3626, 1.0
        %v3648 = vsub.f32 %v3628, 1.0
        %v3649 = vsub.f32 %v3630, 1.0
        %v3650 = vsub.f32 %v3632, 1.0
        %v3651 = vsub.f32 %v3634, 1.0
        %v3652 = vsub.f32 %v3636, 1.0
        %v3653 = vsel %vm3573, %v3557, %v3637
        %v3654 = vsel %vm3574, %v3558, %v3638
        %v3655 = vsel %vm3575, %v3559, %v3639
        %v3656 = vsel %vm3576, %v3560, %v3640
        %v3657 = vsel %vm3577, %v3561, %v3641
        %v3658 = vsel %vm3578, %v3562, %v3642
        %v3659 = vsel %vm3579, %v3563, %v3643
        %v3660 = vsel %vm3580, %v3564, %v3644
        %v3661 = vsel %vm3581, %v3565, %v3645
        %v3662 = vsel %vm3582, %v3566, %v3646
        %v3663 = vsel %vm3583, %v3567, %v3647
        %v3664 = vsel %vm3584, %v3568, %v3648
        %v3665 = vsel %vm3585, %v3569, %v3649
        %v3666 = vsel %vm3586, %v3570, %v3650
        %v3667 = vsel %vm3587, %v3571, %v3651
        %v3668 = vsel %vm3588, %v3572, %v3652
        %s3669 = scalar_lea.vmem %s259, 256 [#allocation2]
        %3670 = vst.msk [vmem:[%s3669] sm:$0xff] %vm483, %v3653
        %3671 = vst.msk [vmem:[%s3669 + $0x8] sm:$0xff] %vm483, %v3654
        %3672 = vst.msk [vmem:[%s3669 + $0x10] sm:$0xff] %vm483, %v3655
        %3673 = vst.msk [vmem:[%s3669 + $0x18] sm:$0xff] %vm483, %v3656
        %3674 = vst.msk [vmem:[%s3669 + $0x20] sm:$0xff] %vm483, %v3657
        %3675 = vst.msk [vmem:[%s3669 + $0x28] sm:$0xff] %vm483, %v3658
        %3676 = vst.msk [vmem:[%s3669 + $0x30] sm:$0xff] %vm483, %v3659
        %3677 = vst.msk [vmem:[%s3669 + $0x38] sm:$0xff] %vm483, %v3660
        %3678 = vst.msk [vmem:[%s3669 + $0x40] sm:$0xff] %vm483, %v3661
        %3679 = vst.msk [vmem:[%s3669 + $0x48] sm:$0xff] %vm483, %v3662
        %3680 = vst.msk [vmem:[%s3669 + $0x50] sm:$0xff] %vm483, %v3663
        %3681 = vst.msk [vmem:[%s3669 + $0x58] sm:$0xff] %vm483, %v3664
        %3682 = vst.msk [vmem:[%s3669 + $0x60] sm:$0xff] %vm483, %v3665
        %3683 = vst.msk [vmem:[%s3669 + $0x68] sm:$0xff] %vm483, %v3666
        %3684 = vst.msk [vmem:[%s3669 + $0x70] sm:$0xff] %vm483, %v3667
        %3685 = vst.msk [vmem:[%s3669 + $0x78] sm:$0xff] %vm483, %v3668
        %s3686 = scalar_lea.vmem %s3, 24
        %v3687 = vld [vmem:[%s3686] sm:$0xf]
        %v3688 = vld [vmem:[%s3686 + $0x4] sm:$0xf]
        %v3691 = vunpack.c.l.b16 %v3687
        %v3692 = vunpack.c.l.b16 %v3688
        %v3693 = vpack.c.b16 %v3692, %v3691
        %3695 = vmatpush.bf16.msra.mxu0 0
        %3696 = vmatpush.bf16.msra.mxu0 0
        %3697 = vmatpush.bf16.msra.mxu0 0
        %3698 = vmatpush.bf16.msra.mxu0 0
        %3699 = vmatpush.bf16.msra.mxu0 0
        %3700 = vmatpush.bf16.msra.mxu0 0
        %3701 = vmatpush.bf16.msra.mxu0 0
        %3702 = vmatpush.bf16.msra.mxu0 %v3693
        %3703 = vmatmul.bf16.gmra.mxu0 %v485
        %v3704 = vpop.f32.mrf.mxu0
        %v3705 = vadd.f32 0.0, %v3704
        %v3706 = vpop.f32.mrf.mxu0
        %v3707 = vadd.f32 0.0, %v3706
        %3708 = vmatmul.bf16.gmra.mxu0 %v488
        %v3709 = vpop.f32.mrf.mxu0
        %v3710 = vadd.f32 0.0, %v3709
        %v3711 = vpop.f32.mrf.mxu0
        %v3712 = vadd.f32 0.0, %v3711
        %3713 = vmatmul.bf16.gmra.mxu0 %v491
        %v3714 = vpop.f32.mrf.mxu0
        %v3715 = vadd.f32 0.0, %v3714
        %v3716 = vpop.f32.mrf.mxu0
        %v3717 = vadd.f32 0.0, %v3716
        %3718 = vmatmul.bf16.gmra.mxu0 %v494
        %v3719 = vpop.f32.mrf.mxu0
        %v3720 = vadd.f32 0.0, %v3719
        %v3721 = vpop.f32.mrf.mxu0
        %v3722 = vadd.f32 0.0, %v3721
        %3723 = vmatmul.bf16.gmra.mxu0 %v497
        %v3724 = vpop.f32.mrf.mxu0
        %v3725 = vadd.f32 0.0, %v3724
        %v3726 = vpop.f32.mrf.mxu0
        %v3727 = vadd.f32 0.0, %v3726
        %3728 = vmatmul.bf16.gmra.mxu0 %v500
        %v3729 = vpop.f32.mrf.mxu0
        %v3730 = vadd.f32 0.0, %v3729
        %v3731 = vpop.f32.mrf.mxu0
        %v3732 = vadd.f32 0.0, %v3731
        %3733 = vmatmul.bf16.gmra.mxu0 %v503
        %v3734 = vpop.f32.mrf.mxu0
        %v3735 = vadd.f32 0.0, %v3734
        %v3736 = vpop.f32.mrf.mxu0
        %v3737 = vadd.f32 0.0, %v3736
        %3738 = vmatmul.bf16.gmra.mxu0 %v506
        %v3739 = vpop.f32.mrf.mxu0
        %v3740 = vadd.f32 0.0, %v3739
        %v3741 = vpop.f32.mrf.mxu0
        %v3742 = vadd.f32 0.0, %v3741
        %3743 = vmatmul.bf16.gmra.mxu0 %v509
        %v3744 = vpop.f32.mrf.mxu0
        %v3745 = vadd.f32 0.0, %v3744
        %v3746 = vpop.f32.mrf.mxu0
        %v3747 = vadd.f32 0.0, %v3746
        %3748 = vmatmul.bf16.gmra.mxu0 %v512
        %v3749 = vpop.f32.mrf.mxu0
        %v3750 = vadd.f32 0.0, %v3749
        %v3751 = vpop.f32.mrf.mxu0
        %v3752 = vadd.f32 0.0, %v3751
        %3753 = vmatmul.bf16.gmra.mxu0 %v515
        %v3754 = vpop.f32.mrf.mxu0
        %v3755 = vadd.f32 0.0, %v3754
        %v3756 = vpop.f32.mrf.mxu0
        %v3757 = vadd.f32 0.0, %v3756
        %3758 = vmatmul.bf16.gmra.mxu0 %v518
        %v3759 = vpop.f32.mrf.mxu0
        %v3760 = vadd.f32 0.0, %v3759
        %v3761 = vpop.f32.mrf.mxu0
        %v3762 = vadd.f32 0.0, %v3761
        %3763 = vmatmul.bf16.gmra.mxu0 %v521
        %v3764 = vpop.f32.mrf.mxu0
        %v3765 = vadd.f32 0.0, %v3764
        %v3766 = vpop.f32.mrf.mxu0
        %v3767 = vadd.f32 0.0, %v3766
        %3768 = vmatmul.bf16.gmra.mxu0 %v524
        %v3769 = vpop.f32.mrf.mxu0
        %v3770 = vadd.f32 0.0, %v3769
        %v3771 = vpop.f32.mrf.mxu0
        %v3772 = vadd.f32 0.0, %v3771
        %3773 = vmatmul.bf16.gmra.mxu0 %v527
        %v3774 = vpop.f32.mrf.mxu0
        %v3775 = vadd.f32 0.0, %v3774
        %v3776 = vpop.f32.mrf.mxu0
        %v3777 = vadd.f32 0.0, %v3776
        %3778 = vmatmul.bf16.gmra.mxu0 %v530
        %v3779 = vpop.f32.mrf.mxu0
        %v3780 = vadd.f32 0.0, %v3779
        %v3781 = vpop.f32.mrf.mxu0
        %v3782 = vadd.f32 0.0, %v3781
        %3783 = vdwg.mxu0
        %3784 = vmatpush.bf16.msra.mxu0 0
        %3785 = vmatpush.bf16.msra.mxu0 0
        %3786 = vmatpush.bf16.msra.mxu0 0
        %3787 = vmatpush.bf16.msra.mxu0 0
        %3788 = vmatpush.bf16.msra.mxu0 0
        %3789 = vmatpush.bf16.msra.mxu0 0
        %3790 = vmatpush.bf16.msra.mxu0 0
        %3791 = vmatpush.bf16.msra.mxu0 %v3693
        %3792 = vmatmul.bf16.gmra.mxu0 %v662
        %v3793 = vpop.f32.mrf.mxu0
        %v3794 = vadd.f32 0.0, %v3793
        %v3795 = vpop.f32.mrf.mxu0
        %v3796 = vadd.f32 0.0, %v3795
        %3797 = vmatmul.bf16.gmra.mxu0 %v665
        %v3798 = vpop.f32.mrf.mxu0
        %v3799 = vadd.f32 0.0, %v3798
        %v3800 = vpop.f32.mrf.mxu0
        %v3801 = vadd.f32 0.0, %v3800
        %3802 = vmatmul.bf16.gmra.mxu0 %v668
        %v3803 = vpop.f32.mrf.mxu0
        %v3804 = vadd.f32 0.0, %v3803
        %v3805 = vpop.f32.mrf.mxu0
        %v3806 = vadd.f32 0.0, %v3805
        %3807 = vmatmul.bf16.gmra.mxu0 %v671
        %v3808 = vpop.f32.mrf.mxu0
        %v3809 = vadd.f32 0.0, %v3808
        %v3810 = vpop.f32.mrf.mxu0
        %v3811 = vadd.f32 0.0, %v3810
        %3812 = vmatmul.bf16.gmra.mxu0 %v674
        %v3813 = vpop.f32.mrf.mxu0
        %v3814 = vadd.f32 0.0, %v3813
        %v3815 = vpop.f32.mrf.mxu0
        %v3816 = vadd.f32 0.0, %v3815
        %3817 = vmatmul.bf16.gmra.mxu0 %v677
        %v3818 = vpop.f32.mrf.mxu0
        %v3819 = vadd.f32 0.0, %v3818
        %v3820 = vpop.f32.mrf.mxu0
        %v3821 = vadd.f32 0.0, %v3820
        %3822 = vmatmul.bf16.gmra.mxu0 %v680
        %v3823 = vpop.f32.mrf.mxu0
        %v3824 = vadd.f32 0.0, %v3823
        %v3825 = vpop.f32.mrf.mxu0
        %v3826 = vadd.f32 0.0, %v3825
        %3827 = vmatmul.bf16.gmra.mxu0 %v683
        %v3828 = vpop.f32.mrf.mxu0
        %v3829 = vadd.f32 0.0, %v3828
        %v3830 = vpop.f32.mrf.mxu0
        %v3831 = vadd.f32 0.0, %v3830
        %3832 = vdwg.mxu0
        %s3833 = scalar_lea.vmem %s4, 3
        %v3834 = vld [vmem:[%s3833] sm:$0x1]
        %s3835 = scalar_lea.vmem %s5, 3
        %v3836 = vld [vmem:[%s3835] sm:$0x1]
        %v3838 = vperm.slane %v3834, 0
        %v3840 = vmul.f32 %v3794, %v3838
        %v3841 = vmul.f32 %v3796, %v3838
        %v3842 = vmul.f32 %v3799, %v3838
        %v3843 = vmul.f32 %v3801, %v3838
        %v3844 = vmul.f32 %v3804, %v3838
        %v3845 = vmul.f32 %v3806, %v3838
        %v3846 = vmul.f32 %v3809, %v3838
        %v3847 = vmul.f32 %v3811, %v3838
        %v3848 = vmul.f32 %v3814, %v3838
        %v3849 = vmul.f32 %v3816, %v3838
        %v3850 = vmul.f32 %v3819, %v3838
        %v3851 = vmul.f32 %v3821, %v3838
        %v3852 = vmul.f32 %v3824, %v3838
        %v3853 = vmul.f32 %v3826, %v3838
        %v3854 = vmul.f32 %v3829, %v3838
        %v3855 = vmul.f32 %v3831, %v3838
        %v3856 = vsel %vm483, %v3840, 0.0
        %3857 = vadd.xlane.f32.xlu0 %v3856
        %v3858 = vpop.xlane.xlu0 %3857
        %v3859 = vsel %vm483, %v3841, 0.0
        %3860 = vadd.xlane.f32.xlu0 %v3859
        %v3861 = vpop.xlane.xlu0 %3860
        %v3862 = vsel %vm483, %v3842, 0.0
        %3863 = vadd.xlane.f32.xlu0 %v3862
        %v3864 = vpop.xlane.xlu0 %3863
        %v3865 = vsel %vm483, %v3843, 0.0
        %3866 = vadd.xlane.f32.xlu0 %v3865
        %v3867 = vpop.xlane.xlu0 %3866
        %v3868 = vsel %vm483, %v3844, 0.0
        %3869 = vadd.xlane.f32.xlu0 %v3868
        %v3870 = vpop.xlane.xlu0 %3869
        %v3871 = vsel %vm483, %v3845, 0.0
        %3872 = vadd.xlane.f32.xlu0 %v3871
        %v3873 = vpop.xlane.xlu0 %3872
        %v3874 = vsel %vm483, %v3846, 0.0
        %3875 = vadd.xlane.f32.xlu0 %v3874
        %v3876 = vpop.xlane.xlu0 %3875
        %v3877 = vsel %vm483, %v3847, 0.0
        %3878 = vadd.xlane.f32.xlu0 %v3877
        %v3879 = vpop.xlane.xlu0 %3878
        %v3880 = vsel %vm483, %v3848, 0.0
        %3881 = vadd.xlane.f32.xlu0 %v3880
        %v3882 = vpop.xlane.xlu0 %3881
        %v3883 = vsel %vm483, %v3849, 0.0
        %3884 = vadd.xlane.f32.xlu0 %v3883
        %v3885 = vpop.xlane.xlu0 %3884
        %v3886 = vsel %vm483, %v3850, 0.0
        %3887 = vadd.xlane.f32.xlu0 %v3886
        %v3888 = vpop.xlane.xlu0 %3887
        %v3889 = vsel %vm483, %v3851, 0.0
        %3890 = vadd.xlane.f32.xlu0 %v3889
        %v3891 = vpop.xlane.xlu0 %3890
        %v3892 = vsel %vm483, %v3852, 0.0
        %3893 = vadd.xlane.f32.xlu0 %v3892
        %v3894 = vpop.xlane.xlu0 %3893
        %v3895 = vsel %vm483, %v3853, 0.0
        %3896 = vadd.xlane.f32.xlu0 %v3895
        %v3897 = vpop.xlane.xlu0 %3896
        %v3898 = vsel %vm483, %v3854, 0.0
        %3899 = vadd.xlane.f32.xlu0 %v3898
        %v3900 = vpop.xlane.xlu0 %3899
        %v3901 = vsel %vm483, %v3855, 0.0
        %3902 = vadd.xlane.f32.xlu0 %v3901
        %v3903 = vpop.xlane.xlu0 %3902
        %v3905 = vsel %vm483, %v3836, 0
        %v3908 = vsel %vm483, %v3705, 0
        %v3911 = vsel %vm483, %v3707, 0
        %v3914 = vsel %vm483, %v3710, 0
        %v3917 = vsel %vm483, %v3712, 0
        %v3920 = vsel %vm483, %v3715, 0
        %v3923 = vsel %vm483, %v3717, 0
        %v3926 = vsel %vm483, %v3720, 0
        %v3929 = vsel %vm483, %v3722, 0
        %v3932 = vsel %vm483, %v3725, 0
        %v3935 = vsel %vm483, %v3727, 0
        %v3938 = vsel %vm483, %v3730, 0
        %v3941 = vsel %vm483, %v3732, 0
        %v3944 = vsel %vm483, %v3735, 0
        %v3947 = vsel %vm483, %v3737, 0
        %v3950 = vsel %vm483, %v3740, 0
        %v3953 = vsel %vm483, %v3742, 0
        %v3956 = vsel %vm483, %v3745, 0
        %v3959 = vsel %vm483, %v3747, 0
        %v3962 = vsel %vm483, %v3750, 0
        %v3965 = vsel %vm483, %v3752, 0
        %v3968 = vsel %vm483, %v3755, 0
        %v3971 = vsel %vm483, %v3757, 0
        %v3974 = vsel %vm483, %v3760, 0
        %v3977 = vsel %vm483, %v3762, 0
        %v3980 = vsel %vm483, %v3765, 0
        %v3983 = vsel %vm483, %v3767, 0
        %v3986 = vsel %vm483, %v3770, 0
        %v3989 = vsel %vm483, %v3772, 0
        %v3992 = vsel %vm483, %v3775, 0
        %v3995 = vsel %vm483, %v3777, 0
        %v3998 = vsel %vm483, %v3780, 0
        %v4001 = vsel %vm483, %v3782, 0
        %4003 = vmatpush.xpose.msra.mxu0 %v3953
        %4004 = vmatpush.xpose.msra.mxu0 %v3950
        %4005 = vmatpush.xpose.msra.mxu0 %v3947
        %4006 = vmatpush.xpose.msra.mxu0 %v3944
        %4007 = vmatpush.xpose.msra.mxu0 %v3941
        %4008 = vmatpush.xpose.msra.mxu0 %v3938
        %4009 = vmatpush.xpose.msra.mxu0 %v3935
        %4010 = vmatpush.xpose.msra.mxu0 %v3932
        %4011 = vmatpush.xpose.msra.mxu0 %v3929
        %4012 = vmatpush.xpose.msra.mxu0 %v3926
        %4013 = vmatpush.xpose.msra.mxu0 %v3923
        %4014 = vmatpush.xpose.msra.mxu0 %v3920
        %4015 = vmatpush.xpose.msra.mxu0 %v3917
        %4016 = vmatpush.xpose.msra.mxu0 %v3914
        %4017 = vmatpush.xpose.msra.mxu0 %v3911
        %4018 = vmatpush.xpose.msra.mxu0 %v3908
        %4019 = vmatmul.f32.gmra.mxu0 %v3905
        %v4020 = vpop.f32.mrf.mxu0
        %v4021 = vadd.f32 0.0, %v4020
        %4022 = vdwg.mxu0
        %4023 = vmatpush.xpose.msra.mxu0 %v4001
        %4024 = vmatpush.xpose.msra.mxu0 %v3998
        %4025 = vmatpush.xpose.msra.mxu0 %v3995
        %4026 = vmatpush.xpose.msra.mxu0 %v3992
        %4027 = vmatpush.xpose.msra.mxu0 %v3989
        %4028 = vmatpush.xpose.msra.mxu0 %v3986
        %4029 = vmatpush.xpose.msra.mxu0 %v3983
        %4030 = vmatpush.xpose.msra.mxu0 %v3980
        %4031 = vmatpush.xpose.msra.mxu0 %v3977
        %4032 = vmatpush.xpose.msra.mxu0 %v3974
        %4033 = vmatpush.xpose.msra.mxu0 %v3971
        %4034 = vmatpush.xpose.msra.mxu0 %v3968
        %4035 = vmatpush.xpose.msra.mxu0 %v3965
        %4036 = vmatpush.xpose.msra.mxu0 %v3962
        %4037 = vmatpush.xpose.msra.mxu0 %v3959
        %4038 = vmatpush.xpose.msra.mxu0 %v3956
        %4039 = vmatmul.f32.gmra.mxu0 %v3905
        %v4040 = vpop.f32.mrf.mxu0
        %v4041 = vadd.f32 0.0, %v4040
        %4042 = vdwg.mxu0
        %v4043 = vperm.slane %v4021, 0
        %v4044 = vperm.slane %v4041, 0
        %v4045 = vadd.f32 %v3858, %v4043
        %v4046 = vadd.f32 %v3858, %v4044
        %v4047 = vadd.f32 %v3861, %v4043
        %v4048 = vadd.f32 %v3861, %v4044
        %v4049 = vadd.f32 %v3864, %v4043
        %v4050 = vadd.f32 %v3864, %v4044
        %v4051 = vadd.f32 %v3867, %v4043
        %v4052 = vadd.f32 %v3867, %v4044
        %v4053 = vadd.f32 %v3870, %v4043
        %v4054 = vadd.f32 %v3870, %v4044
        %v4055 = vadd.f32 %v3873, %v4043
        %v4056 = vadd.f32 %v3873, %v4044
        %v4057 = vadd.f32 %v3876, %v4043
        %v4058 = vadd.f32 %v3876, %v4044
        %v4059 = vadd.f32 %v3879, %v4043
        %v4060 = vadd.f32 %v3879, %v4044
        %v4061 = vadd.f32 %v3882, %v4043
        %v4062 = vadd.f32 %v3882, %v4044
        %v4063 = vadd.f32 %v3885, %v4043
        %v4064 = vadd.f32 %v3885, %v4044
        %v4065 = vadd.f32 %v3888, %v4043
        %v4066 = vadd.f32 %v3888, %v4044
        %v4067 = vadd.f32 %v3891, %v4043
        %v4068 = vadd.f32 %v3891, %v4044
        %v4069 = vadd.f32 %v3894, %v4043
        %v4070 = vadd.f32 %v3894, %v4044
        %v4071 = vadd.f32 %v3897, %v4043
        %v4072 = vadd.f32 %v3897, %v4044
        %v4073 = vadd.f32 %v3900, %v4043
        %v4074 = vadd.f32 %v3900, %v4044
        %v4075 = vadd.f32 %v3903, %v4043
        %v4076 = vadd.f32 %v3903, %v4044
        %vm4077 = vcmp.gt.f32.partialorder %v4045, 0.0
        %vm4078 = vcmp.gt.f32.partialorder %v4046, 0.0
        %vm4079 = vcmp.gt.f32.partialorder %v4047, 0.0
        %vm4080 = vcmp.gt.f32.partialorder %v4048, 0.0
        %vm4081 = vcmp.gt.f32.partialorder %v4049, 0.0
        %vm4082 = vcmp.gt.f32.partialorder %v4050, 0.0
        %vm4083 = vcmp.gt.f32.partialorder %v4051, 0.0
        %vm4084 = vcmp.gt.f32.partialorder %v4052, 0.0
        %vm4085 = vcmp.gt.f32.partialorder %v4053, 0.0
        %vm4086 = vcmp.gt.f32.partialorder %v4054, 0.0
        %vm4087 = vcmp.gt.f32.partialorder %v4055, 0.0
        %vm4088 = vcmp.gt.f32.partialorder %v4056, 0.0
        %vm4089 = vcmp.gt.f32.partialorder %v4057, 0.0
        %vm4090 = vcmp.gt.f32.partialorder %v4058, 0.0
        %vm4091 = vcmp.gt.f32.partialorder %v4059, 0.0
        %vm4092 = vcmp.gt.f32.partialorder %v4060, 0.0
        %vm4093 = vcmp.gt.f32.partialorder %v4061, 0.0
        %vm4094 = vcmp.gt.f32.partialorder %v4062, 0.0
        %vm4095 = vcmp.gt.f32.partialorder %v4063, 0.0
        %vm4096 = vcmp.gt.f32.partialorder %v4064, 0.0
        %vm4097 = vcmp.gt.f32.partialorder %v4065, 0.0
        %vm4098 = vcmp.gt.f32.partialorder %v4066, 0.0
        %vm4099 = vcmp.gt.f32.partialorder %v4067, 0.0
        %vm4100 = vcmp.gt.f32.partialorder %v4068, 0.0
        %vm4101 = vcmp.gt.f32.partialorder %v4069, 0.0
        %vm4102 = vcmp.gt.f32.partialorder %v4070, 0.0
        %vm4103 = vcmp.gt.f32.partialorder %v4071, 0.0
        %vm4104 = vcmp.gt.f32.partialorder %v4072, 0.0
        %vm4105 = vcmp.gt.f32.partialorder %v4073, 0.0
        %vm4106 = vcmp.gt.f32.partialorder %v4074, 0.0
        %vm4107 = vcmp.gt.f32.partialorder %v4075, 0.0
        %vm4108 = vcmp.gt.f32.partialorder %v4076, 0.0
        %v4109 = vmul.f32 %v4045, 0.2
        %v4110 = vmul.f32 %v4046, 0.2
        %v4111 = vmul.f32 %v4047, 0.2
        %v4112 = vmul.f32 %v4048, 0.2
        %v4113 = vmul.f32 %v4049, 0.2
        %v4114 = vmul.f32 %v4050, 0.2
        %v4115 = vmul.f32 %v4051, 0.2
        %v4116 = vmul.f32 %v4052, 0.2
        %v4117 = vmul.f32 %v4053, 0.2
        %v4118 = vmul.f32 %v4054, 0.2
        %v4119 = vmul.f32 %v4055, 0.2
        %v4120 = vmul.f32 %v4056, 0.2
        %v4121 = vmul.f32 %v4057, 0.2
        %v4122 = vmul.f32 %v4058, 0.2
        %v4123 = vmul.f32 %v4059, 0.2
        %v4124 = vmul.f32 %v4060, 0.2
        %v4125 = vmul.f32 %v4061, 0.2
        %v4126 = vmul.f32 %v4062, 0.2
        %v4127 = vmul.f32 %v4063, 0.2
        %v4128 = vmul.f32 %v4064, 0.2
        %v4129 = vmul.f32 %v4065, 0.2
        %v4130 = vmul.f32 %v4066, 0.2
        %v4131 = vmul.f32 %v4067, 0.2
        %v4132 = vmul.f32 %v4068, 0.2
        %v4133 = vmul.f32 %v4069, 0.2
        %v4134 = vmul.f32 %v4070, 0.2
        %v4135 = vmul.f32 %v4071, 0.2
        %v4136 = vmul.f32 %v4072, 0.2
        %v4137 = vmul.f32 %v4073, 0.2
        %v4138 = vmul.f32 %v4074, 0.2
        %v4139 = vmul.f32 %v4075, 0.2
        %v4140 = vmul.f32 %v4076, 0.2
        %v4141 = vsel %vm4077, %v4045, %v4109
        %v4142 = vsel %vm4078, %v4046, %v4110
        %v4143 = vsel %vm4079, %v4047, %v4111
        %v4144 = vsel %vm4080, %v4048, %v4112
        %v4145 = vsel %vm4081, %v4049, %v4113
        %v4146 = vsel %vm4082, %v4050, %v4114
        %v4147 = vsel %vm4083, %v4051, %v4115
        %v4148 = vsel %vm4084, %v4052, %v4116
        %v4149 = vsel %vm4085, %v4053, %v4117
        %v4150 = vsel %vm4086, %v4054, %v4118
        %v4151 = vsel %vm4087, %v4055, %v4119
        %v4152 = vsel %vm4088, %v4056, %v4120
        %v4153 = vsel %vm4089, %v4057, %v4121
        %v4154 = vsel %vm4090, %v4058, %v4122
        %v4155 = vsel %vm4091, %v4059, %v4123
        %v4156 = vsel %vm4092, %v4060, %v4124
        %v4157 = vsel %vm4093, %v4061, %v4125
        %v4158 = vsel %vm4094, %v4062, %v4126
        %v4159 = vsel %vm4095, %v4063, %v4127
        %v4160 = vsel %vm4096, %v4064, %v4128
        %v4161 = vsel %vm4097, %v4065, %v4129
        %v4162 = vsel %vm4098, %v4066, %v4130
        %v4163 = vsel %vm4099, %v4067, %v4131
        %v4164 = vsel %vm4100, %v4068, %v4132
        %v4165 = vsel %vm4101, %v4069, %v4133
        %v4166 = vsel %vm4102, %v4070, %v4134
        %v4167 = vsel %vm4103, %v4071, %v4135
        %v4168 = vsel %vm4104, %v4072, %v4136
        %v4169 = vsel %vm4105, %v4073, %v4137
        %v4170 = vsel %vm4106, %v4074, %v4138
        %v4171 = vsel %vm4107, %v4075, %v4139
        %v4172 = vsel %vm4108, %v4076, %v4140
        %v4173 = vsub.f32 0.0, %v4141
        %v4174 = vsub.f32 0.0, %v4142
        %v4175 = vsub.f32 0.0, %v4143
        %v4176 = vsub.f32 0.0, %v4144
        %v4177 = vsub.f32 0.0, %v4145
        %v4178 = vsub.f32 0.0, %v4146
        %v4179 = vsub.f32 0.0, %v4147
        %v4180 = vsub.f32 0.0, %v4148
        %v4181 = vsub.f32 0.0, %v4149
        %v4182 = vsub.f32 0.0, %v4150
        %v4183 = vsub.f32 0.0, %v4151
        %v4184 = vsub.f32 0.0, %v4152
        %v4185 = vsub.f32 0.0, %v4153
        %v4186 = vsub.f32 0.0, %v4154
        %v4187 = vsub.f32 0.0, %v4155
        %v4188 = vsub.f32 0.0, %v4156
        %v4189 = vsub.f32 0.0, %v4157
        %v4190 = vsub.f32 0.0, %v4158
        %v4191 = vsub.f32 0.0, %v4159
        %v4192 = vsub.f32 0.0, %v4160
        %v4193 = vsub.f32 0.0, %v4161
        %v4194 = vsub.f32 0.0, %v4162
        %v4195 = vsub.f32 0.0, %v4163
        %v4196 = vsub.f32 0.0, %v4164
        %v4197 = vsub.f32 0.0, %v4165
        %v4198 = vsub.f32 0.0, %v4166
        %v4199 = vsub.f32 0.0, %v4167
        %v4200 = vsub.f32 0.0, %v4168
        %v4201 = vsub.f32 0.0, %v4169
        %v4202 = vsub.f32 0.0, %v4170
        %v4203 = vsub.f32 0.0, %v4171
        %v4204 = vsub.f32 0.0, %v4172
        %v4205 = vmin.f32 %v4173, 60.0
        %v4206 = vmin.f32 %v4174, 60.0
        %v4207 = vmin.f32 %v4175, 60.0
        %v4208 = vmin.f32 %v4176, 60.0
        %v4209 = vmin.f32 %v4177, 60.0
        %v4210 = vmin.f32 %v4178, 60.0
        %v4211 = vmin.f32 %v4179, 60.0
        %v4212 = vmin.f32 %v4180, 60.0
        %v4213 = vmin.f32 %v4181, 60.0
        %v4214 = vmin.f32 %v4182, 60.0
        %v4215 = vmin.f32 %v4183, 60.0
        %v4216 = vmin.f32 %v4184, 60.0
        %v4217 = vmin.f32 %v4185, 60.0
        %v4218 = vmin.f32 %v4186, 60.0
        %v4219 = vmin.f32 %v4187, 60.0
        %v4220 = vmin.f32 %v4188, 60.0
        %v4221 = vmin.f32 %v4189, 60.0
        %v4222 = vmin.f32 %v4190, 60.0
        %v4223 = vmin.f32 %v4191, 60.0
        %v4224 = vmin.f32 %v4192, 60.0
        %v4225 = vmin.f32 %v4193, 60.0
        %v4226 = vmin.f32 %v4194, 60.0
        %v4227 = vmin.f32 %v4195, 60.0
        %v4228 = vmin.f32 %v4196, 60.0
        %v4229 = vmin.f32 %v4197, 60.0
        %v4230 = vmin.f32 %v4198, 60.0
        %v4231 = vmin.f32 %v4199, 60.0
        %v4232 = vmin.f32 %v4200, 60.0
        %v4233 = vmin.f32 %v4201, 60.0
        %v4234 = vmin.f32 %v4202, 60.0
        %v4235 = vmin.f32 %v4203, 60.0
        %v4236 = vmin.f32 %v4204, 60.0
        %v4237 = vmul.f32 %v4205, 1.442695
        %v4238 = vpow.pop %v4237
        %v4239 = vmul.f32 %v4206, 1.442695
        %v4240 = vpow.pop %v4239
        %v4241 = vmul.f32 %v4207, 1.442695
        %v4242 = vpow.pop %v4241
        %v4243 = vmul.f32 %v4208, 1.442695
        %v4244 = vpow.pop %v4243
        %v4245 = vmul.f32 %v4209, 1.442695
        %v4246 = vpow.pop %v4245
        %v4247 = vmul.f32 %v4210, 1.442695
        %v4248 = vpow.pop %v4247
        %v4249 = vmul.f32 %v4211, 1.442695
        %v4250 = vpow.pop %v4249
        %v4251 = vmul.f32 %v4212, 1.442695
        %v4252 = vpow.pop %v4251
        %v4253 = vmul.f32 %v4213, 1.442695
        %v4254 = vpow.pop %v4253
        %v4255 = vmul.f32 %v4214, 1.442695
        %v4256 = vpow.pop %v4255
        %v4257 = vmul.f32 %v4215, 1.442695
        %v4258 = vpow.pop %v4257
        %v4259 = vmul.f32 %v4216, 1.442695
        %v4260 = vpow.pop %v4259
        %v4261 = vmul.f32 %v4217, 1.442695
        %v4262 = vpow.pop %v4261
        %v4263 = vmul.f32 %v4218, 1.442695
        %v4264 = vpow.pop %v4263
        %v4265 = vmul.f32 %v4219, 1.442695
        %v4266 = vpow.pop %v4265
        %v4267 = vmul.f32 %v4220, 1.442695
        %v4268 = vpow.pop %v4267
        %v4269 = vmul.f32 %v4221, 1.442695
        %v4270 = vpow.pop %v4269
        %v4271 = vmul.f32 %v4222, 1.442695
        %v4272 = vpow.pop %v4271
        %v4273 = vmul.f32 %v4223, 1.442695
        %v4274 = vpow.pop %v4273
        %v4275 = vmul.f32 %v4224, 1.442695
        %v4276 = vpow.pop %v4275
        %v4277 = vmul.f32 %v4225, 1.442695
        %v4278 = vpow.pop %v4277
        %v4279 = vmul.f32 %v4226, 1.442695
        %v4280 = vpow.pop %v4279
        %v4281 = vmul.f32 %v4227, 1.442695
        %v4282 = vpow.pop %v4281
        %v4283 = vmul.f32 %v4228, 1.442695
        %v4284 = vpow.pop %v4283
        %v4285 = vmul.f32 %v4229, 1.442695
        %v4286 = vpow.pop %v4285
        %v4287 = vmul.f32 %v4230, 1.442695
        %v4288 = vpow.pop %v4287
        %v4289 = vmul.f32 %v4231, 1.442695
        %v4290 = vpow.pop %v4289
        %v4291 = vmul.f32 %v4232, 1.442695
        %v4292 = vpow.pop %v4291
        %v4293 = vmul.f32 %v4233, 1.442695
        %v4294 = vpow.pop %v4293
        %v4295 = vmul.f32 %v4234, 1.442695
        %v4296 = vpow.pop %v4295
        %v4297 = vmul.f32 %v4235, 1.442695
        %v4298 = vpow.pop %v4297
        %v4299 = vmul.f32 %v4236, 1.442695
        %v4300 = vpow.pop %v4299
        %v4301 = vmul.f32 %v315, %v4238
        %v4302 = vmul.f32 %v316, %v4240
        %v4303 = vmul.f32 %v317, %v4242
        %v4304 = vmul.f32 %v318, %v4244
        %v4305 = vmul.f32 %v319, %v4246
        %v4306 = vmul.f32 %v320, %v4248
        %v4307 = vmul.f32 %v321, %v4250
        %v4308 = vmul.f32 %v322, %v4252
        %v4309 = vmul.f32 %v323, %v4254
        %v4310 = vmul.f32 %v324, %v4256
        %v4311 = vmul.f32 %v325, %v4258
        %v4312 = vmul.f32 %v326, %v4260
        %v4313 = vmul.f32 %v327, %v4262
        %v4314 = vmul.f32 %v328, %v4264
        %v4315 = vmul.f32 %v329, %v4266
        %v4316 = vmul.f32 %v330, %v4268
        %v4317 = vmul.f32 %v331, %v4270
        %v4318 = vmul.f32 %v332, %v4272
        %v4319 = vmul.f32 %v333, %v4274
        %v4320 = vmul.f32 %v334, %v4276
        %v4321 = vmul.f32 %v335, %v4278
        %v4322 = vmul.f32 %v336, %v4280
        %v4323 = vmul.f32 %v337, %v4282
        %v4324 = vmul.f32 %v338, %v4284
        %v4325 = vmul.f32 %v339, %v4286
        %v4326 = vmul.f32 %v340, %v4288
        %v4327 = vmul.f32 %v341, %v4290
        %v4328 = vmul.f32 %v342, %v4292
        %v4329 = vmul.f32 %v343, %v4294
        %v4330 = vmul.f32 %v344, %v4296
        %v4331 = vmul.f32 %v345, %v4298
        %v4332 = vmul.f32 %v346, %v4300
        %v4333 = vadd.f32 %v4301, %v4302
        %4334 = vadd.xlane.f32.xlu0 %v4333
        %v4335 = vpop.xlane.xlu0 %4334
        %v4336 = vadd.f32 %v4303, %v4304
        %4337 = vadd.xlane.f32.xlu0 %v4336
        %v4338 = vpop.xlane.xlu0 %4337
        %v4339 = vadd.f32 %v4305, %v4306
        %4340 = vadd.xlane.f32.xlu0 %v4339
        %v4341 = vpop.xlane.xlu0 %4340
        %v4342 = vadd.f32 %v4307, %v4308
        %4343 = vadd.xlane.f32.xlu0 %v4342
        %v4344 = vpop.xlane.xlu0 %4343
        %v4345 = vadd.f32 %v4309, %v4310
        %4346 = vadd.xlane.f32.xlu0 %v4345
        %v4347 = vpop.xlane.xlu0 %4346
        %v4348 = vadd.f32 %v4311, %v4312
        %4349 = vadd.xlane.f32.xlu0 %v4348
        %v4350 = vpop.xlane.xlu0 %4349
        %v4351 = vadd.f32 %v4313, %v4314
        %4352 = vadd.xlane.f32.xlu0 %v4351
        %v4353 = vpop.xlane.xlu0 %4352
        %v4354 = vadd.f32 %v4315, %v4316
        %4355 = vadd.xlane.f32.xlu0 %v4354
        %v4356 = vpop.xlane.xlu0 %4355
        %v4357 = vadd.f32 %v4317, %v4318
        %4358 = vadd.xlane.f32.xlu0 %v4357
        %v4359 = vpop.xlane.xlu0 %4358
        %v4360 = vadd.f32 %v4319, %v4320
        %4361 = vadd.xlane.f32.xlu0 %v4360
        %v4362 = vpop.xlane.xlu0 %4361
        %v4363 = vadd.f32 %v4321, %v4322
        %4364 = vadd.xlane.f32.xlu0 %v4363
        %v4365 = vpop.xlane.xlu0 %4364
        %v4366 = vadd.f32 %v4323, %v4324
        %4367 = vadd.xlane.f32.xlu0 %v4366
        %v4368 = vpop.xlane.xlu0 %4367
        %v4369 = vadd.f32 %v4325, %v4326
        %4370 = vadd.xlane.f32.xlu0 %v4369
        %v4371 = vpop.xlane.xlu0 %4370
        %v4372 = vadd.f32 %v4327, %v4328
        %4373 = vadd.xlane.f32.xlu0 %v4372
        %v4374 = vpop.xlane.xlu0 %4373
        %v4375 = vadd.f32 %v4329, %v4330
        %4376 = vadd.xlane.f32.xlu0 %v4375
        %v4377 = vpop.xlane.xlu0 %4376
        %v4378 = vadd.f32 %v4331, %v4332
        %4379 = vadd.xlane.f32.xlu0 %v4378
        %v4380 = vpop.xlane.xlu0 %4379
        %v4381 = vmax.f32 %v4335, 1e-30
        %v4382 = vmax.f32 %v4338, 1e-30
        %v4383 = vmax.f32 %v4341, 1e-30
        %v4384 = vmax.f32 %v4344, 1e-30
        %v4385 = vmax.f32 %v4347, 1e-30
        %v4386 = vmax.f32 %v4350, 1e-30
        %v4387 = vmax.f32 %v4353, 1e-30
        %v4388 = vmax.f32 %v4356, 1e-30
        %v4389 = vmax.f32 %v4359, 1e-30
        %v4390 = vmax.f32 %v4362, 1e-30
        %v4391 = vmax.f32 %v4365, 1e-30
        %v4392 = vmax.f32 %v4368, 1e-30
        %v4393 = vmax.f32 %v4371, 1e-30
        %v4394 = vmax.f32 %v4374, 1e-30
        %v4395 = vmax.f32 %v4377, 1e-30
        %v4396 = vmax.f32 %v4380, 1e-30
        %v4397 = vpack.c.bf16 %v4303, %v4301
        %v4398 = vpack.c.bf16 %v4304, %v4302
        %v4399 = vpack.c.bf16 %v4307, %v4305
        %v4400 = vpack.c.bf16 %v4308, %v4306
        %v4401 = vpack.c.bf16 %v4311, %v4309
        %v4402 = vpack.c.bf16 %v4312, %v4310
        %v4403 = vpack.c.bf16 %v4315, %v4313
        %v4404 = vpack.c.bf16 %v4316, %v4314
        %v4405 = vpack.c.bf16 %v4319, %v4317
        %v4406 = vpack.c.bf16 %v4320, %v4318
        %v4407 = vpack.c.bf16 %v4323, %v4321
        %v4408 = vpack.c.bf16 %v4324, %v4322
        %v4409 = vpack.c.bf16 %v4327, %v4325
        %v4410 = vpack.c.bf16 %v4328, %v4326
        %v4411 = vpack.c.bf16 %v4331, %v4329
        %v4412 = vpack.c.bf16 %v4332, %v4330
        %v4413 = vpack.c.bf16 %v3707, %v3705
        %v4414 = vpack.c.bf16 %v3712, %v3710
        %v4415 = vpack.c.bf16 %v3717, %v3715
        %v4416 = vpack.c.bf16 %v3722, %v3720
        %v4417 = vpack.c.bf16 %v3727, %v3725
        %v4418 = vpack.c.bf16 %v3732, %v3730
        %v4419 = vpack.c.bf16 %v3737, %v3735
        %v4420 = vpack.c.bf16 %v3742, %v3740
        %v4421 = vpack.c.bf16 %v3747, %v3745
        %v4422 = vpack.c.bf16 %v3752, %v3750
        %v4423 = vpack.c.bf16 %v3757, %v3755
        %v4424 = vpack.c.bf16 %v3762, %v3760
        %v4425 = vpack.c.bf16 %v3767, %v3765
        %v4426 = vpack.c.bf16 %v3772, %v3770
        %v4427 = vpack.c.bf16 %v3777, %v3775
        %v4428 = vpack.c.bf16 %v3782, %v3780
        %4429 = vmatpush.bf16.msra.mxu0 %v4420
        %4430 = vmatpush.bf16.msra.mxu0 %v4419
        %4431 = vmatpush.bf16.msra.mxu0 %v4418
        %4432 = vmatpush.bf16.msra.mxu0 %v4417
        %4433 = vmatpush.bf16.msra.mxu0 %v4416
        %4434 = vmatpush.bf16.msra.mxu0 %v4415
        %4435 = vmatpush.bf16.msra.mxu0 %v4414
        %4436 = vmatpush.bf16.msra.mxu0 %v4413
        %4437 = vmatmul.bf16.gmra.mxu0 %v4397
        %v4438 = vpop.f32.mrf.mxu0
        %v4439 = vadd.f32 0.0, %v4438
        %v4440 = vpop.f32.mrf.mxu0
        %v4441 = vadd.f32 0.0, %v4440
        %4442 = vmatmul.bf16.gmra.mxu0 %v4399
        %v4443 = vpop.f32.mrf.mxu0
        %v4444 = vadd.f32 0.0, %v4443
        %v4445 = vpop.f32.mrf.mxu0
        %v4446 = vadd.f32 0.0, %v4445
        %4447 = vmatmul.bf16.gmra.mxu0 %v4401
        %v4448 = vpop.f32.mrf.mxu0
        %v4449 = vadd.f32 0.0, %v4448
        %v4450 = vpop.f32.mrf.mxu0
        %v4451 = vadd.f32 0.0, %v4450
        %4452 = vmatmul.bf16.gmra.mxu0 %v4403
        %v4453 = vpop.f32.mrf.mxu0
        %v4454 = vadd.f32 0.0, %v4453
        %v4455 = vpop.f32.mrf.mxu0
        %v4456 = vadd.f32 0.0, %v4455
        %4457 = vmatmul.bf16.gmra.mxu0 %v4405
        %v4458 = vpop.f32.mrf.mxu0
        %v4459 = vadd.f32 0.0, %v4458
        %v4460 = vpop.f32.mrf.mxu0
        %v4461 = vadd.f32 0.0, %v4460
        %4462 = vmatmul.bf16.gmra.mxu0 %v4407
        %v4463 = vpop.f32.mrf.mxu0
        %v4464 = vadd.f32 0.0, %v4463
        %v4465 = vpop.f32.mrf.mxu0
        %v4466 = vadd.f32 0.0, %v4465
        %4467 = vmatmul.bf16.gmra.mxu0 %v4409
        %v4468 = vpop.f32.mrf.mxu0
        %v4469 = vadd.f32 0.0, %v4468
        %v4470 = vpop.f32.mrf.mxu0
        %v4471 = vadd.f32 0.0, %v4470
        %4472 = vmatmul.bf16.gmra.mxu0 %v4411
        %v4473 = vpop.f32.mrf.mxu0
        %v4474 = vadd.f32 0.0, %v4473
        %v4475 = vpop.f32.mrf.mxu0
        %v4476 = vadd.f32 0.0, %v4475
        %4477 = vdwg.mxu0
        %4478 = vmatpush.bf16.msra.mxu0 %v4428
        %4479 = vmatpush.bf16.msra.mxu0 %v4427
        %4480 = vmatpush.bf16.msra.mxu0 %v4426
        %4481 = vmatpush.bf16.msra.mxu0 %v4425
        %4482 = vmatpush.bf16.msra.mxu0 %v4424
        %4483 = vmatpush.bf16.msra.mxu0 %v4423
        %4484 = vmatpush.bf16.msra.mxu0 %v4422
        %4485 = vmatpush.bf16.msra.mxu0 %v4421
        %4486 = vmatmul.bf16.gmra.mxu0 %v4398
        %v4487 = vpop.f32.mrf.mxu0
        %v4488 = vadd.f32 %v4439, %v4487
        %v4489 = vpop.f32.mrf.mxu0
        %v4490 = vadd.f32 %v4441, %v4489
        %4491 = vmatmul.bf16.gmra.mxu0 %v4400
        %v4492 = vpop.f32.mrf.mxu0
        %v4493 = vadd.f32 %v4444, %v4492
        %v4494 = vpop.f32.mrf.mxu0
        %v4495 = vadd.f32 %v4446, %v4494
        %4496 = vmatmul.bf16.gmra.mxu0 %v4402
        %v4497 = vpop.f32.mrf.mxu0
        %v4498 = vadd.f32 %v4449, %v4497
        %v4499 = vpop.f32.mrf.mxu0
        %v4500 = vadd.f32 %v4451, %v4499
        %4501 = vmatmul.bf16.gmra.mxu0 %v4404
        %v4502 = vpop.f32.mrf.mxu0
        %v4503 = vadd.f32 %v4454, %v4502
        %v4504 = vpop.f32.mrf.mxu0
        %v4505 = vadd.f32 %v4456, %v4504
        %4506 = vmatmul.bf16.gmra.mxu0 %v4406
        %v4507 = vpop.f32.mrf.mxu0
        %v4508 = vadd.f32 %v4459, %v4507
        %v4509 = vpop.f32.mrf.mxu0
        %v4510 = vadd.f32 %v4461, %v4509
        %4511 = vmatmul.bf16.gmra.mxu0 %v4408
        %v4512 = vpop.f32.mrf.mxu0
        %v4513 = vadd.f32 %v4464, %v4512
        %v4514 = vpop.f32.mrf.mxu0
        %v4515 = vadd.f32 %v4466, %v4514
        %4516 = vmatmul.bf16.gmra.mxu0 %v4410
        %v4517 = vpop.f32.mrf.mxu0
        %v4518 = vadd.f32 %v4469, %v4517
        %v4519 = vpop.f32.mrf.mxu0
        %v4520 = vadd.f32 %v4471, %v4519
        %4521 = vmatmul.bf16.gmra.mxu0 %v4412
        %v4522 = vpop.f32.mrf.mxu0
        %v4523 = vadd.f32 %v4474, %v4522
        %v4524 = vpop.f32.mrf.mxu0
        %v4525 = vadd.f32 %v4476, %v4524
        %4526 = vdwg.mxu0
        %v4527 = vrcp.pop %v4381
        %v4528 = vrcp.pop %v4382
        %v4529 = vrcp.pop %v4383
        %v4530 = vrcp.pop %v4384
        %v4531 = vrcp.pop %v4385
        %v4532 = vrcp.pop %v4386
        %v4533 = vrcp.pop %v4387
        %v4534 = vrcp.pop %v4388
        %v4535 = vrcp.pop %v4389
        %v4536 = vrcp.pop %v4390
        %v4537 = vrcp.pop %v4391
        %v4538 = vrcp.pop %v4392
        %v4539 = vrcp.pop %v4393
        %v4540 = vrcp.pop %v4394
        %v4541 = vrcp.pop %v4395
        %v4542 = vrcp.pop %v4396
        %v4543 = vmul.f32 %v4381, %v4527
        %v4544 = vmul.f32 %v4382, %v4528
        %v4545 = vmul.f32 %v4383, %v4529
        %v4546 = vmul.f32 %v4384, %v4530
        %v4547 = vmul.f32 %v4385, %v4531
        %v4548 = vmul.f32 %v4386, %v4532
        %v4549 = vmul.f32 %v4387, %v4533
        %v4550 = vmul.f32 %v4388, %v4534
        %v4551 = vmul.f32 %v4389, %v4535
        %v4552 = vmul.f32 %v4390, %v4536
        %v4553 = vmul.f32 %v4391, %v4537
        %v4554 = vmul.f32 %v4392, %v4538
        %v4555 = vmul.f32 %v4393, %v4539
        %v4556 = vmul.f32 %v4394, %v4540
        %v4557 = vmul.f32 %v4395, %v4541
        %v4558 = vmul.f32 %v4396, %v4542
        %v4559 = vsub.f32 2.0, %v4543
        %v4560 = vsub.f32 2.0, %v4544
        %v4561 = vsub.f32 2.0, %v4545
        %v4562 = vsub.f32 2.0, %v4546
        %v4563 = vsub.f32 2.0, %v4547
        %v4564 = vsub.f32 2.0, %v4548
        %v4565 = vsub.f32 2.0, %v4549
        %v4566 = vsub.f32 2.0, %v4550
        %v4567 = vsub.f32 2.0, %v4551
        %v4568 = vsub.f32 2.0, %v4552
        %v4569 = vsub.f32 2.0, %v4553
        %v4570 = vsub.f32 2.0, %v4554
        %v4571 = vsub.f32 2.0, %v4555
        %v4572 = vsub.f32 2.0, %v4556
        %v4573 = vsub.f32 2.0, %v4557
        %v4574 = vsub.f32 2.0, %v4558
        %v4575 = vmul.f32 %v4527, %v4559
        %v4576 = vmul.f32 %v4528, %v4560
        %v4577 = vmul.f32 %v4529, %v4561
        %v4578 = vmul.f32 %v4530, %v4562
        %v4579 = vmul.f32 %v4531, %v4563
        %v4580 = vmul.f32 %v4532, %v4564
        %v4581 = vmul.f32 %v4533, %v4565
        %v4582 = vmul.f32 %v4534, %v4566
        %v4583 = vmul.f32 %v4535, %v4567
        %v4584 = vmul.f32 %v4536, %v4568
        %v4585 = vmul.f32 %v4537, %v4569
        %v4586 = vmul.f32 %v4538, %v4570
        %v4587 = vmul.f32 %v4539, %v4571
        %v4588 = vmul.f32 %v4540, %v4572
        %v4589 = vmul.f32 %v4541, %v4573
        %v4590 = vmul.f32 %v4542, %v4574
        %v4591 = vmul.f32 %v4488, %v4575
        %v4592 = vmul.f32 %v4490, %v4576
        %v4593 = vmul.f32 %v4493, %v4577
        %v4594 = vmul.f32 %v4495, %v4578
        %v4595 = vmul.f32 %v4498, %v4579
        %v4596 = vmul.f32 %v4500, %v4580
        %v4597 = vmul.f32 %v4503, %v4581
        %v4598 = vmul.f32 %v4505, %v4582
        %v4599 = vmul.f32 %v4508, %v4583
        %v4600 = vmul.f32 %v4510, %v4584
        %v4601 = vmul.f32 %v4513, %v4585
        %v4602 = vmul.f32 %v4515, %v4586
        %v4603 = vmul.f32 %v4518, %v4587
        %v4604 = vmul.f32 %v4520, %v4588
        %v4605 = vmul.f32 %v4523, %v4589
        %v4606 = vmul.f32 %v4525, %v4590
        %vm4607 = vcmp.gt.f32.partialorder %v4591, 0.0
        %vm4608 = vcmp.gt.f32.partialorder %v4592, 0.0
        %vm4609 = vcmp.gt.f32.partialorder %v4593, 0.0
        %vm4610 = vcmp.gt.f32.partialorder %v4594, 0.0
        %vm4611 = vcmp.gt.f32.partialorder %v4595, 0.0
        %vm4612 = vcmp.gt.f32.partialorder %v4596, 0.0
        %vm4613 = vcmp.gt.f32.partialorder %v4597, 0.0
        %vm4614 = vcmp.gt.f32.partialorder %v4598, 0.0
        %vm4615 = vcmp.gt.f32.partialorder %v4599, 0.0
        %vm4616 = vcmp.gt.f32.partialorder %v4600, 0.0
        %vm4617 = vcmp.gt.f32.partialorder %v4601, 0.0
        %vm4618 = vcmp.gt.f32.partialorder %v4602, 0.0
        %vm4619 = vcmp.gt.f32.partialorder %v4603, 0.0
        %vm4620 = vcmp.gt.f32.partialorder %v4604, 0.0
        %vm4621 = vcmp.gt.f32.partialorder %v4605, 0.0
        %vm4622 = vcmp.gt.f32.partialorder %v4606, 0.0
        %v4623 = vmin.f32 %v4591, 0.0
        %v4624 = vmin.f32 %v4592, 0.0
        %v4625 = vmin.f32 %v4593, 0.0
        %v4626 = vmin.f32 %v4594, 0.0
        %v4627 = vmin.f32 %v4595, 0.0
        %v4628 = vmin.f32 %v4596, 0.0
        %v4629 = vmin.f32 %v4597, 0.0
        %v4630 = vmin.f32 %v4598, 0.0
        %v4631 = vmin.f32 %v4599, 0.0
        %v4632 = vmin.f32 %v4600, 0.0
        %v4633 = vmin.f32 %v4601, 0.0
        %v4634 = vmin.f32 %v4602, 0.0
        %v4635 = vmin.f32 %v4603, 0.0
        %v4636 = vmin.f32 %v4604, 0.0
        %v4637 = vmin.f32 %v4605, 0.0
        %v4638 = vmin.f32 %v4606, 0.0
        %v4639 = vmul.f32 %v4623, 1.442695
        %v4640 = vpow.pop %v4639
        %v4641 = vmul.f32 %v4624, 1.442695
        %v4642 = vpow.pop %v4641
        %v4643 = vmul.f32 %v4625, 1.442695
        %v4644 = vpow.pop %v4643
        %v4645 = vmul.f32 %v4626, 1.442695
        %v4646 = vpow.pop %v4645
        %v4647 = vmul.f32 %v4627, 1.442695
        %v4648 = vpow.pop %v4647
        %v4649 = vmul.f32 %v4628, 1.442695
        %v4650 = vpow.pop %v4649
        %v4651 = vmul.f32 %v4629, 1.442695
        %v4652 = vpow.pop %v4651
        %v4653 = vmul.f32 %v4630, 1.442695
        %v4654 = vpow.pop %v4653
        %v4655 = vmul.f32 %v4631, 1.442695
        %v4656 = vpow.pop %v4655
        %v4657 = vmul.f32 %v4632, 1.442695
        %v4658 = vpow.pop %v4657
        %v4659 = vmul.f32 %v4633, 1.442695
        %v4660 = vpow.pop %v4659
        %v4661 = vmul.f32 %v4634, 1.442695
        %v4662 = vpow.pop %v4661
        %v4663 = vmul.f32 %v4635, 1.442695
        %v4664 = vpow.pop %v4663
        %v4665 = vmul.f32 %v4636, 1.442695
        %v4666 = vpow.pop %v4665
        %v4667 = vmul.f32 %v4637, 1.442695
        %v4668 = vpow.pop %v4667
        %v4669 = vmul.f32 %v4638, 1.442695
        %v4670 = vpow.pop %v4669
        %v4671 = vsub.f32 %v4640, 1.0
        %v4672 = vsub.f32 %v4642, 1.0
        %v4673 = vsub.f32 %v4644, 1.0
        %v4674 = vsub.f32 %v4646, 1.0
        %v4675 = vsub.f32 %v4648, 1.0
        %v4676 = vsub.f32 %v4650, 1.0
        %v4677 = vsub.f32 %v4652, 1.0
        %v4678 = vsub.f32 %v4654, 1.0
        %v4679 = vsub.f32 %v4656, 1.0
        %v4680 = vsub.f32 %v4658, 1.0
        %v4681 = vsub.f32 %v4660, 1.0
        %v4682 = vsub.f32 %v4662, 1.0
        %v4683 = vsub.f32 %v4664, 1.0
        %v4684 = vsub.f32 %v4666, 1.0
        %v4685 = vsub.f32 %v4668, 1.0
        %v4686 = vsub.f32 %v4670, 1.0
        %v4687 = vsel %vm4607, %v4591, %v4671
        %v4688 = vsel %vm4608, %v4592, %v4672
        %v4689 = vsel %vm4609, %v4593, %v4673
        %v4690 = vsel %vm4610, %v4594, %v4674
        %v4691 = vsel %vm4611, %v4595, %v4675
        %v4692 = vsel %vm4612, %v4596, %v4676
        %v4693 = vsel %vm4613, %v4597, %v4677
        %v4694 = vsel %vm4614, %v4598, %v4678
        %v4695 = vsel %vm4615, %v4599, %v4679
        %v4696 = vsel %vm4616, %v4600, %v4680
        %v4697 = vsel %vm4617, %v4601, %v4681
        %v4698 = vsel %vm4618, %v4602, %v4682
        %v4699 = vsel %vm4619, %v4603, %v4683
        %v4700 = vsel %vm4620, %v4604, %v4684
        %v4701 = vsel %vm4621, %v4605, %v4685
        %v4702 = vsel %vm4622, %v4606, %v4686
        %s4703 = scalar_lea.vmem %s259, 384 [#allocation2]
        %4704 = vst.msk [vmem:[%s4703] sm:$0xff] %vm483, %v4687
        %4705 = vst.msk [vmem:[%s4703 + $0x8] sm:$0xff] %vm483, %v4688
        %4706 = vst.msk [vmem:[%s4703 + $0x10] sm:$0xff] %vm483, %v4689
        %4707 = vst.msk [vmem:[%s4703 + $0x18] sm:$0xff] %vm483, %v4690
        %4708 = vst.msk [vmem:[%s4703 + $0x20] sm:$0xff] %vm483, %v4691
        %4709 = vst.msk [vmem:[%s4703 + $0x28] sm:$0xff] %vm483, %v4692
        %4710 = vst.msk [vmem:[%s4703 + $0x30] sm:$0xff] %vm483, %v4693
        %4711 = vst.msk [vmem:[%s4703 + $0x38] sm:$0xff] %vm483, %v4694
        %4712 = vst.msk [vmem:[%s4703 + $0x40] sm:$0xff] %vm483, %v4695
        %4713 = vst.msk [vmem:[%s4703 + $0x48] sm:$0xff] %vm483, %v4696
        %4714 = vst.msk [vmem:[%s4703 + $0x50] sm:$0xff] %vm483, %v4697
        %4715 = vst.msk [vmem:[%s4703 + $0x58] sm:$0xff] %vm483, %v4698
        %4716 = vst.msk [vmem:[%s4703 + $0x60] sm:$0xff] %vm483, %v4699
        %4717 = vst.msk [vmem:[%s4703 + $0x68] sm:$0xff] %vm483, %v4700
        %4718 = vst.msk [vmem:[%s4703 + $0x70] sm:$0xff] %vm483, %v4701
        %4719 = vst.msk [vmem:[%s4703 + $0x78] sm:$0xff] %vm483, %v4702
        %s4720 = sand.u32 %s161, 1
        %s4721 = sand.u32 %s161, 1
        %s4722 = smul.addr %s4721, 512
        %s4723 = scalar_lea.vmem [#allocation2], %s4722
        // Predicated region
        $region45: #{tpu_custom_call.1} parent=43 // pred_check
          %p4724 = pneg %p171
        $region46: #{tpu_custom_call.1} parent=43 // pred_check_branch
          %4726 = sbr.rel (%p4724) target = $region48
        $region47: #{tpu_custom_call.1} parent=43 // pred_region
          %s4727 = smul.u32 16, %s17
          %s4728 = smul.addr %s4727, 8
          %s4729 = scalar_lea.vmem %s6, %s4728
          // Predicated region
          $region49: #{tpu_custom_call.1} parent=47 // pred_check
            _
          $region50: #{tpu_custom_call.1} parent=47 // pred_check_branch
            %4731 = sbr.rel (0) target = $region52
          $region51: #{tpu_custom_call.1} parent=47 // pred_region
            // Predicated region
            $region53: #{tpu_custom_call.1} parent=51 // pred_check
              _
            $region54: #{tpu_custom_call.1} parent=51 // pred_check_branch
              %4733 = sbr.rel (0) target = $region56
            $region55: #{tpu_custom_call.1} parent=51 // pred_region
              // Predicated region
              $region68: #{tpu_custom_call.1} parent=55 // pred_check
                _
              $region69: #{tpu_custom_call.1} parent=55 // pred_check_branch
                %4875 = sbr.rel (0) target = $region71
              $region70: #{tpu_custom_call.1} parent=55 // pred_region
                loop: start=0, step=1, limit=1
                $region72: #{tpu_custom_call.1} parent=70 // loop_pre_header
                  _
                $region73: #{tpu_custom_call.1} parent=70 // loop_header
                  %s4877 = sphi 0, %s4881
                  %p4878 = scmp.ge.s32.totalorder %s4877, 1
                  %s4882 = sphi %s4723, %s4723
                  %s4883 = sphi %s4729, %s4729
                $region74: #{tpu_custom_call.1} parent=70 // loop_header_branch
                  %4880 = sbr.rel (%p4878) target = $region78
                $region75: #{tpu_custom_call.1} parent=70 // loop_body
                  %v4884 = vld [vmem:[%s4882] sm:$0xff]
                  %4885 = vst [vmem:[%s4883] sm:$0xff] %v4884
                  %v4886 = vld [vmem:[%s4882 + $0x8] sm:$0xff]
                  %4887 = vst [vmem:[%s4883 + $0x8] sm:$0xff] %v4886
                  %v4888 = vld [vmem:[%s4882 + $0x10] sm:$0xff]
                  %4889 = vst [vmem:[%s4883 + $0x10] sm:$0xff] %v4888
                  %v4890 = vld [vmem:[%s4882 + $0x18] sm:$0xff]
                  %4891 = vst [vmem:[%s4883 + $0x18] sm:$0xff] %v4890
                  %v4892 = vld [vmem:[%s4882 + $0x20] sm:$0xff]
                  %4893 = vst [vmem:[%s4883 + $0x20] sm:$0xff] %v4892
                  %v4894 = vld [vmem:[%s4882 + $0x28] sm:$0xff]
                  %4895 = vst [vmem:[%s4883 + $0x28] sm:$0xff] %v4894
                  %v4896 = vld [vmem:[%s4882 + $0x30] sm:$0xff]
                  %4897 = vst [vmem:[%s4883 + $0x30] sm:$0xff] %v4896
                  %v4898 = vld [vmem:[%s4882 + $0x38] sm:$0xff]
                  %4899 = vst [vmem:[%s4883 + $0x38] sm:$0xff] %v4898
                  %v4900 = vld [vmem:[%s4882 + $0x40] sm:$0xff]
                  %4901 = vst [vmem:[%s4883 + $0x40] sm:$0xff] %v4900
                  %v4902 = vld [vmem:[%s4882 + $0x48] sm:$0xff]
                  %4903 = vst [vmem:[%s4883 + $0x48] sm:$0xff] %v4902
                  %v4904 = vld [vmem:[%s4882 + $0x50] sm:$0xff]
                  %4905 = vst [vmem:[%s4883 + $0x50] sm:$0xff] %v4904
                  %v4906 = vld [vmem:[%s4882 + $0x58] sm:$0xff]
                  %4907 = vst [vmem:[%s4883 + $0x58] sm:$0xff] %v4906
                  %v4908 = vld [vmem:[%s4882 + $0x60] sm:$0xff]
                  %4909 = vst [vmem:[%s4883 + $0x60] sm:$0xff] %v4908
                  %v4910 = vld [vmem:[%s4882 + $0x68] sm:$0xff]
                  %4911 = vst [vmem:[%s4883 + $0x68] sm:$0xff] %v4910
                  %v4912 = vld [vmem:[%s4882 + $0x70] sm:$0xff]
                  %4913 = vst [vmem:[%s4883 + $0x70] sm:$0xff] %v4912
                  %v4914 = vld [vmem:[%s4882 + $0x78] sm:$0xff]
                  %4915 = vst [vmem:[%s4883 + $0x78] sm:$0xff] %v4914
                  %v4916 = vld [vmem:[%s4882 + $0x80] sm:$0xff]
                  %4917 = vst [vmem:[%s4883 + $0x100] sm:$0xff] %v4916
                  %v4918 = vld [vmem:[%s4882 + $0x88] sm:$0xff]
                  %4919 = vst [vmem:[%s4883 + $0x108] sm:$0xff] %v4918
                  %v4920 = vld [vmem:[%s4882 + $0x90] sm:$0xff]
                  %4921 = vst [vmem:[%s4883 + $0x110] sm:$0xff] %v4920
                  %v4922 = vld [vmem:[%s4882 + $0x98] sm:$0xff]
                  %4923 = vst [vmem:[%s4883 + $0x118] sm:$0xff] %v4922
                  %v4924 = vld [vmem:[%s4882 + $0xa0] sm:$0xff]
                  %4925 = vst [vmem:[%s4883 + $0x120] sm:$0xff] %v4924
                  %v4926 = vld [vmem:[%s4882 + $0xa8] sm:$0xff]
                  %4927 = vst [vmem:[%s4883 + $0x128] sm:$0xff] %v4926
                  %v4928 = vld [vmem:[%s4882 + $0xb0] sm:$0xff]
                  %4929 = vst [vmem:[%s4883 + $0x130] sm:$0xff] %v4928
                  %v4930 = vld [vmem:[%s4882 + $0xb8] sm:$0xff]
                  %4931 = vst [vmem:[%s4883 + $0x138] sm:$0xff] %v4930
                  %v4932 = vld [vmem:[%s4882 + $0xc0] sm:$0xff]
                  %4933 = vst [vmem:[%s4883 + $0x140] sm:$0xff] %v4932
                  %v4934 = vld [vmem:[%s4882 + $0xc8] sm:$0xff]
                  %4935 = vst [vmem:[%s4883 + $0x148] sm:$0xff] %v4934
                  %v4936 = vld [vmem:[%s4882 + $0xd0] sm:$0xff]
                  %4937 = vst [vmem:[%s4883 + $0x150] sm:$0xff] %v4936
                  %v4938 = vld [vmem:[%s4882 + $0xd8] sm:$0xff]
                  %4939 = vst [vmem:[%s4883 + $0x158] sm:$0xff] %v4938
                  %v4940 = vld [vmem:[%s4882 + $0xe0] sm:$0xff]
                  %4941 = vst [vmem:[%s4883 + $0x160] sm:$0xff] %v4940
                  %v4942 = vld [vmem:[%s4882 + $0xe8] sm:$0xff]
                  %4943 = vst [vmem:[%s4883 + $0x168] sm:$0xff] %v4942
                  %v4944 = vld [vmem:[%s4882 + $0xf0] sm:$0xff]
                  %4945 = vst [vmem:[%s4883 + $0x170] sm:$0xff] %v4944
                  %v4946 = vld [vmem:[%s4882 + $0xf8] sm:$0xff]
                  %4947 = vst [vmem:[%s4883 + $0x178] sm:$0xff] %v4946
                  %v4948 = vld [vmem:[%s4882 + $0x100] sm:$0xff]
                  %4949 = vst [vmem:[%s4883 + $0x200] sm:$0xff] %v4948
                  %v4950 = vld [vmem:[%s4882 + $0x108] sm:$0xff]
                  %4951 = vst [vmem:[%s4883 + $0x208] sm:$0xff] %v4950
                  %v4952 = vld [vmem:[%s4882 + $0x110] sm:$0xff]
                  %4953 = vst [vmem:[%s4883 + $0x210] sm:$0xff] %v4952
                  %v4954 = vld [vmem:[%s4882 + $0x118] sm:$0xff]
                  %4955 = vst [vmem:[%s4883 + $0x218] sm:$0xff] %v4954
                  %v4956 = vld [vmem:[%s4882 + $0x120] sm:$0xff]
                  %4957 = vst [vmem:[%s4883 + $0x220] sm:$0xff] %v4956
                  %v4958 = vld [vmem:[%s4882 + $0x128] sm:$0xff]
                  %4959 = vst [vmem:[%s4883 + $0x228] sm:$0xff] %v4958
                  %v4960 = vld [vmem:[%s4882 + $0x130] sm:$0xff]
                  %4961 = vst [vmem:[%s4883 + $0x230] sm:$0xff] %v4960
                  %v4962 = vld [vmem:[%s4882 + $0x138] sm:$0xff]
                  %4963 = vst [vmem:[%s4883 + $0x238] sm:$0xff] %v4962
                  %v4964 = vld [vmem:[%s4882 + $0x140] sm:$0xff]
                  %4965 = vst [vmem:[%s4883 + $0x240] sm:$0xff] %v4964
                  %v4966 = vld [vmem:[%s4882 + $0x148] sm:$0xff]
                  %4967 = vst [vmem:[%s4883 + $0x248] sm:$0xff] %v4966
                  %v4968 = vld [vmem:[%s4882 + $0x150] sm:$0xff]
                  %4969 = vst [vmem:[%s4883 + $0x250] sm:$0xff] %v4968
                  %v4970 = vld [vmem:[%s4882 + $0x158] sm:$0xff]
                  %4971 = vst [vmem:[%s4883 + $0x258] sm:$0xff] %v4970
                  %v4972 = vld [vmem:[%s4882 + $0x160] sm:$0xff]
                  %4973 = vst [vmem:[%s4883 + $0x260] sm:$0xff] %v4972
                  %v4974 = vld [vmem:[%s4882 + $0x168] sm:$0xff]
                  %4975 = vst [vmem:[%s4883 + $0x268] sm:$0xff] %v4974
                  %v4976 = vld [vmem:[%s4882 + $0x170] sm:$0xff]
                  %4977 = vst [vmem:[%s4883 + $0x270] sm:$0xff] %v4976
                  %v4978 = vld [vmem:[%s4882 + $0x178] sm:$0xff]
                  %4979 = vst [vmem:[%s4883 + $0x278] sm:$0xff] %v4978
                  %v4980 = vld [vmem:[%s4882 + $0x180] sm:$0xff]
                  %4981 = vst [vmem:[%s4883 + $0x300] sm:$0xff] %v4980
                  %v4982 = vld [vmem:[%s4882 + $0x188] sm:$0xff]
                  %4983 = vst [vmem:[%s4883 + $0x308] sm:$0xff] %v4982
                  %v4984 = vld [vmem:[%s4882 + $0x190] sm:$0xff]
                  %4985 = vst [vmem:[%s4883 + $0x310] sm:$0xff] %v4984
                  %v4986 = vld [vmem:[%s4882 + $0x198] sm:$0xff]
                  %4987 = vst [vmem:[%s4883 + $0x318] sm:$0xff] %v4986
                  %v4988 = vld [vmem:[%s4882 + $0x1a0] sm:$0xff]
                  %4989 = vst [vmem:[%s4883 + $0x320] sm:$0xff] %v4988
                  %v4990 = vld [vmem:[%s4882 + $0x1a8] sm:$0xff]
                  %4991 = vst [vmem:[%s4883 + $0x328] sm:$0xff] %v4990
                  %v4992 = vld [vmem:[%s4882 + $0x1b0] sm:$0xff]
                  %4993 = vst [vmem:[%s4883 + $0x330] sm:$0xff] %v4992
                  %v4994 = vld [vmem:[%s4882 + $0x1b8] sm:$0xff]
                  %4995 = vst [vmem:[%s4883 + $0x338] sm:$0xff] %v4994
                  %v4996 = vld [vmem:[%s4882 + $0x1c0] sm:$0xff]
                  %4997 = vst [vmem:[%s4883 + $0x340] sm:$0xff] %v4996
                  %v4998 = vld [vmem:[%s4882 + $0x1c8] sm:$0xff]
                  %4999 = vst [vmem:[%s4883 + $0x348] sm:$0xff] %v4998
                  %v5000 = vld [vmem:[%s4882 + $0x1d0] sm:$0xff]
                  %5001 = vst [vmem:[%s4883 + $0x350] sm:$0xff] %v5000
                  %v5002 = vld [vmem:[%s4882 + $0x1d8] sm:$0xff]
                  %5003 = vst [vmem:[%s4883 + $0x358] sm:$0xff] %v5002
                  %v5004 = vld [vmem:[%s4882 + $0x1e0] sm:$0xff]
                  %5005 = vst [vmem:[%s4883 + $0x360] sm:$0xff] %v5004
                  %v5006 = vld [vmem:[%s4882 + $0x1e8] sm:$0xff]
                  %5007 = vst [vmem:[%s4883 + $0x368] sm:$0xff] %v5006
                  %v5008 = vld [vmem:[%s4882 + $0x1f0] sm:$0xff]
                  %5009 = vst [vmem:[%s4883 + $0x370] sm:$0xff] %v5008
                  %v5010 = vld [vmem:[%s4882 + $0x1f8] sm:$0xff]
                  %5011 = vst [vmem:[%s4883 + $0x378] sm:$0xff] %v5010
                $region76: #{tpu_custom_call.1} parent=70 // loop_footer
                  %s4881 = sadd.s32 1, %s4877
                $region77: #{tpu_custom_call.1} parent=70 // loop_footer_branch
                  %4876 = sbr.rel target = $region73
                $region78: #{tpu_custom_call.1} parent=70 // loop_exit
                  _
              $region71: #{tpu_custom_call.1} parent=55 // pred_fallthru
                _
              // Predicated region
              $region79: #{tpu_custom_call.1} parent=55 // pred_check
                _
              $region80: #{tpu_custom_call.1} parent=55 // pred_check_branch
                %5013 = sbr.rel target = $region82
              $region81: #{tpu_custom_call.1} parent=55 // pred_region
                _
              $region82: #{tpu_custom_call.1} parent=55 // pred_fallthru
                _
            $region56: #{tpu_custom_call.1} parent=51 // pred_fallthru
              _
            // Predicated region
            $region57: #{tpu_custom_call.1} parent=51 // pred_check
              _
            $region58: #{tpu_custom_call.1} parent=51 // pred_check_branch
              %4735 = sbr.rel target = $region60
            $region59: #{tpu_custom_call.1} parent=51 // pred_region
              %s4737 = ssub.s32 256, 1
              loop: start=0, step=1, limit=1
              $region61: #{tpu_custom_call.1} parent=59 // loop_pre_header
                _
              $region62: #{tpu_custom_call.1} parent=59 // loop_header
                %s4739 = sphi 0, %s4743
                %p4740 = scmp.ge.s32.totalorder %s4739, 1
                %s4744 = sphi %s4723, %s4723
                %s4745 = sphi %s4729, %s4729
              $region63: #{tpu_custom_call.1} parent=59 // loop_header_branch
                %4742 = sbr.rel (%p4740) target = $region67
              $region64: #{tpu_custom_call.1} parent=59 // loop_body
                %v4746 = vld [vmem:[%s4744] sm:%s4737]
                %4747 = vst [vmem:[%s4745] sm:%s4737] %v4746
                %v4748 = vld [vmem:[%s4744 + $0x8] sm:%s4737]
                %4749 = vst [vmem:[%s4745 + $0x8] sm:%s4737] %v4748
                %v4750 = vld [vmem:[%s4744 + $0x10] sm:%s4737]
                %4751 = vst [vmem:[%s4745 + $0x10] sm:%s4737] %v4750
                %v4752 = vld [vmem:[%s4744 + $0x18] sm:%s4737]
                %4753 = vst [vmem:[%s4745 + $0x18] sm:%s4737] %v4752
                %v4754 = vld [vmem:[%s4744 + $0x20] sm:%s4737]
                %4755 = vst [vmem:[%s4745 + $0x20] sm:%s4737] %v4754
                %v4756 = vld [vmem:[%s4744 + $0x28] sm:%s4737]
                %4757 = vst [vmem:[%s4745 + $0x28] sm:%s4737] %v4756
                %v4758 = vld [vmem:[%s4744 + $0x30] sm:%s4737]
                %4759 = vst [vmem:[%s4745 + $0x30] sm:%s4737] %v4758
                %v4760 = vld [vmem:[%s4744 + $0x38] sm:%s4737]
                %4761 = vst [vmem:[%s4745 + $0x38] sm:%s4737] %v4760
                %v4762 = vld [vmem:[%s4744 + $0x40] sm:%s4737]
                %4763 = vst [vmem:[%s4745 + $0x40] sm:%s4737] %v4762
                %v4764 = vld [vmem:[%s4744 + $0x48] sm:%s4737]
                %4765 = vst [vmem:[%s4745 + $0x48] sm:%s4737] %v4764
                %v4766 = vld [vmem:[%s4744 + $0x50] sm:%s4737]
                %4767 = vst [vmem:[%s4745 + $0x50] sm:%s4737] %v4766
                %v4768 = vld [vmem:[%s4744 + $0x58] sm:%s4737]
                %4769 = vst [vmem:[%s4745 + $0x58] sm:%s4737] %v4768
                %v4770 = vld [vmem:[%s4744 + $0x60] sm:%s4737]
                %4771 = vst [vmem:[%s4745 + $0x60] sm:%s4737] %v4770
                %v4772 = vld [vmem:[%s4744 + $0x68] sm:%s4737]
                %4773 = vst [vmem:[%s4745 + $0x68] sm:%s4737] %v4772
                %v4774 = vld [vmem:[%s4744 + $0x70] sm:%s4737]
                %4775 = vst [vmem:[%s4745 + $0x70] sm:%s4737] %v4774
                %v4776 = vld [vmem:[%s4744 + $0x78] sm:%s4737]
                %4777 = vst [vmem:[%s4745 + $0x78] sm:%s4737] %v4776
                %v4778 = vld [vmem:[%s4744 + $0x80] sm:%s4737]
                %4779 = vst [vmem:[%s4745 + $0x100] sm:%s4737] %v4778
                %v4780 = vld [vmem:[%s4744 + $0x88] sm:%s4737]
                %4781 = vst [vmem:[%s4745 + $0x108] sm:%s4737] %v4780
                %v4782 = vld [vmem:[%s4744 + $0x90] sm:%s4737]
                %4783 = vst [vmem:[%s4745 + $0x110] sm:%s4737] %v4782
                %v4784 = vld [vmem:[%s4744 + $0x98] sm:%s4737]
                %4785 = vst [vmem:[%s4745 + $0x118] sm:%s4737] %v4784
                %v4786 = vld [vmem:[%s4744 + $0xa0] sm:%s4737]
                %4787 = vst [vmem:[%s4745 + $0x120] sm:%s4737] %v4786
                %v4788 = vld [vmem:[%s4744 + $0xa8] sm:%s4737]
                %4789 = vst [vmem:[%s4745 + $0x128] sm:%s4737] %v4788
                %v4790 = vld [vmem:[%s4744 + $0xb0] sm:%s4737]
                %4791 = vst [vmem:[%s4745 + $0x130] sm:%s4737] %v4790
                %v4792 = vld [vmem:[%s4744 + $0xb8] sm:%s4737]
                %4793 = vst [vmem:[%s4745 + $0x138] sm:%s4737] %v4792
                %v4794 = vld [vmem:[%s4744 + $0xc0] sm:%s4737]
                %4795 = vst [vmem:[%s4745 + $0x140] sm:%s4737] %v4794
                %v4796 = vld [vmem:[%s4744 + $0xc8] sm:%s4737]
                %4797 = vst [vmem:[%s4745 + $0x148] sm:%s4737] %v4796
                %v4798 = vld [vmem:[%s4744 + $0xd0] sm:%s4737]
                %4799 = vst [vmem:[%s4745 + $0x150] sm:%s4737] %v4798
                %v4800 = vld [vmem:[%s4744 + $0xd8] sm:%s4737]
                %4801 = vst [vmem:[%s4745 + $0x158] sm:%s4737] %v4800
                %v4802 = vld [vmem:[%s4744 + $0xe0] sm:%s4737]
                %4803 = vst [vmem:[%s4745 + $0x160] sm:%s4737] %v4802
                %v4804 = vld [vmem:[%s4744 + $0xe8] sm:%s4737]
                %4805 = vst [vmem:[%s4745 + $0x168] sm:%s4737] %v4804
                %v4806 = vld [vmem:[%s4744 + $0xf0] sm:%s4737]
                %4807 = vst [vmem:[%s4745 + $0x170] sm:%s4737] %v4806
                %v4808 = vld [vmem:[%s4744 + $0xf8] sm:%s4737]
                %4809 = vst [vmem:[%s4745 + $0x178] sm:%s4737] %v4808
                %v4810 = vld [vmem:[%s4744 + $0x100] sm:%s4737]
                %4811 = vst [vmem:[%s4745 + $0x200] sm:%s4737] %v4810
                %v4812 = vld [vmem:[%s4744 + $0x108] sm:%s4737]
                %4813 = vst [vmem:[%s4745 + $0x208] sm:%s4737] %v4812
                %v4814 = vld [vmem:[%s4744 + $0x110] sm:%s4737]
                %4815 = vst [vmem:[%s4745 + $0x210] sm:%s4737] %v4814
                %v4816 = vld [vmem:[%s4744 + $0x118] sm:%s4737]
                %4817 = vst [vmem:[%s4745 + $0x218] sm:%s4737] %v4816
                %v4818 = vld [vmem:[%s4744 + $0x120] sm:%s4737]
                %4819 = vst [vmem:[%s4745 + $0x220] sm:%s4737] %v4818
                %v4820 = vld [vmem:[%s4744 + $0x128] sm:%s4737]
                %4821 = vst [vmem:[%s4745 + $0x228] sm:%s4737] %v4820
                %v4822 = vld [vmem:[%s4744 + $0x130] sm:%s4737]
                %4823 = vst [vmem:[%s4745 + $0x230] sm:%s4737] %v4822
                %v4824 = vld [vmem:[%s4744 + $0x138] sm:%s4737]
                %4825 = vst [vmem:[%s4745 + $0x238] sm:%s4737] %v4824
                %v4826 = vld [vmem:[%s4744 + $0x140] sm:%s4737]
                %4827 = vst [vmem:[%s4745 + $0x240] sm:%s4737] %v4826
                %v4828 = vld [vmem:[%s4744 + $0x148] sm:%s4737]
                %4829 = vst [vmem:[%s4745 + $0x248] sm:%s4737] %v4828
                %v4830 = vld [vmem:[%s4744 + $0x150] sm:%s4737]
                %4831 = vst [vmem:[%s4745 + $0x250] sm:%s4737] %v4830
                %v4832 = vld [vmem:[%s4744 + $0x158] sm:%s4737]
                %4833 = vst [vmem:[%s4745 + $0x258] sm:%s4737] %v4832
                %v4834 = vld [vmem:[%s4744 + $0x160] sm:%s4737]
                %4835 = vst [vmem:[%s4745 + $0x260] sm:%s4737] %v4834
                %v4836 = vld [vmem:[%s4744 + $0x168] sm:%s4737]
                %4837 = vst [vmem:[%s4745 + $0x268] sm:%s4737] %v4836
                %v4838 = vld [vmem:[%s4744 + $0x170] sm:%s4737]
                %4839 = vst [vmem:[%s4745 + $0x270] sm:%s4737] %v4838
                %v4840 = vld [vmem:[%s4744 + $0x178] sm:%s4737]
                %4841 = vst [vmem:[%s4745 + $0x278] sm:%s4737] %v4840
                %v4842 = vld [vmem:[%s4744 + $0x180] sm:%s4737]
                %4843 = vst [vmem:[%s4745 + $0x300] sm:%s4737] %v4842
                %v4844 = vld [vmem:[%s4744 + $0x188] sm:%s4737]
                %4845 = vst [vmem:[%s4745 + $0x308] sm:%s4737] %v4844
                %v4846 = vld [vmem:[%s4744 + $0x190] sm:%s4737]
                %4847 = vst [vmem:[%s4745 + $0x310] sm:%s4737] %v4846
                %v4848 = vld [vmem:[%s4744 + $0x198] sm:%s4737]
                %4849 = vst [vmem:[%s4745 + $0x318] sm:%s4737] %v4848
                %v4850 = vld [vmem:[%s4744 + $0x1a0] sm:%s4737]
                %4851 = vst [vmem:[%s4745 + $0x320] sm:%s4737] %v4850
                %v4852 = vld [vmem:[%s4744 + $0x1a8] sm:%s4737]
                %4853 = vst [vmem:[%s4745 + $0x328] sm:%s4737] %v4852
                %v4854 = vld [vmem:[%s4744 + $0x1b0] sm:%s4737]
                %4855 = vst [vmem:[%s4745 + $0x330] sm:%s4737] %v4854
                %v4856 = vld [vmem:[%s4744 + $0x1b8] sm:%s4737]
                %4857 = vst [vmem:[%s4745 + $0x338] sm:%s4737] %v4856
                %v4858 = vld [vmem:[%s4744 + $0x1c0] sm:%s4737]
                %4859 = vst [vmem:[%s4745 + $0x340] sm:%s4737] %v4858
                %v4860 = vld [vmem:[%s4744 + $0x1c8] sm:%s4737]
                %4861 = vst [vmem:[%s4745 + $0x348] sm:%s4737] %v4860
                %v4862 = vld [vmem:[%s4744 + $0x1d0] sm:%s4737]
                %4863 = vst [vmem:[%s4745 + $0x350] sm:%s4737] %v4862
                %v4864 = vld [vmem:[%s4744 + $0x1d8] sm:%s4737]
                %4865 = vst [vmem:[%s4745 + $0x358] sm:%s4737] %v4864
                %v4866 = vld [vmem:[%s4744 + $0x1e0] sm:%s4737]
                %4867 = vst [vmem:[%s4745 + $0x360] sm:%s4737] %v4866
                %v4868 = vld [vmem:[%s4744 + $0x1e8] sm:%s4737]
                %4869 = vst [vmem:[%s4745 + $0x368] sm:%s4737] %v4868
                %v4870 = vld [vmem:[%s4744 + $0x1f0] sm:%s4737]
                %4871 = vst [vmem:[%s4745 + $0x370] sm:%s4737] %v4870
                %v4872 = vld [vmem:[%s4744 + $0x1f8] sm:%s4737]
                %4873 = vst [vmem:[%s4745 + $0x378] sm:%s4737] %v4872
              $region65: #{tpu_custom_call.1} parent=59 // loop_footer
                %s4743 = sadd.s32 1, %s4739
              $region66: #{tpu_custom_call.1} parent=59 // loop_footer_branch
                %4738 = sbr.rel target = $region62
              $region67: #{tpu_custom_call.1} parent=59 // loop_exit
                _
            $region60: #{tpu_custom_call.1} parent=51 // pred_fallthru
              _
          $region52: #{tpu_custom_call.1} parent=47 // pred_fallthru
            _
          %5014 = vnop
        $region48: #{tpu_custom_call.1} parent=43 // pred_fallthru
          _
      $region44: #{tpu_custom_call.1} parent=5 // pred_fallthru
        _
      %p5015 = scmp.le.s32.totalorder 2, %s12
      // Predicated region
      $region83: #{tpu_custom_call.1} parent=5 // pred_check
        %p5016 = pneg %p5015
      $region84: #{tpu_custom_call.1} parent=5 // pred_check_branch
        %5018 = sbr.rel (%p5016) target = $region86
      $region85: #{tpu_custom_call.1} parent=5 // pred_region
        %s5019 = ssub.s32 %s12, 2
        // Predicated region
        $region87: #{tpu_custom_call.1} parent=85 // pred_check
          %p5020 = pneg %p177
        $region88: #{tpu_custom_call.1} parent=85 // pred_check_branch
          %5022 = sbr.rel (%p5020) target = $region90
        $region89: #{tpu_custom_call.1} parent=85 // pred_region
          %s5023 = sand.u32 %s162, 1
          %s5024 = sand.u32 %s162, 1
          %s5025 = smul.addr %s5024, 512
          %s5026 = scalar_lea.vmem [#allocation2], %s5025
        $region90: #{tpu_custom_call.1} parent=85 // pred_fallthru
          _
      $region86: #{tpu_custom_call.1} parent=5 // pred_fallthru
        _
    $region6: #{tpu_custom_call.1} parent=1 // loop_footer
      %s16 = sadd.s32 1, %s12
    $region7: #{tpu_custom_call.1} parent=1 // loop_footer_branch
      %11 = sbr.rel target = $region3
    $region8: #{tpu_custom_call.1} parent=1 // loop_exit
      _

</llo_original>
